<compile_context>
chip_gen: v6e
topology: v6e:2x2x1
jax: 0.10.0
libtpu: 0.0.40
codegen_flags: <defaults>
</compile_context>

<pallas_src>
import math
import jax
import jax.numpy as jnp
from jax.experimental import pallas as pl
from jax.experimental.pallas import tpu as pltpu

# TODO(synk): the original script derives input_feature from a .mat file; use a
# deterministic synthetic value consistent with the module's forward instead.
INPUT_FEATURE = 32
LAYER_DIMS = [INPUT_FEATURE, 64, 256, 1024, 256, 64, 3]
OUT_PAD = 128  # lane-dense padded width for the 3-wide output


def mlp_kernel(x_ref,
               w1, b1, w2, b2, w3, b3, w4, b4, w5, b5, w6, b6,
               o_ref):
    """Fused 6-layer MLP forward for one (tile_b, F) batch tile.

    Weights are bf16 (native MXU path); activations stay f32 for the VPU/EUP
    elementwise work and are cast to bf16 only as MXU operands; accumulation
    is f32 via preferred_element_type.
    """
    def dense(h, w_ref, b_ref):
        return jnp.dot(h.astype(jnp.bfloat16), w_ref[...],
                       preferred_element_type=jnp.float32) + b_ref[...]

    h = x_ref[...]
    h = jnp.maximum(dense(h, w1, b1), 0.0)   # Linear(F, 64)      + ReLU
    h = jnp.maximum(dense(h, w2, b2), 0.0)   # Linear(64, 256)    + ReLU
    h = jnp.maximum(dense(h, w3, b3), 0.0)   # Linear(256, 1024)  + ReLU
    h = jnp.maximum(dense(h, w4, b4), 0.0)   # Linear(1024, 256)  + ReLU
    h = jnp.maximum(dense(h, w5, b5), 0.0)   # Linear(256, 64)    + ReLU
    z = dense(h, w6, b6)                     # Linear(64, 3) lane-padded to 128
    # Padded lanes produce sigmoid(0)=0.5 and are sliced off in the wrapper.
    o_ref[...] = jax.nn.sigmoid(z).astype(o_ref.dtype)


def _pick_tile_b(B):
    """Largest MXU-friendly tile dividing B, preferring >=2 grid steps."""
    tile_b = B
    for cand in (256, 128, 64, 32, 16, 8):
        if B % cand == 0:
            tile_b = cand
            break
    # Prefer >=2 grid steps (v7x megacore sharding, pipeline amortization).
    if B // tile_b == 1 and tile_b >= 16 and tile_b % 2 == 0:
        tile_b //= 2
    return tile_b


def mnn_forward(x, params, *, tile_b=None):
    """Run the fused MLP kernel. x: (B, INPUT_FEATURE) float32 -> (B, 3) float32."""
    B, F = x.shape
    assert F == LAYER_DIMS[0]
    if tile_b is None:
        tile_b = _pick_tile_b(B)
    assert B % tile_b == 0

    # Prepare kernel-side params: bf16 weights, f32 biases; final layer padded
    # to OUT_PAD lanes so the output store is lane-dense.
    kernel_params = []
    n_layers = len(params)
    for idx, (w, b) in enumerate(params):
        if idx == n_layers - 1:
            fin, fout = w.shape
            w = jnp.pad(w, ((0, 0), (0, OUT_PAD - fout)))
            b = jnp.pad(b, ((0, 0), (0, OUT_PAD - fout)))
        kernel_params.append((w.astype(jnp.bfloat16), b.astype(jnp.float32)))

    in_specs = [pl.BlockSpec((tile_b, F), lambda i: (i, 0))]
    flat_args = []
    for (w, b) in kernel_params:
        fin, fout = w.shape
        # Full-array blocks with a constant index_map: DMA'd once, resident in
        # VMEM across all grid steps (~1.1 MiB total in bf16).
        in_specs.append(pl.BlockSpec((fin, fout), lambda i: (0, 0)))
        in_specs.append(pl.BlockSpec((1, fout), lambda i: (0, 0)))
        flat_args.extend([w, b])

    out_spec = pl.BlockSpec((tile_b, OUT_PAD), lambda i: (i, 0))

    flops = 2 * B * sum(w.shape[0] * w.shape[1] for w, _ in kernel_params)
    transcendentals = B * OUT_PAD  # sigmoid (EUP)
    bytes_accessed = (
        x.size * x.dtype.itemsize
        + sum(w.size * 2 + b.size * 4 for w, b in kernel_params)
        + B * OUT_PAD * 4
    )

    out_padded = pl.pallas_call(
        mlp_kernel,
        out_shape=jax.ShapeDtypeStruct((B, OUT_PAD), jnp.float32),
        grid=(B // tile_b,),
        in_specs=in_specs,
        out_specs=out_spec,
        compiler_params=pltpu.CompilerParams(
            dimension_semantics=("parallel",),
        ),
        cost_estimate=pl.CostEstimate(
            flops=flops,
            transcendentals=transcendentals,
            bytes_accessed=bytes_accessed,
        ),
    )(x, *flat_args)

    return out_padded[:, :LAYER_DIMS[-1]]


def init_params(key):
    """Deterministic init mimicking PyTorch nn.Linear default (U(-k, k), k=1/sqrt(fan_in))."""
    params = []
    for fin, fout in zip(LAYER_DIMS[:-1], LAYER_DIMS[1:]):
        key, kw, kb = jax.random.split(key, 3)
        bound = 1.0 / math.sqrt(fin)
        w = jax.random.uniform(kw, (fin, fout), jnp.float32, -bound, bound)
        b = jax.random.uniform(kb, (1, fout), jnp.float32, -bound, bound)
        params.append((w, b))
    return params


def reference_forward(x, params):
    """Pure-JAX reference mirroring the kernel's bf16-operand / f32-accumulate math."""
    h = x
    for i, (w, b) in enumerate(params):
        h = jnp.dot(h.astype(jnp.bfloat16), w.astype(jnp.bfloat16),
                    preferred_element_type=jnp.float32) + b
        if i < len(params) - 1:
            h = jnp.maximum(h, 0.0)
    return jax.nn.sigmoid(h)


if __name__ == "__main__":
    key = jax.random.PRNGKey(0)
    key, kx = jax.random.split(key)

    batch = 512  # multiple of 256 -> tile_b=256, 2 grid steps (v7x: one per TC)
    x = jax.random.normal(kx, (batch, INPUT_FEATURE), jnp.float32)
    params = init_params(key)

    out = mnn_forward(x, params)
    out = jax.block_until_ready(out)

    ref = reference_forward(x, params)
    assert out.shape == (batch, 3)
    assert jnp.allclose(out, ref, atol=2e-3, rtol=2e-3)

    print("KERNEL_OK")
</pallas_src>

<mosaic_0001>
module attributes {stable_mosaic.version = 11 : i64} {
  func.func @mlp_kernel(%arg0: i32, %arg1: memref<256x32xf32, #tpu.memory_space<vmem>>, %arg2: memref<32x64xbf16, #tpu.memory_space<vmem>>, %arg3: memref<1x64xf32, #tpu.memory_space<vmem>>, %arg4: memref<64x256xbf16, #tpu.memory_space<vmem>>, %arg5: memref<1x256xf32, #tpu.memory_space<vmem>>, %arg6: memref<256x1024xbf16, #tpu.memory_space<vmem>>, %arg7: memref<1x1024xf32, #tpu.memory_space<vmem>>, %arg8: memref<1024x256xbf16, #tpu.memory_space<vmem>>, %arg9: memref<1x256xf32, #tpu.memory_space<vmem>>, %arg10: memref<256x64xbf16, #tpu.memory_space<vmem>>, %arg11: memref<1x64xf32, #tpu.memory_space<vmem>>, %arg12: memref<64x128xbf16, #tpu.memory_space<vmem>>, %arg13: memref<1x128xf32, #tpu.memory_space<vmem>>, %arg14: memref<256x128xf32, #tpu.memory_space<vmem>>) attributes {dimension_semantics = [#tpu.dimension_semantics<parallel>], iteration_bounds = array<i64: 2>, scalar_prefetch = 0 : i64, scratch_operands = 0 : i64, tpu.core_type = #tpu.core_type<tc>, window_params = [{transform_indices = @transform_0, window_bounds = array<i64: 256, 32>}, {pipeline_mode = #tpu.pipeline_mode<synchronous>, transform_indices = @transform_1, window_bounds = array<i64: 32, 64>}, {pipeline_mode = #tpu.pipeline_mode<synchronous>, transform_indices = @transform_2, window_bounds = array<i64: 1, 64>}, {pipeline_mode = #tpu.pipeline_mode<synchronous>, transform_indices = @transform_3, window_bounds = array<i64: 64, 256>}, {pipeline_mode = #tpu.pipeline_mode<synchronous>, transform_indices = @transform_4, window_bounds = array<i64: 1, 256>}, {pipeline_mode = #tpu.pipeline_mode<synchronous>, transform_indices = @transform_5, window_bounds = array<i64: 256, 1024>}, {pipeline_mode = #tpu.pipeline_mode<synchronous>, transform_indices = @transform_6, window_bounds = array<i64: 1, 1024>}, {pipeline_mode = #tpu.pipeline_mode<synchronous>, transform_indices = @transform_7, window_bounds = array<i64: 1024, 256>}, {pipeline_mode = #tpu.pipeline_mode<synchronous>, transform_indices = @transform_8, window_bounds = array<i64: 1, 256>}, {pipeline_mode = #tpu.pipeline_mode<synchronous>, transform_indices = @transform_9, window_bounds = array<i64: 256, 64>}, {pipeline_mode = #tpu.pipeline_mode<synchronous>, transform_indices = @transform_10, window_bounds = array<i64: 1, 64>}, {pipeline_mode = #tpu.pipeline_mode<synchronous>, transform_indices = @transform_11, window_bounds = array<i64: 64, 128>}, {pipeline_mode = #tpu.pipeline_mode<synchronous>, transform_indices = @transform_12, window_bounds = array<i64: 1, 128>}, {transform_indices = @transform_13, window_bounds = array<i64: 256, 128>}]} {
    %c0 = arith.constant 0 : index
    %c0_0 = arith.constant 0 : index
    %0 = vector.load %arg1[%c0, %c0_0] : memref<256x32xf32, #tpu.memory_space<vmem>>, vector<256x32xf32>
    %1 = arith.truncf %0 : vector<256x32xf32> to vector<256x32xbf16>
    %c0_1 = arith.constant 0 : index
    %c0_2 = arith.constant 0 : index
    %2 = vector.load %arg2[%c0_1, %c0_2] : memref<32x64xbf16, #tpu.memory_space<vmem>>, vector<32x64xbf16>
    %cst = arith.constant dense<0.000000e+00> : vector<256x64xf32>
    %3 = tpu.matmul %1, %2, %cst {dimension_numbers = #tpu.dot_dimension_numbers<[1], [0], [0], [1], [0, 0, 1, 1], [], []>} : vector<256x32xbf16>, vector<32x64xbf16>, vector<256x64xf32> -> vector<256x64xf32>
    %c0_3 = arith.constant 0 : index
    %c0_4 = arith.constant 0 : index
    %4 = vector.load %arg3[%c0_3, %c0_4] : memref<1x64xf32, #tpu.memory_space<vmem>>, vector<1x64xf32>
    %5 = vector.broadcast %4 : vector<1x64xf32> to vector<256x64xf32>
    %6 = arith.addf %3, %5 : vector<256x64xf32>
    %cst_5 = arith.constant 0.000000e+00 : f32
    %7 = vector.broadcast %cst_5 : f32 to vector<256x64xf32>
    %8 = arith.maximumf %6, %7 : vector<256x64xf32>
    %9 = arith.truncf %8 : vector<256x64xf32> to vector<256x64xbf16>
    %c0_6 = arith.constant 0 : index
    %c0_7 = arith.constant 0 : index
    %10 = vector.load %arg4[%c0_6, %c0_7] : memref<64x256xbf16, #tpu.memory_space<vmem>>, vector<64x256xbf16>
    %cst_8 = arith.constant dense<0.000000e+00> : vector<256x256xf32>
    %11 = tpu.matmul %9, %10, %cst_8 {dimension_numbers = #tpu.dot_dimension_numbers<[1], [0], [0], [1], [0, 0, 1, 1], [], []>} : vector<256x64xbf16>, vector<64x256xbf16>, vector<256x256xf32> -> vector<256x256xf32>
    %c0_9 = arith.constant 0 : index
    %c0_10 = arith.constant 0 : index
    %12 = vector.load %arg5[%c0_9, %c0_10] : memref<1x256xf32, #tpu.memory_space<vmem>>, vector<1x256xf32>
    %13 = vector.broadcast %12 : vector<1x256xf32> to vector<256x256xf32>
    %14 = arith.addf %11, %13 : vector<256x256xf32>
    %cst_11 = arith.constant 0.000000e+00 : f32
    %15 = vector.broadcast %cst_11 : f32 to vector<256x256xf32>
    %16 = arith.maximumf %14, %15 : vector<256x256xf32>
    %17 = arith.truncf %16 : vector<256x256xf32> to vector<256x256xbf16>
    %c0_12 = arith.constant 0 : index
    %c0_13 = arith.constant 0 : index
    %18 = vector.load %arg6[%c0_12, %c0_13] : memref<256x1024xbf16, #tpu.memory_space<vmem>>, vector<256x1024xbf16>
    %cst_14 = arith.constant dense<0.000000e+00> : vector<256x1024xf32>
    %19 = tpu.matmul %17, %18, %cst_14 {dimension_numbers = #tpu.dot_dimension_numbers<[1], [0], [0], [1], [0, 0, 1, 1], [], []>} : vector<256x256xbf16>, vector<256x1024xbf16>, vector<256x1024xf32> -> vector<256x1024xf32>
    %c0_15 = arith.constant 0 : index
    %c0_16 = arith.constant 0 : index
    %20 = vector.load %arg7[%c0_15, %c0_16] : memref<1x1024xf32, #tpu.memory_space<vmem>>, vector<1x1024xf32>
    %21 = vector.broadcast %20 : vector<1x1024xf32> to vector<256x1024xf32>
    %22 = arith.addf %19, %21 : vector<256x1024xf32>
    %cst_17 = arith.constant 0.000000e+00 : f32
    %23 = vector.broadcast %cst_17 : f32 to vector<256x1024xf32>
    %24 = arith.maximumf %22, %23 : vector<256x1024xf32>
    %25 = arith.truncf %24 : vector<256x1024xf32> to vector<256x1024xbf16>
    %c0_18 = arith.constant 0 : index
    %c0_19 = arith.constant 0 : index
    %26 = vector.load %arg8[%c0_18, %c0_19] : memref<1024x256xbf16, #tpu.memory_space<vmem>>, vector<1024x256xbf16>
    %cst_20 = arith.constant dense<0.000000e+00> : vector<256x256xf32>
    %27 = tpu.matmul %25, %26, %cst_20 {dimension_numbers = #tpu.dot_dimension_numbers<[1], [0], [0], [1], [0, 0, 1, 1], [], []>} : vector<256x1024xbf16>, vector<1024x256xbf16>, vector<256x256xf32> -> vector<256x256xf32>
    %c0_21 = arith.constant 0 : index
    %c0_22 = arith.constant 0 : index
    %28 = vector.load %arg9[%c0_21, %c0_22] : memref<1x256xf32, #tpu.memory_space<vmem>>, vector<1x256xf32>
    %29 = vector.broadcast %28 : vector<1x256xf32> to vector<256x256xf32>
    %30 = arith.addf %27, %29 : vector<256x256xf32>
    %cst_23 = arith.constant 0.000000e+00 : f32
    %31 = vector.broadcast %cst_23 : f32 to vector<256x256xf32>
    %32 = arith.maximumf %30, %31 : vector<256x256xf32>
    %33 = arith.truncf %32 : vector<256x256xf32> to vector<256x256xbf16>
    %c0_24 = arith.constant 0 : index
    %c0_25 = arith.constant 0 : index
    %34 = vector.load %arg10[%c0_24, %c0_25] : memref<256x64xbf16, #tpu.memory_space<vmem>>, vector<256x64xbf16>
    %cst_26 = arith.constant dense<0.000000e+00> : vector<256x64xf32>
    %35 = tpu.matmul %33, %34, %cst_26 {dimension_numbers = #tpu.dot_dimension_numbers<[1], [0], [0], [1], [0, 0, 1, 1], [], []>} : vector<256x256xbf16>, vector<256x64xbf16>, vector<256x64xf32> -> vector<256x64xf32>
    %c0_27 = arith.constant 0 : index
    %c0_28 = arith.constant 0 : index
    %36 = vector.load %arg11[%c0_27, %c0_28] : memref<1x64xf32, #tpu.memory_space<vmem>>, vector<1x64xf32>
    %37 = vector.broadcast %36 : vector<1x64xf32> to vector<256x64xf32>
    %38 = arith.addf %35, %37 : vector<256x64xf32>
    %cst_29 = arith.constant 0.000000e+00 : f32
    %39 = vector.broadcast %cst_29 : f32 to vector<256x64xf32>
    %40 = arith.maximumf %38, %39 : vector<256x64xf32>
    %41 = arith.truncf %40 : vector<256x64xf32> to vector<256x64xbf16>
    %c0_30 = arith.constant 0 : index
    %c0_31 = arith.constant 0 : index
    %42 = vector.load %arg12[%c0_30, %c0_31] : memref<64x128xbf16, #tpu.memory_space<vmem>>, vector<64x128xbf16>
    %cst_32 = arith.constant dense<0.000000e+00> : vector<256x128xf32>
    %43 = tpu.matmul %41, %42, %cst_32 {dimension_numbers = #tpu.dot_dimension_numbers<[1], [0], [0], [1], [0, 0, 1, 1], [], []>} : vector<256x64xbf16>, vector<64x128xbf16>, vector<256x128xf32> -> vector<256x128xf32>
    %c0_33 = arith.constant 0 : index
    %c0_34 = arith.constant 0 : index
    %44 = vector.load %arg13[%c0_33, %c0_34] : memref<1x128xf32, #tpu.memory_space<vmem>>, vector<1x128xf32>
    %45 = vector.broadcast %44 : vector<1x128xf32> to vector<256x128xf32>
    %46 = arith.addf %43, %45 : vector<256x128xf32>
    %47 = arith.negf %46 : vector<256x128xf32>
    %48 = math.exp %47 : vector<256x128xf32>
    %cst_35 = arith.constant 1.000000e+00 : f32
    %49 = vector.broadcast %cst_35 : f32 to vector<256x128xf32>
    %50 = arith.addf %49, %48 : vector<256x128xf32>
    %51 = arith.divf %49, %50 : vector<256x128xf32>
    %c0_36 = arith.constant 0 : index
    %c0_37 = arith.constant 0 : index
    %52 = vector.load %arg14[%c0_36, %c0_37] : memref<256x128xf32, #tpu.memory_space<vmem>>, vector<256x128xf32>
    tpu.vector_store %arg14[%c0_36, %c0_37], %51 {strides = array<i32>} : memref<256x128xf32, #tpu.memory_space<vmem>>, vector<256x128xf32>,
    return
  }
  func.func @transform_0(%arg0: i32) -> (i32, i32) {
    %c0_i32 = arith.constant 0 : i32
    %c0_i32_0 = arith.constant 0 : i32
    return %arg0, %c0_i32 : i32, i32
  }
  func.func @transform_1(%arg0: i32) -> (i32, i32) {
    %c0_i32 = arith.constant 0 : i32
    %c0_i32_0 = arith.constant 0 : i32
    %c0_i32_1 = arith.constant 0 : i32
    return %c0_i32, %c0_i32_0 : i32, i32
  }
  func.func @transform_2(%arg0: i32) -> (i32, i32) {
    %c0_i32 = arith.constant 0 : i32
    %c0_i32_0 = arith.constant 0 : i32
    %c0_i32_1 = arith.constant 0 : i32
    return %c0_i32, %c0_i32_0 : i32, i32
  }
  func.func @transform_3(%arg0: i32) -> (i32, i32) {
    %c0_i32 = arith.constant 0 : i32
    %c0_i32_0 = arith.constant 0 : i32
    %c0_i32_1 = arith.constant 0 : i32
    return %c0_i32, %c0_i32_0 : i32, i32
  }
  func.func @transform_4(%arg0: i32) -> (i32, i32) {
    %c0_i32 = arith.constant 0 : i32
    %c0_i32_0 = arith.constant 0 : i32
    %c0_i32_1 = arith.constant 0 : i32
    return %c0_i32, %c0_i32_0 : i32, i32
  }
  func.func @transform_5(%arg0: i32) -> (i32, i32) {
    %c0_i32 = arith.constant 0 : i32
    %c0_i32_0 = arith.constant 0 : i32
    %c0_i32_1 = arith.constant 0 : i32
    return %c0_i32, %c0_i32_0 : i32, i32
  }
  func.func @transform_6(%arg0: i32) -> (i32, i32) {
    %c0_i32 = arith.constant 0 : i32
    %c0_i32_0 = arith.constant 0 : i32
    %c0_i32_1 = arith.constant 0 : i32
    return %c0_i32, %c0_i32_0 : i32, i32
  }
  func.func @transform_7(%arg0: i32) -> (i32, i32) {
    %c0_i32 = arith.constant 0 : i32
    %c0_i32_0 = arith.constant 0 : i32
    %c0_i32_1 = arith.constant 0 : i32
    return %c0_i32, %c0_i32_0 : i32, i32
  }
  func.func @transform_8(%arg0: i32) -> (i32, i32) {
    %c0_i32 = arith.constant 0 : i32
    %c0_i32_0 = arith.constant 0 : i32
    %c0_i32_1 = arith.constant 0 : i32
    return %c0_i32, %c0_i32_0 : i32, i32
  }
  func.func @transform_9(%arg0: i32) -> (i32, i32) {
    %c0_i32 = arith.constant 0 : i32
    %c0_i32_0 = arith.constant 0 : i32
    %c0_i32_1 = arith.constant 0 : i32
    return %c0_i32, %c0_i32_0 : i32, i32
  }
  func.func @transform_10(%arg0: i32) -> (i32, i32) {
    %c0_i32 = arith.constant 0 : i32
    %c0_i32_0 = arith.constant 0 : i32
    %c0_i32_1 = arith.constant 0 : i32
    return %c0_i32, %c0_i32_0 : i32, i32
  }
  func.func @transform_11(%arg0: i32) -> (i32, i32) {
    %c0_i32 = arith.constant 0 : i32
    %c0_i32_0 = arith.constant 0 : i32
    %c0_i32_1 = arith.constant 0 : i32
    return %c0_i32, %c0_i32_0 : i32, i32
  }
  func.func @transform_12(%arg0: i32) -> (i32, i32) {
    %c0_i32 = arith.constant 0 : i32
    %c0_i32_0 = arith.constant 0 : i32
    %c0_i32_1 = arith.constant 0 : i32
    return %c0_i32, %c0_i32_0 : i32, i32
  }
  func.func @transform_13(%arg0: i32) -> (i32, i32) {
    %c0_i32 = arith.constant 0 : i32
    %c0_i32_0 = arith.constant 0 : i32
    return %arg0, %c0_i32 : i32, i32
  }
}

</mosaic_0001>

<llo_original>
// kernel: tpu_custom_call.1
$region0: #{tpu_custom_call.1}
  #allocation0 [shape = 'u32[]', space=smem, size = 0x4, offset = 0x4, fixed_abs, tag = 'smem constant byte address 0x4 - core index']
  #allocation1 [shape = 'u32[144,128]{1,0:T(1,128)}', space=vmem, size = 0x12000, scoped, tag = 'internal scratch']
  %s0 = inlined_call_operand.vmem [shape: f32[512,32], index: 0, kind: input, shape index: {}]
  %s1 = inlined_call_operand.vmem [shape: bf16[32,64], index: 1, kind: input, shape index: {}]
  %s2 = inlined_call_operand.vmem [shape: f32[1,64], index: 2, kind: input, shape index: {}]
  %s3 = inlined_call_operand.vmem [shape: bf16[64,256], index: 3, kind: input, shape index: {}]
  %s4 = inlined_call_operand.vmem [shape: f32[1,256], index: 4, kind: input, shape index: {}]
  %s5 = inlined_call_operand.hbm [shape: bf16[256,1024], index: 5, kind: input, shape index: {}]
  %s6 = inlined_call_operand.vmem [shape: f32[1,1024], index: 6, kind: input, shape index: {}]
  %s7 = inlined_call_operand.hbm [shape: bf16[1024,256], index: 7, kind: input, shape index: {}]
  %s8 = inlined_call_operand.vmem [shape: f32[1,256], index: 8, kind: input, shape index: {}]
  %s9 = inlined_call_operand.vmem [shape: bf16[256,64], index: 9, kind: input, shape index: {}]
  %s10 = inlined_call_operand.vmem [shape: f32[1,64], index: 10, kind: input, shape index: {}]
  %s11 = inlined_call_operand.vmem [shape: bf16[64,128], index: 11, kind: input, shape index: {}]
  %s12 = inlined_call_operand.vmem [shape: f32[1,128], index: 12, kind: input, shape index: {}]
  %s13 = inlined_call_operand.hbm [shape: f32[512,128], index: 13, kind: output, shape index: {}]
  %s14 = sld [smem:[#allocation0]]
  $region93: #{tpu_custom_call.1} parent=0
    _
  %s16 = ssub.s32 1, %s14
  %s17 = scalar_select 0, %s16, %s14
  $region1: #{tpu_custom_call.1} parent=0
    #allocation2 [shape = 'u8[524288]{0}', space=vmem, size = 0x80000, scoped, tag = 'input window, operand 5, single buffered']
    #allocation3 [shape = 's32[2]{0}', space=sflag, size = 0x8, scoped, tag = 'scoped memory for tpu_custom_call.1']
    #allocation4 [shape = 's32[2]{0}', space=sflag, size = 0x8, scoped, tag = 'scoped memory for tpu_custom_call.1']
    #allocation5 [shape = 'u8[524288]{0}', space=vmem, size = 0x80000, scoped, tag = 'input window, operand 7, single buffered']
    #allocation6 [shape = 's32[1]{0}', space=sflag, size = 0x4, scoped, tag = 'scoped memory for tpu_custom_call.1']
    #allocation7 [shape = 'u8[262144]{0}', space=vmem, size = 0x40000, scoped, tag = 'output window, operand 0']
    %18 = vsyncpa [#allocation3], 0
    %19 = vsyncpa [#allocation6], 0
    %20 = vsyncpa [#allocation4], 0
    %s21 = scalar_lea.sflag [#allocation4], 1
    %22 = vsyncpa %s21, 0
    loop: start=0, step=1, limit=4
    $region2: #{tpu_custom_call.1} parent=1 // loop_pre_header
      _
    $region3: #{tpu_custom_call.1} parent=1 // loop_header
      %s24 = sphi 0, %s28
      %p25 = scmp.ge.s32.totalorder %s24, 4
      %s34 = sphi 0, %s36
      %s37 = sphi 0, %s34
      %s38 = sphi 0, %s37
      %s54 = sphi 0, %s38
      %s58 = sphi 0, %s58
      %s60 = sphi 0, %s58
      %s61 = sphi 0, %s60
      %s75 = sphi 0, %s61
      %s79 = sphi 0, %s79
      %s81 = sphi 0, %s79
      %s82 = sphi 0, %s81
      %s96 = sphi 0, %s82
      %s100 = sphi 0, %s100
      %s102 = sphi 0, %s100
      %s103 = sphi 0, %s102
      %s117 = sphi 0, %s103
      %s121 = sphi 0, %s121
      %s123 = sphi 0, %s121
      %s124 = sphi 0, %s123
      %s138 = sphi 0, %s124
      %s142 = sphi 0, %s142
      %s144 = sphi 0, %s142
      %s145 = sphi 0, %s144
      %s159 = sphi 0, %s145
      %s163 = sphi 0, %s163
      %s165 = sphi 0, %s163
      %s166 = sphi 0, %s165
      %s180 = sphi 0, %s166
      %s184 = sphi 0, %s184
      %s186 = sphi 0, %s184
      %s187 = sphi 0, %s186
      %s201 = sphi 0, %s187
      %s205 = sphi 0, %s205
      %s207 = sphi 0, %s205
      %s208 = sphi 0, %s207
      %s222 = sphi 0, %s208
      %s226 = sphi 0, %s226
      %s228 = sphi 0, %s226
      %s229 = sphi 0, %s228
      %s243 = sphi 0, %s229
      %s247 = sphi 0, %s247
      %s249 = sphi 0, %s247
      %s250 = sphi 0, %s249
      %s264 = sphi 0, %s250
      %s268 = sphi 0, %s268
      %s270 = sphi 0, %s268
      %s271 = sphi 0, %s270
      %s285 = sphi 0, %s271
      %s289 = sphi 0, %s289
      %s291 = sphi 0, %s289
      %s292 = sphi 0, %s291
      %s306 = sphi 0, %s292
      %s312 = sphi 0, %s314
      %s315 = sphi 0, %s312
      %s316 = sphi 0, %s315
      %s332 = sphi 0, %s316
    $region4: #{tpu_custom_call.1} parent=1 // loop_header_branch
      %27 = sbr.rel (%p25) target = $region8
    $region5: #{tpu_custom_call.1} parent=1 // loop_body
      %s29 = ssub.s32 %s24, 1
      %s30 = ssub.s32 %s24, 2
      %s31 = sadd.s32 %s24, 1
      %s32 = ssub.s32 %s24, %s31
      %p33 = scmp.eq.s32.totalorder %s32, 0
      %s35 = sadd.s32 %s34, 1
      %s36 = scalar_select %p33, %s34, %s35
      %p39 = pneg %p33
      %p40 = scmp.eq.s32.totalorder %s24, 1
      %p41 = por %p39, %p40
      %p42 = scmp.ne.s32.totalorder %s34, %s37
      %p43 = scmp.eq.s32.totalorder %s24, 0
      %p44 = por %p42, %p43
      %p45 = scmp.ne.s32.totalorder %s34, %s37
      %p46 = scmp.eq.s32.totalorder %s29, 1
      %p47 = por %p45, %p46
      %p48 = scmp.ne.s32.totalorder %s37, %s38
      %p49 = scmp.eq.s32.totalorder %s29, 0
      %p50 = por %p48, %p49
      %p51 = scmp.ne.s32.totalorder %s37, %s38
      %p52 = scmp.eq.s32.totalorder %s30, 1
      %p53 = por %p51, %p52
      %p55 = scmp.ne.s32.totalorder %s38, %s54
      %p56 = scmp.eq.s32.totalorder %s30, 0
      %p57 = por %p55, %p56
      %s59 = sadd.s32 %s58, 1
      %p62 = scmp.eq.s32.totalorder %s24, 1
      %p63 = scmp.ne.s32.totalorder %s58, %s60
      %p64 = scmp.eq.s32.totalorder %s24, 0
      %p65 = por %p63, %p64
      %p66 = scmp.ne.s32.totalorder %s58, %s60
      %p67 = scmp.eq.s32.totalorder %s29, 1
      %p68 = por %p66, %p67
      %p69 = scmp.ne.s32.totalorder %s60, %s61
      %p70 = scmp.eq.s32.totalorder %s29, 0
      %p71 = por %p69, %p70
      %p72 = scmp.ne.s32.totalorder %s60, %s61
      %p73 = scmp.eq.s32.totalorder %s30, 1
      %p74 = por %p72, %p73
      %p76 = scmp.ne.s32.totalorder %s61, %s75
      %p77 = scmp.eq.s32.totalorder %s30, 0
      %p78 = por %p76, %p77
      %s80 = sadd.s32 %s79, 1
      %p83 = scmp.eq.s32.totalorder %s24, 1
      %p84 = scmp.ne.s32.totalorder %s79, %s81
      %p85 = scmp.eq.s32.totalorder %s24, 0
      %p86 = por %p84, %p85
      %p87 = scmp.ne.s32.totalorder %s79, %s81
      %p88 = scmp.eq.s32.totalorder %s29, 1
      %p89 = por %p87, %p88
      %p90 = scmp.ne.s32.totalorder %s81, %s82
      %p91 = scmp.eq.s32.totalorder %s29, 0
      %p92 = por %p90, %p91
      %p93 = scmp.ne.s32.totalorder %s81, %s82
      %p94 = scmp.eq.s32.totalorder %s30, 1
      %p95 = por %p93, %p94
      %p97 = scmp.ne.s32.totalorder %s82, %s96
      %p98 = scmp.eq.s32.totalorder %s30, 0
      %p99 = por %p97, %p98
      %s101 = sadd.s32 %s100, 1
      %p104 = scmp.eq.s32.totalorder %s24, 1
      %p105 = scmp.ne.s32.totalorder %s100, %s102
      %p106 = scmp.eq.s32.totalorder %s24, 0
      %p107 = por %p105, %p106
      %p108 = scmp.ne.s32.totalorder %s100, %s102
      %p109 = scmp.eq.s32.totalorder %s29, 1
      %p110 = por %p108, %p109
      %p111 = scmp.ne.s32.totalorder %s102, %s103
      %p112 = scmp.eq.s32.totalorder %s29, 0
      %p113 = por %p111, %p112
      %p114 = scmp.ne.s32.totalorder %s102, %s103
      %p115 = scmp.eq.s32.totalorder %s30, 1
      %p116 = por %p114, %p115
      %p118 = scmp.ne.s32.totalorder %s103, %s117
      %p119 = scmp.eq.s32.totalorder %s30, 0
      %p120 = por %p118, %p119
      %s122 = sadd.s32 %s121, 1
      %p125 = scmp.eq.s32.totalorder %s24, 1
      %p126 = scmp.ne.s32.totalorder %s121, %s123
      %p127 = scmp.eq.s32.totalorder %s24, 0
      %p128 = por %p126, %p127
      %p129 = scmp.ne.s32.totalorder %s121, %s123
      %p130 = scmp.eq.s32.totalorder %s29, 1
      %p131 = por %p129, %p130
      %p132 = scmp.ne.s32.totalorder %s123, %s124
      %p133 = scmp.eq.s32.totalorder %s29, 0
      %p134 = por %p132, %p133
      %p135 = scmp.ne.s32.totalorder %s123, %s124
      %p136 = scmp.eq.s32.totalorder %s30, 1
      %p137 = por %p135, %p136
      %p139 = scmp.ne.s32.totalorder %s124, %s138
      %p140 = scmp.eq.s32.totalorder %s30, 0
      %p141 = por %p139, %p140
      %s143 = sadd.s32 %s142, 1
      %p146 = scmp.eq.s32.totalorder %s24, 1
      %p147 = scmp.ne.s32.totalorder %s142, %s144
      %p148 = scmp.eq.s32.totalorder %s24, 0
      %p149 = por %p147, %p148
      %p150 = scmp.ne.s32.totalorder %s142, %s144
      %p151 = scmp.eq.s32.totalorder %s29, 1
      %p152 = por %p150, %p151
      %p153 = scmp.ne.s32.totalorder %s144, %s145
      %p154 = scmp.eq.s32.totalorder %s29, 0
      %p155 = por %p153, %p154
      %p156 = scmp.ne.s32.totalorder %s144, %s145
      %p157 = scmp.eq.s32.totalorder %s30, 1
      %p158 = por %p156, %p157
      %p160 = scmp.ne.s32.totalorder %s145, %s159
      %p161 = scmp.eq.s32.totalorder %s30, 0
      %p162 = por %p160, %p161
      %s164 = sadd.s32 %s163, 1
      %p167 = scmp.eq.s32.totalorder %s24, 1
      %p168 = scmp.ne.s32.totalorder %s163, %s165
      %p169 = scmp.eq.s32.totalorder %s24, 0
      %p170 = por %p168, %p169
      %p171 = scmp.ne.s32.totalorder %s163, %s165
      %p172 = scmp.eq.s32.totalorder %s29, 1
      %p173 = por %p171, %p172
      %p174 = scmp.ne.s32.totalorder %s165, %s166
      %p175 = scmp.eq.s32.totalorder %s29, 0
      %p176 = por %p174, %p175
      %p177 = scmp.ne.s32.totalorder %s165, %s166
      %p178 = scmp.eq.s32.totalorder %s30, 1
      %p179 = por %p177, %p178
      %p181 = scmp.ne.s32.totalorder %s166, %s180
      %p182 = scmp.eq.s32.totalorder %s30, 0
      %p183 = por %p181, %p182
      %s185 = sadd.s32 %s184, 1
      %p188 = scmp.eq.s32.totalorder %s24, 1
      %p189 = scmp.ne.s32.totalorder %s184, %s186
      %p190 = scmp.eq.s32.totalorder %s24, 0
      %p191 = por %p189, %p190
      %p192 = scmp.ne.s32.totalorder %s184, %s186
      %p193 = scmp.eq.s32.totalorder %s29, 1
      %p194 = por %p192, %p193
      %p195 = scmp.ne.s32.totalorder %s186, %s187
      %p196 = scmp.eq.s32.totalorder %s29, 0
      %p197 = por %p195, %p196
      %p198 = scmp.ne.s32.totalorder %s186, %s187
      %p199 = scmp.eq.s32.totalorder %s30, 1
      %p200 = por %p198, %p199
      %p202 = scmp.ne.s32.totalorder %s187, %s201
      %p203 = scmp.eq.s32.totalorder %s30, 0
      %p204 = por %p202, %p203
      %s206 = sadd.s32 %s205, 1
      %p209 = scmp.eq.s32.totalorder %s24, 1
      %p210 = scmp.ne.s32.totalorder %s205, %s207
      %p211 = scmp.eq.s32.totalorder %s24, 0
      %p212 = por %p210, %p211
      %p213 = scmp.ne.s32.totalorder %s205, %s207
      %p214 = scmp.eq.s32.totalorder %s29, 1
      %p215 = por %p213, %p214
      %p216 = scmp.ne.s32.totalorder %s207, %s208
      %p217 = scmp.eq.s32.totalorder %s29, 0
      %p218 = por %p216, %p217
      %p219 = scmp.ne.s32.totalorder %s207, %s208
      %p220 = scmp.eq.s32.totalorder %s30, 1
      %p221 = por %p219, %p220
      %p223 = scmp.ne.s32.totalorder %s208, %s222
      %p224 = scmp.eq.s32.totalorder %s30, 0
      %p225 = por %p223, %p224
      %s227 = sadd.s32 %s226, 1
      %p230 = scmp.eq.s32.totalorder %s24, 1
      %p231 = scmp.ne.s32.totalorder %s226, %s228
      %p232 = scmp.eq.s32.totalorder %s24, 0
      %p233 = por %p231, %p232
      %p234 = scmp.ne.s32.totalorder %s226, %s228
      %p235 = scmp.eq.s32.totalorder %s29, 1
      %p236 = por %p234, %p235
      %p237 = scmp.ne.s32.totalorder %s228, %s229
      %p238 = scmp.eq.s32.totalorder %s29, 0
      %p239 = por %p237, %p238
      %p240 = scmp.ne.s32.totalorder %s228, %s229
      %p241 = scmp.eq.s32.totalorder %s30, 1
      %p242 = por %p240, %p241
      %p244 = scmp.ne.s32.totalorder %s229, %s243
      %p245 = scmp.eq.s32.totalorder %s30, 0
      %p246 = por %p244, %p245
      %s248 = sadd.s32 %s247, 1
      %p251 = scmp.eq.s32.totalorder %s24, 1
      %p252 = scmp.ne.s32.totalorder %s247, %s249
      %p253 = scmp.eq.s32.totalorder %s24, 0
      %p254 = por %p252, %p253
      %p255 = scmp.ne.s32.totalorder %s247, %s249
      %p256 = scmp.eq.s32.totalorder %s29, 1
      %p257 = por %p255, %p256
      %p258 = scmp.ne.s32.totalorder %s249, %s250
      %p259 = scmp.eq.s32.totalorder %s29, 0
      %p260 = por %p258, %p259
      %p261 = scmp.ne.s32.totalorder %s249, %s250
      %p262 = scmp.eq.s32.totalorder %s30, 1
      %p263 = por %p261, %p262
      %p265 = scmp.ne.s32.totalorder %s250, %s264
      %p266 = scmp.eq.s32.totalorder %s30, 0
      %p267 = por %p265, %p266
      %s269 = sadd.s32 %s268, 1
      %p272 = scmp.eq.s32.totalorder %s24, 1
      %p273 = scmp.ne.s32.totalorder %s268, %s270
      %p274 = scmp.eq.s32.totalorder %s24, 0
      %p275 = por %p273, %p274
      %p276 = scmp.ne.s32.totalorder %s268, %s270
      %p277 = scmp.eq.s32.totalorder %s29, 1
      %p278 = por %p276, %p277
      %p279 = scmp.ne.s32.totalorder %s270, %s271
      %p280 = scmp.eq.s32.totalorder %s29, 0
      %p281 = por %p279, %p280
      %p282 = scmp.ne.s32.totalorder %s270, %s271
      %p283 = scmp.eq.s32.totalorder %s30, 1
      %p284 = por %p282, %p283
      %p286 = scmp.ne.s32.totalorder %s271, %s285
      %p287 = scmp.eq.s32.totalorder %s30, 0
      %p288 = por %p286, %p287
      %s290 = sadd.s32 %s289, 1
      %p293 = scmp.eq.s32.totalorder %s24, 1
      %p294 = scmp.ne.s32.totalorder %s289, %s291
      %p295 = scmp.eq.s32.totalorder %s24, 0
      %p296 = por %p294, %p295
      %p297 = scmp.ne.s32.totalorder %s289, %s291
      %p298 = scmp.eq.s32.totalorder %s29, 1
      %p299 = por %p297, %p298
      %p300 = scmp.ne.s32.totalorder %s291, %s292
      %p301 = scmp.eq.s32.totalorder %s29, 0
      %p302 = por %p300, %p301
      %p303 = scmp.ne.s32.totalorder %s291, %s292
      %p304 = scmp.eq.s32.totalorder %s30, 1
      %p305 = por %p303, %p304
      %p307 = scmp.ne.s32.totalorder %s292, %s306
      %p308 = scmp.eq.s32.totalorder %s30, 0
      %p309 = por %p307, %p308
      %s310 = ssub.s32 %s24, %s31
      %p311 = scmp.eq.s32.totalorder %s310, 0
      %s313 = sadd.s32 %s312, 1
      %s314 = scalar_select %p311, %s312, %s313
      %p317 = pneg %p311
      %p318 = scmp.eq.s32.totalorder %s24, 1
      %p319 = por %p317, %p318
      %p320 = scmp.ne.s32.totalorder %s312, %s315
      %p321 = scmp.eq.s32.totalorder %s24, 0
      %p322 = por %p320, %p321
      %p323 = scmp.ne.s32.totalorder %s312, %s315
      %p324 = scmp.eq.s32.totalorder %s29, 1
      %p325 = por %p323, %p324
      %p326 = scmp.ne.s32.totalorder %s315, %s316
      %p327 = scmp.eq.s32.totalorder %s29, 0
      %p328 = por %p326, %p327
      %p329 = scmp.ne.s32.totalorder %s315, %s316
      %p330 = scmp.eq.s32.totalorder %s30, 1
      %p331 = por %p329, %p330
      %p333 = scmp.ne.s32.totalorder %s316, %s332
      %p334 = scmp.eq.s32.totalorder %s30, 0
      %p335 = por %p333, %p334
      %p336 = scmp.le.s32.totalorder 1, %s24
      %p337 = scmp.lt.s32.totalorder %s24, 3
      %p338 = pnand %p336, %p337
      %p339 = pneg %p338
      // Predicated region
      $region9: #{tpu_custom_call.1} parent=5 // pred_check
        _
      $region10: #{tpu_custom_call.1} parent=5 // pred_check_branch
        %341 = sbr.rel (%p338) target = $region12
      $region11: #{tpu_custom_call.1} parent=5 // pred_region
        %s342 = ssub.s32 %s24, 1
        // Predicated region
        $region13: #{tpu_custom_call.1} parent=11 // pred_check
          %p343 = pneg %p71
        $region14: #{tpu_custom_call.1} parent=11 // pred_check_branch
          %345 = sbr.rel (%p343) target = $region16
        $region15: #{tpu_custom_call.1} parent=11 // pred_region
          _
        $region16: #{tpu_custom_call.1} parent=11 // pred_fallthru
          _
        // Predicated region
        $region17: #{tpu_custom_call.1} parent=11 // pred_check
          %p346 = pneg %p92
        $region18: #{tpu_custom_call.1} parent=11 // pred_check_branch
          %348 = sbr.rel (%p346) target = $region20
        $region19: #{tpu_custom_call.1} parent=11 // pred_region
          _
        $region20: #{tpu_custom_call.1} parent=11 // pred_fallthru
          _
        // Predicated region
        $region21: #{tpu_custom_call.1} parent=11 // pred_check
          %p349 = pneg %p113
        $region22: #{tpu_custom_call.1} parent=11 // pred_check_branch
          %351 = sbr.rel (%p349) target = $region24
        $region23: #{tpu_custom_call.1} parent=11 // pred_region
          _
        $region24: #{tpu_custom_call.1} parent=11 // pred_fallthru
          _
        // Predicated region
        $region25: #{tpu_custom_call.1} parent=11 // pred_check
          %p352 = pneg %p134
        $region26: #{tpu_custom_call.1} parent=11 // pred_check_branch
          %354 = sbr.rel (%p352) target = $region28
        $region27: #{tpu_custom_call.1} parent=11 // pred_region
          _
        $region28: #{tpu_custom_call.1} parent=11 // pred_fallthru
          _
        // Predicated region
        $region29: #{tpu_custom_call.1} parent=11 // pred_check
          %p355 = pneg %p155
        $region30: #{tpu_custom_call.1} parent=11 // pred_check_branch
          %357 = sbr.rel (%p355) target = $region32
        $region31: #{tpu_custom_call.1} parent=11 // pred_region
          %s359 = ssub.s32 16384, 16384
          %360 = vsyncadd [#allocation3], %s359
          %s361 = sshll.u32 [#allocation2], 4
          %s362 = int_to_ptr.vmem [resolvable:$true] %s361
          %367 = dma.hbm_to_vmem [thread:$0]  %s5, 16384, %s362, [#allocation3], 512, 512, 32
        $region32: #{tpu_custom_call.1} parent=11 // pred_fallthru
          _
        // Predicated region
        $region33: #{tpu_custom_call.1} parent=11 // pred_check
          %p368 = pneg %p176
        $region34: #{tpu_custom_call.1} parent=11 // pred_check_branch
          %370 = sbr.rel (%p368) target = $region36
        $region35: #{tpu_custom_call.1} parent=11 // pred_region
          _
        $region36: #{tpu_custom_call.1} parent=11 // pred_fallthru
          _
        // Predicated region
        $region37: #{tpu_custom_call.1} parent=11 // pred_check
          %p371 = pneg %p197
        $region38: #{tpu_custom_call.1} parent=11 // pred_check_branch
          %373 = sbr.rel (%p371) target = $region40
        $region39: #{tpu_custom_call.1} parent=11 // pred_region
          %s375 = ssub.s32 16384, 16384
          %376 = vsyncadd [#allocation6], %s375
          %s377 = sshll.u32 [#allocation5], 4
          %s378 = int_to_ptr.vmem [resolvable:$true] %s377
          %383 = dma.hbm_to_vmem [thread:$0]  %s7, 16384, %s378, [#allocation6], 128, 128, 8
        $region40: #{tpu_custom_call.1} parent=11 // pred_fallthru
          _
        // Predicated region
        $region41: #{tpu_custom_call.1} parent=11 // pred_check
          %p384 = pneg %p218
        $region42: #{tpu_custom_call.1} parent=11 // pred_check_branch
          %386 = sbr.rel (%p384) target = $region44
        $region43: #{tpu_custom_call.1} parent=11 // pred_region
          _
        $region44: #{tpu_custom_call.1} parent=11 // pred_fallthru
          _
        // Predicated region
        $region45: #{tpu_custom_call.1} parent=11 // pred_check
          %p387 = pneg %p239
        $region46: #{tpu_custom_call.1} parent=11 // pred_check_branch
          %389 = sbr.rel (%p387) target = $region48
        $region47: #{tpu_custom_call.1} parent=11 // pred_region
          _
        $region48: #{tpu_custom_call.1} parent=11 // pred_fallthru
          _
        // Predicated region
        $region49: #{tpu_custom_call.1} parent=11 // pred_check
          %p390 = pneg %p260
        $region50: #{tpu_custom_call.1} parent=11 // pred_check_branch
          %392 = sbr.rel (%p390) target = $region52
        $region51: #{tpu_custom_call.1} parent=11 // pred_region
          _
        $region52: #{tpu_custom_call.1} parent=11 // pred_fallthru
          _
        // Predicated region
        $region53: #{tpu_custom_call.1} parent=11 // pred_check
          %p393 = pneg %p281
        $region54: #{tpu_custom_call.1} parent=11 // pred_check_branch
          %395 = sbr.rel (%p393) target = $region56
        $region55: #{tpu_custom_call.1} parent=11 // pred_region
          _
        $region56: #{tpu_custom_call.1} parent=11 // pred_fallthru
          _
        // Predicated region
        $region57: #{tpu_custom_call.1} parent=11 // pred_check
          %p396 = pneg %p302
        $region58: #{tpu_custom_call.1} parent=11 // pred_check_branch
          %398 = sbr.rel (%p396) target = $region60
        $region59: #{tpu_custom_call.1} parent=11 // pred_region
          _
        $region60: #{tpu_custom_call.1} parent=11 // pred_fallthru
          _
      $region12: #{tpu_custom_call.1} parent=5 // pred_fallthru
        _
      %p399 = scmp.lt.s32.totalorder %s24, 2
      // Predicated region
      $region61: #{tpu_custom_call.1} parent=5 // pred_check
        %p400 = pneg %p399
      $region62: #{tpu_custom_call.1} parent=5 // pred_check_branch
        %402 = sbr.rel (%p400) target = $region64
      $region63: #{tpu_custom_call.1} parent=5 // pred_region
        // Predicated region
        $region65: #{tpu_custom_call.1} parent=63 // pred_check
          %p403 = pneg %p44
        $region66: #{tpu_custom_call.1} parent=63 // pred_check_branch
          %405 = sbr.rel (%p403) target = $region68
        $region67: #{tpu_custom_call.1} parent=63 // pred_region
          %s406 = smul.u32 32, %s24
          %p407 = scmp.lt.s32.totalorder %s406, 63
          %s408 = scalar_select %p407, %s406, 63
          %s409 = smul.addr %s408, 8
          %s410 = scalar_lea.vmem %s0, %s409
          %s411 = smul.u32 32, %s24
        $region68: #{tpu_custom_call.1} parent=63 // pred_fallthru
          _
      $region64: #{tpu_custom_call.1} parent=5 // pred_fallthru
        _
      %p412 = scmp.le.s32.totalorder 1, %s24
      %p413 = scmp.lt.s32.totalorder %s24, 3
      %p414 = pnand %p412, %p413
      %p415 = pneg %p414
      // Predicated region
      $region69: #{tpu_custom_call.1} parent=5 // pred_check
        _
      $region70: #{tpu_custom_call.1} parent=5 // pred_check_branch
        %417 = sbr.rel (%p414) target = $region72
      $region71: #{tpu_custom_call.1} parent=5 // pred_region
        %s418 = ssub.s32 %s24, 1
        // Predicated region
        $region73: #{tpu_custom_call.1} parent=71 // pred_check
          %p419 = pneg %p155
        $region74: #{tpu_custom_call.1} parent=71 // pred_check_branch
          %421 = sbr.rel (%p419) target = $region76
        $region75: #{tpu_custom_call.1} parent=71 // pred_region
          %422 = dma.done [#allocation3], 16384
        $region76: #{tpu_custom_call.1} parent=71 // pred_fallthru
          _
        // Predicated region
        $region77: #{tpu_custom_call.1} parent=71 // pred_check
          %p423 = pneg %p197
        $region78: #{tpu_custom_call.1} parent=71 // pred_check_branch
          %425 = sbr.rel (%p423) target = $region80
        $region79: #{tpu_custom_call.1} parent=71 // pred_region
          %426 = dma.done [#allocation6], 16384
        $region80: #{tpu_custom_call.1} parent=71 // pred_fallthru
          _
        %s427 = smul.u32 32, %s29
        %p428 = scmp.lt.s32.totalorder %s427, 63
        %s429 = scalar_select %p428, %s427, 63
        %s430 = smul.addr %s429, 8
        %s431 = scalar_lea.vmem %s0, %s430
        %p432 = pneg %p50
        %p433 = pneg %p47
        %p434 = pneg %p71
        %p435 = pneg %p68
        %p436 = pneg %p92
        %p437 = pneg %p89
        %p438 = pneg %p113
        %p439 = pneg %p110
        %p440 = pneg %p134
        %p441 = pneg %p131
        %p442 = pneg %p155
        %p443 = pneg %p152
        %p444 = pneg %p176
        %p445 = pneg %p173
        %p446 = pneg %p197
        %p447 = pneg %p194
        %p448 = pneg %p218
        %p449 = pneg %p215
        %p450 = pneg %p239
        %p451 = pneg %p236
        %p452 = pneg %p260
        %p453 = pneg %p257
        %p454 = pneg %p281
        %p455 = pneg %p278
        %p456 = pneg %p302
        %p457 = pneg %p299
        %p458 = pneg %p328
        %p459 = pneg %p325
        %s460 = sand.u32 %s315, 1
        %s461 = scalar_lea.sflag [#allocation4], %s460
        %s462 = sand.u32 %s315, 1
        %s463 = smul.addr %s462, 256
        %s464 = scalar_lea.vmem [#allocation7], %s463
        %s465 = smul.u32 32, %s29
        %p466 = scmp.lt.s32.totalorder %s465, 63
        %s467 = scalar_select %p466, %s465, 63
        %s468 = smul.addr %s467, 8
        %s469 = scalar_lea.vmem %s0, %s468
        %s470 = smul.u32 32, %s29
        %s471 = smul.u32 32, %s29
        %v473 = vld [vmem:[%s469] sm:$0xff]
        %v474 = vld [vmem:[%s469 + $0x8] sm:$0xff]
        %v475 = vld [vmem:[%s469 + $0x10] sm:$0xff]
        %v476 = vld [vmem:[%s469 + $0x18] sm:$0xff]
        %v477 = vld [vmem:[%s469 + $0x20] sm:$0xff]
        %v478 = vld [vmem:[%s469 + $0x28] sm:$0xff]
        %v479 = vld [vmem:[%s469 + $0x30] sm:$0xff]
        %v480 = vld [vmem:[%s469 + $0x38] sm:$0xff]
        %v481 = vld [vmem:[%s469 + $0x40] sm:$0xff]
        %v482 = vld [vmem:[%s469 + $0x48] sm:$0xff]
        %v483 = vld [vmem:[%s469 + $0x50] sm:$0xff]
        %v484 = vld [vmem:[%s469 + $0x58] sm:$0xff]
        %v485 = vld [vmem:[%s469 + $0x60] sm:$0xff]
        %v486 = vld [vmem:[%s469 + $0x68] sm:$0xff]
        %v487 = vld [vmem:[%s469 + $0x70] sm:$0xff]
        %v488 = vld [vmem:[%s469 + $0x78] sm:$0xff]
        %v489 = vld [vmem:[%s469 + $0x80] sm:$0xff]
        %v490 = vld [vmem:[%s469 + $0x88] sm:$0xff]
        %v491 = vld [vmem:[%s469 + $0x90] sm:$0xff]
        %v492 = vld [vmem:[%s469 + $0x98] sm:$0xff]
        %v493 = vld [vmem:[%s469 + $0xa0] sm:$0xff]
        %v494 = vld [vmem:[%s469 + $0xa8] sm:$0xff]
        %v495 = vld [vmem:[%s469 + $0xb0] sm:$0xff]
        %v496 = vld [vmem:[%s469 + $0xb8] sm:$0xff]
        %v497 = vld [vmem:[%s469 + $0xc0] sm:$0xff]
        %v498 = vld [vmem:[%s469 + $0xc8] sm:$0xff]
        %v499 = vld [vmem:[%s469 + $0xd0] sm:$0xff]
        %v500 = vld [vmem:[%s469 + $0xd8] sm:$0xff]
        %v501 = vld [vmem:[%s469 + $0xe0] sm:$0xff]
        %v502 = vld [vmem:[%s469 + $0xe8] sm:$0xff]
        %v503 = vld [vmem:[%s469 + $0xf0] sm:$0xff]
        %v504 = vld [vmem:[%s469 + $0xf8] sm:$0xff]
        %v505 = vpack.c.bf16 %v474, %v473
        %v506 = vpack.c.bf16 %v476, %v475
        %v507 = vpack.c.bf16 %v478, %v477
        %v508 = vpack.c.bf16 %v480, %v479
        %v509 = vpack.c.bf16 %v482, %v481
        %v510 = vpack.c.bf16 %v484, %v483
        %v511 = vpack.c.bf16 %v486, %v485
        %v512 = vpack.c.bf16 %v488, %v487
        %v513 = vpack.c.bf16 %v490, %v489
        %v514 = vpack.c.bf16 %v492, %v491
        %v515 = vpack.c.bf16 %v494, %v493
        %v516 = vpack.c.bf16 %v496, %v495
        %v517 = vpack.c.bf16 %v498, %v497
        %v518 = vpack.c.bf16 %v500, %v499
        %v519 = vpack.c.bf16 %v502, %v501
        %v520 = vpack.c.bf16 %v504, %v503
        %v521 = vld [vmem:[%s1] sm:$0xf]
        %v522 = vld [vmem:[%s1 + $0x4] sm:$0xf]
        %v523 = vld [vmem:[%s1 + $0x8] sm:$0xf]
        %v524 = vld [vmem:[%s1 + $0xc] sm:$0xf]
        %v525 = vld [vmem:[%s2] sm:$0x1]
        %v527 = vlaneseq
        %v528 = vshrl.u32 %v527, 7
        %v529 = vsub.s32 0, %v528
        %v530 = vrot.slane %v525, %v529
        %v536 = vunpack.c.l.b16 %v521
        %v537 = vunpack.c.l.b16 %v522
        %v538 = vunpack.c.l.b16 %v523
        %v539 = vunpack.c.l.b16 %v524
        %v540 = vpack.c.b16 %v537, %v536
        %v541 = vpack.c.b16 %v539, %v538
        %vm544 = vcmask 261120
        %v546 = vsel %vm544, %v505, 0
        %v549 = vsel %vm544, %v506, 0
        %v552 = vsel %vm544, %v507, 0
        %v555 = vsel %vm544, %v508, 0
        %v558 = vsel %vm544, %v509, 0
        %v561 = vsel %vm544, %v510, 0
        %v564 = vsel %vm544, %v511, 0
        %v567 = vsel %vm544, %v512, 0
        %v570 = vsel %vm544, %v513, 0
        %v573 = vsel %vm544, %v514, 0
        %v576 = vsel %vm544, %v515, 0
        %v579 = vsel %vm544, %v516, 0
        %v582 = vsel %vm544, %v517, 0
        %v585 = vsel %vm544, %v518, 0
        %v588 = vsel %vm544, %v519, 0
        %v591 = vsel %vm544, %v520, 0
        %593 = vmatprep.subr.bf16.mxu0 0
        %594 = vmatpush1.bf16.msra.mxu0 0
        %595 = vmatprep.subr.bf16.mxu0 0
        %596 = vmatpush1.bf16.msra.mxu0 0
        %597 = vmatprep.subr.bf16.mxu0 0
        %598 = vmatpush1.bf16.msra.mxu0 0
        %599 = vmatprep.subr.bf16.mxu0 0
        %600 = vmatpush1.bf16.msra.mxu0 0
        %601 = vmatprep.subr.bf16.mxu0 0
        %602 = vmatpush1.bf16.msra.mxu0 0
        %603 = vmatprep.subr.bf16.mxu0 0
        %604 = vmatpush1.bf16.msra.mxu0 0
        %605 = vmatprep.subr.bf16.mxu0 0
        %606 = vmatpush1.bf16.msra.mxu0 %v541
        %607 = vmatprep.subr.bf16.mxu0 0
        %608 = vmatpush1.bf16.msra.mxu0 %v540
        %609 = vmatprep.subr.bf16.mxu0 0
        %610 = vmatpush2.bf16.msra.mxu0 0
        %611 = vmatprep.subr.bf16.mxu0 0
        %612 = vmatpush2.bf16.msra.mxu0 0
        %613 = vmatprep.subr.bf16.mxu0 0
        %614 = vmatpush2.bf16.msra.mxu0 0
        %615 = vmatprep.subr.bf16.mxu0 0
        %616 = vmatpush2.bf16.msra.mxu0 0
        %617 = vmatprep.subr.bf16.mxu0 0
        %618 = vmatpush2.bf16.msra.mxu0 0
        %619 = vmatprep.subr.bf16.mxu0 0
        %620 = vmatpush2.bf16.msra.mxu0 0
        %621 = vmatprep.subr.bf16.mxu0 0
        %622 = vmatpush2.bf16.msra.mxu0 0
        %623 = vmatprep.subr.bf16.mxu0 0
        %624 = vmatpush2.bf16.msra.mxu0 0
        %625 = vmatprep.mubr.bf16.mxu0 0
        %626 = vmatmul.mubr.bf16.gmra.mxu0 %v546
        %v627 = vpop.f32.mrf.mxu0
        %v628 = vadd.f32 %v530, %v627
        %v629 = vpop.f32.mrf.mxu0
        %v630 = vpop.f32.mrf.mxu0
        %v631 = vadd.f32 %v530, %v630
        %v632 = vpop.f32.mrf.mxu0
        %633 = vmatprep.mubr.bf16.mxu0 0
        %634 = vmatmul.mubr.bf16.gmra.mxu0 %v549
        %v635 = vpop.f32.mrf.mxu0
        %v636 = vadd.f32 %v530, %v635
        %v637 = vpop.f32.mrf.mxu0
        %v638 = vpop.f32.mrf.mxu0
        %v639 = vadd.f32 %v530, %v638
        %v640 = vpop.f32.mrf.mxu0
        %641 = vmatprep.mubr.bf16.mxu0 0
        %642 = vmatmul.mubr.bf16.gmra.mxu0 %v552
        %v643 = vpop.f32.mrf.mxu0
        %v644 = vadd.f32 %v530, %v643
        %v645 = vpop.f32.mrf.mxu0
        %v646 = vpop.f32.mrf.mxu0
        %v647 = vadd.f32 %v530, %v646
        %v648 = vpop.f32.mrf.mxu0
        %649 = vmatprep.mubr.bf16.mxu0 0
        %650 = vmatmul.mubr.bf16.gmra.mxu0 %v555
        %v651 = vpop.f32.mrf.mxu0
        %v652 = vadd.f32 %v530, %v651
        %v653 = vpop.f32.mrf.mxu0
        %v654 = vpop.f32.mrf.mxu0
        %v655 = vadd.f32 %v530, %v654
        %v656 = vpop.f32.mrf.mxu0
        %657 = vmatprep.mubr.bf16.mxu0 0
        %658 = vmatmul.mubr.bf16.gmra.mxu0 %v558
        %v659 = vpop.f32.mrf.mxu0
        %v660 = vadd.f32 %v530, %v659
        %v661 = vpop.f32.mrf.mxu0
        %v662 = vpop.f32.mrf.mxu0
        %v663 = vadd.f32 %v530, %v662
        %v664 = vpop.f32.mrf.mxu0
        %665 = vmatprep.mubr.bf16.mxu0 0
        %666 = vmatmul.mubr.bf16.gmra.mxu0 %v561
        %v667 = vpop.f32.mrf.mxu0
        %v668 = vadd.f32 %v530, %v667
        %v669 = vpop.f32.mrf.mxu0
        %v670 = vpop.f32.mrf.mxu0
        %v671 = vadd.f32 %v530, %v670
        %v672 = vpop.f32.mrf.mxu0
        %673 = vmatprep.mubr.bf16.mxu0 0
        %674 = vmatmul.mubr.bf16.gmra.mxu0 %v564
        %v675 = vpop.f32.mrf.mxu0
        %v676 = vadd.f32 %v530, %v675
        %v677 = vpop.f32.mrf.mxu0
        %v678 = vpop.f32.mrf.mxu0
        %v679 = vadd.f32 %v530, %v678
        %v680 = vpop.f32.mrf.mxu0
        %681 = vmatprep.mubr.bf16.mxu0 0
        %682 = vmatmul.mubr.bf16.gmra.mxu0 %v567
        %v683 = vpop.f32.mrf.mxu0
        %v684 = vadd.f32 %v530, %v683
        %v685 = vpop.f32.mrf.mxu0
        %v686 = vpop.f32.mrf.mxu0
        %v687 = vadd.f32 %v530, %v686
        %v688 = vpop.f32.mrf.mxu0
        %689 = vmatprep.mubr.bf16.mxu0 0
        %690 = vmatmul.mubr.bf16.gmra.mxu0 %v570
        %v691 = vpop.f32.mrf.mxu0
        %v692 = vadd.f32 %v530, %v691
        %v693 = vpop.f32.mrf.mxu0
        %v694 = vpop.f32.mrf.mxu0
        %v695 = vadd.f32 %v530, %v694
        %v696 = vpop.f32.mrf.mxu0
        %697 = vmatprep.mubr.bf16.mxu0 0
        %698 = vmatmul.mubr.bf16.gmra.mxu0 %v573
        %v699 = vpop.f32.mrf.mxu0
        %v700 = vadd.f32 %v530, %v699
        %v701 = vpop.f32.mrf.mxu0
        %v702 = vpop.f32.mrf.mxu0
        %v703 = vadd.f32 %v530, %v702
        %v704 = vpop.f32.mrf.mxu0
        %705 = vmatprep.mubr.bf16.mxu0 0
        %706 = vmatmul.mubr.bf16.gmra.mxu0 %v576
        %v707 = vpop.f32.mrf.mxu0
        %v708 = vadd.f32 %v530, %v707
        %v709 = vpop.f32.mrf.mxu0
        %v710 = vpop.f32.mrf.mxu0
        %v711 = vadd.f32 %v530, %v710
        %v712 = vpop.f32.mrf.mxu0
        %713 = vmatprep.mubr.bf16.mxu0 0
        %714 = vmatmul.mubr.bf16.gmra.mxu0 %v579
        %v715 = vpop.f32.mrf.mxu0
        %v716 = vadd.f32 %v530, %v715
        %v717 = vpop.f32.mrf.mxu0
        %v718 = vpop.f32.mrf.mxu0
        %v719 = vadd.f32 %v530, %v718
        %v720 = vpop.f32.mrf.mxu0
        %721 = vmatprep.mubr.bf16.mxu0 0
        %722 = vmatmul.mubr.bf16.gmra.mxu0 %v582
        %v723 = vpop.f32.mrf.mxu0
        %v724 = vadd.f32 %v530, %v723
        %v725 = vpop.f32.mrf.mxu0
        %v726 = vpop.f32.mrf.mxu0
        %v727 = vadd.f32 %v530, %v726
        %v728 = vpop.f32.mrf.mxu0
        %729 = vmatprep.mubr.bf16.mxu0 0
        %730 = vmatmul.mubr.bf16.gmra.mxu0 %v585
        %v731 = vpop.f32.mrf.mxu0
        %v732 = vadd.f32 %v530, %v731
        %v733 = vpop.f32.mrf.mxu0
        %v734 = vpop.f32.mrf.mxu0
        %v735 = vadd.f32 %v530, %v734
        %v736 = vpop.f32.mrf.mxu0
        %737 = vmatprep.mubr.bf16.mxu0 0
        %738 = vmatmul.mubr.bf16.gmra.mxu0 %v588
        %v739 = vpop.f32.mrf.mxu0
        %v740 = vadd.f32 %v530, %v739
        %v741 = vpop.f32.mrf.mxu0
        %v742 = vpop.f32.mrf.mxu0
        %v743 = vadd.f32 %v530, %v742
        %v744 = vpop.f32.mrf.mxu0
        %745 = vmatprep.mubr.bf16.mxu0 0
        %746 = vmatmul.mubr.bf16.gmra.mxu0 %v591
        %v747 = vpop.f32.mrf.mxu0
        %v748 = vadd.f32 %v530, %v747
        %v749 = vpop.f32.mrf.mxu0
        %v750 = vpop.f32.mrf.mxu0
        %v751 = vadd.f32 %v530, %v750
        %v752 = vpop.f32.mrf.mxu0
        %753 = vdwg.mxu0
        %v754 = vmax.f32 %v628, 0.0
        %v755 = vmax.f32 %v631, 0.0
        %v756 = vmax.f32 %v636, 0.0
        %v757 = vmax.f32 %v639, 0.0
        %v758 = vmax.f32 %v644, 0.0
        %v759 = vmax.f32 %v647, 0.0
        %v760 = vmax.f32 %v652, 0.0
        %v761 = vmax.f32 %v655, 0.0
        %v762 = vmax.f32 %v660, 0.0
        %v763 = vmax.f32 %v663, 0.0
        %v764 = vmax.f32 %v668, 0.0
        %v765 = vmax.f32 %v671, 0.0
        %v766 = vmax.f32 %v676, 0.0
        %v767 = vmax.f32 %v679, 0.0
        %v768 = vmax.f32 %v684, 0.0
        %v769 = vmax.f32 %v687, 0.0
        %v770 = vmax.f32 %v692, 0.0
        %v771 = vmax.f32 %v695, 0.0
        %v772 = vmax.f32 %v700, 0.0
        %v773 = vmax.f32 %v703, 0.0
        %v774 = vmax.f32 %v708, 0.0
        %v775 = vmax.f32 %v711, 0.0
        %v776 = vmax.f32 %v716, 0.0
        %v777 = vmax.f32 %v719, 0.0
        %v778 = vmax.f32 %v724, 0.0
        %v779 = vmax.f32 %v727, 0.0
        %v780 = vmax.f32 %v732, 0.0
        %v781 = vmax.f32 %v735, 0.0
        %v782 = vmax.f32 %v740, 0.0
        %v783 = vmax.f32 %v743, 0.0
        %v784 = vmax.f32 %v748, 0.0
        %v785 = vmax.f32 %v751, 0.0
        %v786 = vpack.c.bf16 %v755, %v754
        %v787 = vpack.c.bf16 %v757, %v756
        %v788 = vpack.c.bf16 %v759, %v758
        %v789 = vpack.c.bf16 %v761, %v760
        %v790 = vpack.c.bf16 %v763, %v762
        %v791 = vpack.c.bf16 %v765, %v764
        %v792 = vpack.c.bf16 %v767, %v766
        %v793 = vpack.c.bf16 %v769, %v768
        %v794 = vpack.c.bf16 %v771, %v770
        %v795 = vpack.c.bf16 %v773, %v772
        %v796 = vpack.c.bf16 %v775, %v774
        %v797 = vpack.c.bf16 %v777, %v776
        %v798 = vpack.c.bf16 %v779, %v778
        %v799 = vpack.c.bf16 %v781, %v780
        %v800 = vpack.c.bf16 %v783, %v782
        %v801 = vpack.c.bf16 %v785, %v784
        %v802 = vld [vmem:[%s3] sm:$0xff]
        %v803 = vld [vmem:[%s3 + $0x8] sm:$0xff]
        %v804 = vld [vmem:[%s3 + $0x10] sm:$0xff]
        %v805 = vld [vmem:[%s3 + $0x18] sm:$0xff]
        %v806 = vld [vmem:[%s3 + $0x20] sm:$0xff]
        %v807 = vld [vmem:[%s3 + $0x28] sm:$0xff]
        %v808 = vld [vmem:[%s3 + $0x30] sm:$0xff]
        %v809 = vld [vmem:[%s3 + $0x38] sm:$0xff]
        %v810 = vld [vmem:[%s4] sm:$0x3]
        %v812 = vlaneseq
        %v813 = vshrl.u32 %v812, 7
        %v814 = vsub.s32 0, %v813
        %v815 = vrot.slane %v810, %v814
        %v816 = vlaneseq
        %v817 = vshrl.u32 %v816, 7
        %v818 = vsub.s32 1, %v817
        %v819 = vrot.slane %v810, %v818
        %v830 = vunpack.c.l.b16 %v802
        %v831 = vunpack.c.h.b16 %v802
        %v832 = vunpack.c.l.b16 %v803
        %v833 = vunpack.c.h.b16 %v803
        %v834 = vunpack.c.l.b16 %v804
        %v835 = vunpack.c.h.b16 %v804
        %v836 = vunpack.c.l.b16 %v805
        %v837 = vunpack.c.h.b16 %v805
        %v838 = vunpack.c.l.b16 %v806
        %v839 = vunpack.c.h.b16 %v806
        %v840 = vunpack.c.l.b16 %v807
        %v841 = vunpack.c.h.b16 %v807
        %v842 = vunpack.c.l.b16 %v808
        %v843 = vunpack.c.h.b16 %v808
        %v844 = vunpack.c.l.b16 %v809
        %v845 = vunpack.c.h.b16 %v809
        %v846 = vpack.c.b16 %v832, %v830
        %v847 = vpack.c.b16 %v833, %v831
        %v848 = vpack.c.b16 %v836, %v834
        %v849 = vpack.c.b16 %v837, %v835
        %v850 = vpack.c.b16 %v840, %v838
        %v851 = vpack.c.b16 %v841, %v839
        %v852 = vpack.c.b16 %v844, %v842
        %v853 = vpack.c.b16 %v845, %v843
        %vm862 = vcmask 523264
        %v864 = vsel %vm862, %v786, 0
        %v867 = vsel %vm862, %v787, 0
        %v870 = vsel %vm862, %v788, 0
        %v873 = vsel %vm862, %v789, 0
        %v876 = vsel %vm862, %v790, 0
        %v879 = vsel %vm862, %v791, 0
        %v882 = vsel %vm862, %v792, 0
        %v885 = vsel %vm862, %v793, 0
        %v888 = vsel %vm862, %v794, 0
        %v891 = vsel %vm862, %v795, 0
        %v894 = vsel %vm862, %v796, 0
        %v897 = vsel %vm862, %v797, 0
        %v900 = vsel %vm862, %v798, 0
        %v903 = vsel %vm862, %v799, 0
        %v906 = vsel %vm862, %v800, 0
        %v909 = vsel %vm862, %v801, 0
        %911 = vmatprep.subr.bf16.mxu0 0
        %912 = vmatpush1.bf16.msra.mxu0 0
        %913 = vmatprep.subr.bf16.mxu0 0
        %914 = vmatpush1.bf16.msra.mxu0 0
        %915 = vmatprep.subr.bf16.mxu0 0
        %916 = vmatpush1.bf16.msra.mxu0 0
        %917 = vmatprep.subr.bf16.mxu0 0
        %918 = vmatpush1.bf16.msra.mxu0 0
        %919 = vmatprep.subr.bf16.mxu0 %v853
        %920 = vmatpush1.bf16.msra.mxu0 %v852
        %921 = vmatprep.subr.bf16.mxu0 %v851
        %922 = vmatpush1.bf16.msra.mxu0 %v850
        %923 = vmatprep.subr.bf16.mxu0 %v849
        %924 = vmatpush1.bf16.msra.mxu0 %v848
        %925 = vmatprep.subr.bf16.mxu0 %v847
        %926 = vmatpush1.bf16.msra.mxu0 %v846
        %927 = vmatprep.subr.bf16.mxu0 0
        %928 = vmatpush2.bf16.msra.mxu0 0
        %929 = vmatprep.subr.bf16.mxu0 0
        %930 = vmatpush2.bf16.msra.mxu0 0
        %931 = vmatprep.subr.bf16.mxu0 0
        %932 = vmatpush2.bf16.msra.mxu0 0
        %933 = vmatprep.subr.bf16.mxu0 0
        %934 = vmatpush2.bf16.msra.mxu0 0
        %935 = vmatprep.subr.bf16.mxu0 0
        %936 = vmatpush2.bf16.msra.mxu0 0
        %937 = vmatprep.subr.bf16.mxu0 0
        %938 = vmatpush2.bf16.msra.mxu0 0
        %939 = vmatprep.subr.bf16.mxu0 0
        %940 = vmatpush2.bf16.msra.mxu0 0
        %941 = vmatprep.subr.bf16.mxu0 0
        %942 = vmatpush2.bf16.msra.mxu0 0
        %943 = vmatprep.mubr.bf16.mxu0 0
        %944 = vmatmul.mubr.bf16.gmra.mxu0 %v864
        %v945 = vpop.f32.mrf.mxu0
        %v946 = vadd.f32 %v815, %v945
        %v947 = vpop.f32.mrf.mxu0
        %v948 = vadd.f32 %v819, %v947
        %v949 = vpop.f32.mrf.mxu0
        %v950 = vadd.f32 %v815, %v949
        %v951 = vpop.f32.mrf.mxu0
        %v952 = vadd.f32 %v819, %v951
        %953 = vmatprep.mubr.bf16.mxu0 0
        %954 = vmatmul.mubr.bf16.gmra.mxu0 %v867
        %v955 = vpop.f32.mrf.mxu0
        %v956 = vadd.f32 %v815, %v955
        %v957 = vpop.f32.mrf.mxu0
        %v958 = vadd.f32 %v819, %v957
        %v959 = vpop.f32.mrf.mxu0
        %v960 = vadd.f32 %v815, %v959
        %v961 = vpop.f32.mrf.mxu0
        %v962 = vadd.f32 %v819, %v961
        %963 = vmatprep.mubr.bf16.mxu0 0
        %964 = vmatmul.mubr.bf16.gmra.mxu0 %v870
        %v965 = vpop.f32.mrf.mxu0
        %v966 = vadd.f32 %v815, %v965
        %v967 = vpop.f32.mrf.mxu0
        %v968 = vadd.f32 %v819, %v967
        %v969 = vpop.f32.mrf.mxu0
        %v970 = vadd.f32 %v815, %v969
        %v971 = vpop.f32.mrf.mxu0
        %v972 = vadd.f32 %v819, %v971
        %973 = vmatprep.mubr.bf16.mxu0 0
        %974 = vmatmul.mubr.bf16.gmra.mxu0 %v873
        %v975 = vpop.f32.mrf.mxu0
        %v976 = vadd.f32 %v815, %v975
        %v977 = vpop.f32.mrf.mxu0
        %v978 = vadd.f32 %v819, %v977
        %v979 = vpop.f32.mrf.mxu0
        %v980 = vadd.f32 %v815, %v979
        %v981 = vpop.f32.mrf.mxu0
        %v982 = vadd.f32 %v819, %v981
        %983 = vmatprep.mubr.bf16.mxu0 0
        %984 = vmatmul.mubr.bf16.gmra.mxu0 %v876
        %v985 = vpop.f32.mrf.mxu0
        %v986 = vadd.f32 %v815, %v985
        %v987 = vpop.f32.mrf.mxu0
        %v988 = vadd.f32 %v819, %v987
        %v989 = vpop.f32.mrf.mxu0
        %v990 = vadd.f32 %v815, %v989
        %v991 = vpop.f32.mrf.mxu0
        %v992 = vadd.f32 %v819, %v991
        %993 = vmatprep.mubr.bf16.mxu0 0
        %994 = vmatmul.mubr.bf16.gmra.mxu0 %v879
        %v995 = vpop.f32.mrf.mxu0
        %v996 = vadd.f32 %v815, %v995
        %v997 = vpop.f32.mrf.mxu0
        %v998 = vadd.f32 %v819, %v997
        %v999 = vpop.f32.mrf.mxu0
        %v1000 = vadd.f32 %v815, %v999
        %v1001 = vpop.f32.mrf.mxu0
        %v1002 = vadd.f32 %v819, %v1001
        %1003 = vmatprep.mubr.bf16.mxu0 0
        %1004 = vmatmul.mubr.bf16.gmra.mxu0 %v882
        %v1005 = vpop.f32.mrf.mxu0
        %v1006 = vadd.f32 %v815, %v1005
        %v1007 = vpop.f32.mrf.mxu0
        %v1008 = vadd.f32 %v819, %v1007
        %v1009 = vpop.f32.mrf.mxu0
        %v1010 = vadd.f32 %v815, %v1009
        %v1011 = vpop.f32.mrf.mxu0
        %v1012 = vadd.f32 %v819, %v1011
        %1013 = vmatprep.mubr.bf16.mxu0 0
        %1014 = vmatmul.mubr.bf16.gmra.mxu0 %v885
        %v1015 = vpop.f32.mrf.mxu0
        %v1016 = vadd.f32 %v815, %v1015
        %v1017 = vpop.f32.mrf.mxu0
        %v1018 = vadd.f32 %v819, %v1017
        %v1019 = vpop.f32.mrf.mxu0
        %v1020 = vadd.f32 %v815, %v1019
        %v1021 = vpop.f32.mrf.mxu0
        %v1022 = vadd.f32 %v819, %v1021
        %1023 = vmatprep.mubr.bf16.mxu0 0
        %1024 = vmatmul.mubr.bf16.gmra.mxu0 %v888
        %v1025 = vpop.f32.mrf.mxu0
        %v1026 = vadd.f32 %v815, %v1025
        %v1027 = vpop.f32.mrf.mxu0
        %v1028 = vadd.f32 %v819, %v1027
        %v1029 = vpop.f32.mrf.mxu0
        %v1030 = vadd.f32 %v815, %v1029
        %v1031 = vpop.f32.mrf.mxu0
        %v1032 = vadd.f32 %v819, %v1031
        %1033 = vmatprep.mubr.bf16.mxu0 0
        %1034 = vmatmul.mubr.bf16.gmra.mxu0 %v891
        %v1035 = vpop.f32.mrf.mxu0
        %v1036 = vadd.f32 %v815, %v1035
        %v1037 = vpop.f32.mrf.mxu0
        %v1038 = vadd.f32 %v819, %v1037
        %v1039 = vpop.f32.mrf.mxu0
        %v1040 = vadd.f32 %v815, %v1039
        %v1041 = vpop.f32.mrf.mxu0
        %v1042 = vadd.f32 %v819, %v1041
        %1043 = vmatprep.mubr.bf16.mxu0 0
        %1044 = vmatmul.mubr.bf16.gmra.mxu0 %v894
        %v1045 = vpop.f32.mrf.mxu0
        %v1046 = vadd.f32 %v815, %v1045
        %v1047 = vpop.f32.mrf.mxu0
        %v1048 = vadd.f32 %v819, %v1047
        %v1049 = vpop.f32.mrf.mxu0
        %v1050 = vadd.f32 %v815, %v1049
        %v1051 = vpop.f32.mrf.mxu0
        %v1052 = vadd.f32 %v819, %v1051
        %1053 = vmatprep.mubr.bf16.mxu0 0
        %1054 = vmatmul.mubr.bf16.gmra.mxu0 %v897
        %v1055 = vpop.f32.mrf.mxu0
        %v1056 = vadd.f32 %v815, %v1055
        %v1057 = vpop.f32.mrf.mxu0
        %v1058 = vadd.f32 %v819, %v1057
        %v1059 = vpop.f32.mrf.mxu0
        %v1060 = vadd.f32 %v815, %v1059
        %v1061 = vpop.f32.mrf.mxu0
        %v1062 = vadd.f32 %v819, %v1061
        %1063 = vmatprep.mubr.bf16.mxu0 0
        %1064 = vmatmul.mubr.bf16.gmra.mxu0 %v900
        %v1065 = vpop.f32.mrf.mxu0
        %v1066 = vadd.f32 %v815, %v1065
        %v1067 = vpop.f32.mrf.mxu0
        %v1068 = vadd.f32 %v819, %v1067
        %v1069 = vpop.f32.mrf.mxu0
        %v1070 = vadd.f32 %v815, %v1069
        %v1071 = vpop.f32.mrf.mxu0
        %v1072 = vadd.f32 %v819, %v1071
        %1073 = vmatprep.mubr.bf16.mxu0 0
        %1074 = vmatmul.mubr.bf16.gmra.mxu0 %v903
        %v1075 = vpop.f32.mrf.mxu0
        %v1076 = vadd.f32 %v815, %v1075
        %v1077 = vpop.f32.mrf.mxu0
        %v1078 = vadd.f32 %v819, %v1077
        %v1079 = vpop.f32.mrf.mxu0
        %v1080 = vadd.f32 %v815, %v1079
        %v1081 = vpop.f32.mrf.mxu0
        %v1082 = vadd.f32 %v819, %v1081
        %1083 = vmatprep.mubr.bf16.mxu0 0
        %1084 = vmatmul.mubr.bf16.gmra.mxu0 %v906
        %v1085 = vpop.f32.mrf.mxu0
        %v1086 = vadd.f32 %v815, %v1085
        %v1087 = vpop.f32.mrf.mxu0
        %v1088 = vadd.f32 %v819, %v1087
        %v1089 = vpop.f32.mrf.mxu0
        %v1090 = vadd.f32 %v815, %v1089
        %v1091 = vpop.f32.mrf.mxu0
        %v1092 = vadd.f32 %v819, %v1091
        %1093 = vmatprep.mubr.bf16.mxu0 0
        %1094 = vmatmul.mubr.bf16.gmra.mxu0 %v909
        %v1095 = vpop.f32.mrf.mxu0
        %v1096 = vadd.f32 %v815, %v1095
        %v1097 = vpop.f32.mrf.mxu0
        %v1098 = vadd.f32 %v819, %v1097
        %v1099 = vpop.f32.mrf.mxu0
        %v1100 = vadd.f32 %v815, %v1099
        %v1101 = vpop.f32.mrf.mxu0
        %v1102 = vadd.f32 %v819, %v1101
        %1103 = vdwg.mxu0
        %v1104 = vmax.f32 %v946, 0.0
        %v1105 = vmax.f32 %v948, 0.0
        %v1106 = vmax.f32 %v950, 0.0
        %v1107 = vmax.f32 %v952, 0.0
        %v1108 = vmax.f32 %v956, 0.0
        %v1109 = vmax.f32 %v958, 0.0
        %v1110 = vmax.f32 %v960, 0.0
        %v1111 = vmax.f32 %v962, 0.0
        %v1112 = vmax.f32 %v966, 0.0
        %v1113 = vmax.f32 %v968, 0.0
        %v1114 = vmax.f32 %v970, 0.0
        %v1115 = vmax.f32 %v972, 0.0
        %v1116 = vmax.f32 %v976, 0.0
        %v1117 = vmax.f32 %v978, 0.0
        %v1118 = vmax.f32 %v980, 0.0
        %v1119 = vmax.f32 %v982, 0.0
        %v1120 = vmax.f32 %v986, 0.0
        %v1121 = vmax.f32 %v988, 0.0
        %v1122 = vmax.f32 %v990, 0.0
        %v1123 = vmax.f32 %v992, 0.0
        %v1124 = vmax.f32 %v996, 0.0
        %v1125 = vmax.f32 %v998, 0.0
        %v1126 = vmax.f32 %v1000, 0.0
        %v1127 = vmax.f32 %v1002, 0.0
        %v1128 = vmax.f32 %v1006, 0.0
        %v1129 = vmax.f32 %v1008, 0.0
        %v1130 = vmax.f32 %v1010, 0.0
        %v1131 = vmax.f32 %v1012, 0.0
        %v1132 = vmax.f32 %v1016, 0.0
        %v1133 = vmax.f32 %v1018, 0.0
        %v1134 = vmax.f32 %v1020, 0.0
        %v1135 = vmax.f32 %v1022, 0.0
        %v1136 = vmax.f32 %v1026, 0.0
        %v1137 = vmax.f32 %v1028, 0.0
        %v1138 = vmax.f32 %v1030, 0.0
        %v1139 = vmax.f32 %v1032, 0.0
        %v1140 = vmax.f32 %v1036, 0.0
        %v1141 = vmax.f32 %v1038, 0.0
        %v1142 = vmax.f32 %v1040, 0.0
        %v1143 = vmax.f32 %v1042, 0.0
        %v1144 = vmax.f32 %v1046, 0.0
        %v1145 = vmax.f32 %v1048, 0.0
        %v1146 = vmax.f32 %v1050, 0.0
        %v1147 = vmax.f32 %v1052, 0.0
        %v1148 = vmax.f32 %v1056, 0.0
        %v1149 = vmax.f32 %v1058, 0.0
        %v1150 = vmax.f32 %v1060, 0.0
        %v1151 = vmax.f32 %v1062, 0.0
        %v1152 = vmax.f32 %v1066, 0.0
        %v1153 = vmax.f32 %v1068, 0.0
        %v1154 = vmax.f32 %v1070, 0.0
        %v1155 = vmax.f32 %v1072, 0.0
        %v1156 = vmax.f32 %v1076, 0.0
        %v1157 = vmax.f32 %v1078, 0.0
        %v1158 = vmax.f32 %v1080, 0.0
        %v1159 = vmax.f32 %v1082, 0.0
        %v1160 = vmax.f32 %v1086, 0.0
        %v1161 = vmax.f32 %v1088, 0.0
        %v1162 = vmax.f32 %v1090, 0.0
        %v1163 = vmax.f32 %v1092, 0.0
        %v1164 = vmax.f32 %v1096, 0.0
        %v1165 = vmax.f32 %v1098, 0.0
        %v1166 = vmax.f32 %v1100, 0.0
        %v1167 = vmax.f32 %v1102, 0.0
        %v1168 = vpack.c.bf16 %v1106, %v1104
        %v1169 = vpack.c.bf16 %v1107, %v1105
        %v1170 = vpack.c.bf16 %v1110, %v1108
        %v1171 = vpack.c.bf16 %v1111, %v1109
        %v1172 = vpack.c.bf16 %v1114, %v1112
        %v1173 = vpack.c.bf16 %v1115, %v1113
        %v1174 = vpack.c.bf16 %v1118, %v1116
        %v1175 = vpack.c.bf16 %v1119, %v1117
        %v1176 = vpack.c.bf16 %v1122, %v1120
        %v1177 = vpack.c.bf16 %v1123, %v1121
        %v1178 = vpack.c.bf16 %v1126, %v1124
        %v1179 = vpack.c.bf16 %v1127, %v1125
        %v1180 = vpack.c.bf16 %v1130, %v1128
        %v1181 = vpack.c.bf16 %v1131, %v1129
        %v1182 = vpack.c.bf16 %v1134, %v1132
        %v1183 = vpack.c.bf16 %v1135, %v1133
        %v1184 = vpack.c.bf16 %v1138, %v1136
        %v1185 = vpack.c.bf16 %v1139, %v1137
        %v1186 = vpack.c.bf16 %v1142, %v1140
        %v1187 = vpack.c.bf16 %v1143, %v1141
        %v1188 = vpack.c.bf16 %v1146, %v1144
        %v1189 = vpack.c.bf16 %v1147, %v1145
        %v1190 = vpack.c.bf16 %v1150, %v1148
        %v1191 = vpack.c.bf16 %v1151, %v1149
        %v1192 = vpack.c.bf16 %v1154, %v1152
        %v1193 = vpack.c.bf16 %v1155, %v1153
        %v1194 = vpack.c.bf16 %v1158, %v1156
        %v1195 = vpack.c.bf16 %v1159, %v1157
        %v1196 = vpack.c.bf16 %v1162, %v1160
        %v1197 = vpack.c.bf16 %v1163, %v1161
        %v1198 = vpack.c.bf16 %v1166, %v1164
        %v1199 = vpack.c.bf16 %v1167, %v1165
        %v1200 = vld [vmem:[#allocation2] sm:$0xff]
        %v1201 = vld [vmem:[#allocation2 + $0x8] sm:$0xff]
        %v1202 = vld [vmem:[#allocation2 + $0x10] sm:$0xff]
        %v1203 = vld [vmem:[#allocation2 + $0x18] sm:$0xff]
        %v1204 = vld [vmem:[#allocation2 + $0x20] sm:$0xff]
        %v1205 = vld [vmem:[#allocation2 + $0x28] sm:$0xff]
        %v1206 = vld [vmem:[#allocation2 + $0x30] sm:$0xff]
        %v1207 = vld [vmem:[#allocation2 + $0x38] sm:$0xff]
        %v1208 = vld [vmem:[#allocation2 + $0x40] sm:$0xff]
        %v1209 = vld [vmem:[#allocation2 + $0x48] sm:$0xff]
        %v1210 = vld [vmem:[#allocation2 + $0x50] sm:$0xff]
        %v1211 = vld [vmem:[#allocation2 + $0x58] sm:$0xff]
        %v1212 = vld [vmem:[#allocation2 + $0x60] sm:$0xff]
        %v1213 = vld [vmem:[#allocation2 + $0x68] sm:$0xff]
        %v1214 = vld [vmem:[#allocation2 + $0x70] sm:$0xff]
        %v1215 = vld [vmem:[#allocation2 + $0x78] sm:$0xff]
        %v1216 = vld [vmem:[#allocation2 + $0x80] sm:$0xff]
        %v1217 = vld [vmem:[#allocation2 + $0x88] sm:$0xff]
        %v1218 = vld [vmem:[#allocation2 + $0x90] sm:$0xff]
        %v1219 = vld [vmem:[#allocation2 + $0x98] sm:$0xff]
        %v1220 = vld [vmem:[#allocation2 + $0xa0] sm:$0xff]
        %v1221 = vld [vmem:[#allocation2 + $0xa8] sm:$0xff]
        %v1222 = vld [vmem:[#allocation2 + $0xb0] sm:$0xff]
        %v1223 = vld [vmem:[#allocation2 + $0xb8] sm:$0xff]
        %v1224 = vld [vmem:[#allocation2 + $0xc0] sm:$0xff]
        %v1225 = vld [vmem:[#allocation2 + $0xc8] sm:$0xff]
        %v1226 = vld [vmem:[#allocation2 + $0xd0] sm:$0xff]
        %v1227 = vld [vmem:[#allocation2 + $0xd8] sm:$0xff]
        %v1228 = vld [vmem:[#allocation2 + $0xe0] sm:$0xff]
        %v1229 = vld [vmem:[#allocation2 + $0xe8] sm:$0xff]
        %v1230 = vld [vmem:[#allocation2 + $0xf0] sm:$0xff]
        %v1231 = vld [vmem:[#allocation2 + $0xf8] sm:$0xff]
        %v1232 = vld [vmem:[#allocation2 + $0x100] sm:$0xff]
        %v1233 = vld [vmem:[#allocation2 + $0x108] sm:$0xff]
        %v1234 = vld [vmem:[#allocation2 + $0x110] sm:$0xff]
        %v1235 = vld [vmem:[#allocation2 + $0x118] sm:$0xff]
        %v1236 = vld [vmem:[#allocation2 + $0x120] sm:$0xff]
        %v1237 = vld [vmem:[#allocation2 + $0x128] sm:$0xff]
        %v1238 = vld [vmem:[#allocation2 + $0x130] sm:$0xff]
        %v1239 = vld [vmem:[#allocation2 + $0x138] sm:$0xff]
        %v1240 = vld [vmem:[#allocation2 + $0x140] sm:$0xff]
        %v1241 = vld [vmem:[#allocation2 + $0x148] sm:$0xff]
        %v1242 = vld [vmem:[#allocation2 + $0x150] sm:$0xff]
        %v1243 = vld [vmem:[#allocation2 + $0x158] sm:$0xff]
        %v1244 = vld [vmem:[#allocation2 + $0x160] sm:$0xff]
        %v1245 = vld [vmem:[#allocation2 + $0x168] sm:$0xff]
        %v1246 = vld [vmem:[#allocation2 + $0x170] sm:$0xff]
        %v1247 = vld [vmem:[#allocation2 + $0x178] sm:$0xff]
        %v1248 = vld [vmem:[#allocation2 + $0x180] sm:$0xff]
        %v1249 = vld [vmem:[#allocation2 + $0x188] sm:$0xff]
        %v1250 = vld [vmem:[#allocation2 + $0x190] sm:$0xff]
        %v1251 = vld [vmem:[#allocation2 + $0x198] sm:$0xff]
        %v1252 = vld [vmem:[#allocation2 + $0x1a0] sm:$0xff]
        %v1253 = vld [vmem:[#allocation2 + $0x1a8] sm:$0xff]
        %v1254 = vld [vmem:[#allocation2 + $0x1b0] sm:$0xff]
        %v1255 = vld [vmem:[#allocation2 + $0x1b8] sm:$0xff]
        %v1256 = vld [vmem:[#allocation2 + $0x1c0] sm:$0xff]
        %v1257 = vld [vmem:[#allocation2 + $0x1c8] sm:$0xff]
        %v1258 = vld [vmem:[#allocation2 + $0x1d0] sm:$0xff]
        %v1259 = vld [vmem:[#allocation2 + $0x1d8] sm:$0xff]
        %v1260 = vld [vmem:[#allocation2 + $0x1e0] sm:$0xff]
        %v1261 = vld [vmem:[#allocation2 + $0x1e8] sm:$0xff]
        %v1262 = vld [vmem:[#allocation2 + $0x1f0] sm:$0xff]
        %v1263 = vld [vmem:[#allocation2 + $0x1f8] sm:$0xff]
        %v1264 = vld [vmem:[#allocation2 + $0x200] sm:$0xff]
        %v1265 = vld [vmem:[#allocation2 + $0x208] sm:$0xff]
        %v1266 = vld [vmem:[#allocation2 + $0x210] sm:$0xff]
        %v1267 = vld [vmem:[#allocation2 + $0x218] sm:$0xff]
        %v1268 = vld [vmem:[#allocation2 + $0x220] sm:$0xff]
        %v1269 = vld [vmem:[#allocation2 + $0x228] sm:$0xff]
        %v1270 = vld [vmem:[#allocation2 + $0x230] sm:$0xff]
        %v1271 = vld [vmem:[#allocation2 + $0x238] sm:$0xff]
        %v1272 = vld [vmem:[#allocation2 + $0x240] sm:$0xff]
        %v1273 = vld [vmem:[#allocation2 + $0x248] sm:$0xff]
        %v1274 = vld [vmem:[#allocation2 + $0x250] sm:$0xff]
        %v1275 = vld [vmem:[#allocation2 + $0x258] sm:$0xff]
        %v1276 = vld [vmem:[#allocation2 + $0x260] sm:$0xff]
        %v1277 = vld [vmem:[#allocation2 + $0x268] sm:$0xff]
        %v1278 = vld [vmem:[#allocation2 + $0x270] sm:$0xff]
        %v1279 = vld [vmem:[#allocation2 + $0x278] sm:$0xff]
        %v1280 = vld [vmem:[#allocation2 + $0x280] sm:$0xff]
        %v1281 = vld [vmem:[#allocation2 + $0x288] sm:$0xff]
        %v1282 = vld [vmem:[#allocation2 + $0x290] sm:$0xff]
        %v1283 = vld [vmem:[#allocation2 + $0x298] sm:$0xff]
        %v1284 = vld [vmem:[#allocation2 + $0x2a0] sm:$0xff]
        %v1285 = vld [vmem:[#allocation2 + $0x2a8] sm:$0xff]
        %v1286 = vld [vmem:[#allocation2 + $0x2b0] sm:$0xff]
        %v1287 = vld [vmem:[#allocation2 + $0x2b8] sm:$0xff]
        %v1288 = vld [vmem:[#allocation2 + $0x2c0] sm:$0xff]
        %v1289 = vld [vmem:[#allocation2 + $0x2c8] sm:$0xff]
        %v1290 = vld [vmem:[#allocation2 + $0x2d0] sm:$0xff]
        %v1291 = vld [vmem:[#allocation2 + $0x2d8] sm:$0xff]
        %v1292 = vld [vmem:[#allocation2 + $0x2e0] sm:$0xff]
        %v1293 = vld [vmem:[#allocation2 + $0x2e8] sm:$0xff]
        %v1294 = vld [vmem:[#allocation2 + $0x2f0] sm:$0xff]
        %v1295 = vld [vmem:[#allocation2 + $0x2f8] sm:$0xff]
        %v1296 = vld [vmem:[#allocation2 + $0x300] sm:$0xff]
        %v1297 = vld [vmem:[#allocation2 + $0x308] sm:$0xff]
        %v1298 = vld [vmem:[#allocation2 + $0x310] sm:$0xff]
        %v1299 = vld [vmem:[#allocation2 + $0x318] sm:$0xff]
        %v1300 = vld [vmem:[#allocation2 + $0x320] sm:$0xff]
        %v1301 = vld [vmem:[#allocation2 + $0x328] sm:$0xff]
        %v1302 = vld [vmem:[#allocation2 + $0x330] sm:$0xff]
        %v1303 = vld [vmem:[#allocation2 + $0x338] sm:$0xff]
        %v1304 = vld [vmem:[#allocation2 + $0x340] sm:$0xff]
        %v1305 = vld [vmem:[#allocation2 + $0x348] sm:$0xff]
        %v1306 = vld [vmem:[#allocation2 + $0x350] sm:$0xff]
        %v1307 = vld [vmem:[#allocation2 + $0x358] sm:$0xff]
        %v1308 = vld [vmem:[#allocation2 + $0x360] sm:$0xff]
        %v1309 = vld [vmem:[#allocation2 + $0x368] sm:$0xff]
        %v1310 = vld [vmem:[#allocation2 + $0x370] sm:$0xff]
        %v1311 = vld [vmem:[#allocation2 + $0x378] sm:$0xff]
        %v1312 = vld [vmem:[#allocation2 + $0x380] sm:$0xff]
        %v1313 = vld [vmem:[#allocation2 + $0x388] sm:$0xff]
        %v1314 = vld [vmem:[#allocation2 + $0x390] sm:$0xff]
        %v1315 = vld [vmem:[#allocation2 + $0x398] sm:$0xff]
        %v1316 = vld [vmem:[#allocation2 + $0x3a0] sm:$0xff]
        %v1317 = vld [vmem:[#allocation2 + $0x3a8] sm:$0xff]
        %v1318 = vld [vmem:[#allocation2 + $0x3b0] sm:$0xff]
        %v1319 = vld [vmem:[#allocation2 + $0x3b8] sm:$0xff]
        %v1320 = vld [vmem:[#allocation2 + $0x3c0] sm:$0xff]
        %v1321 = vld [vmem:[#allocation2 + $0x3c8] sm:$0xff]
        %v1322 = vld [vmem:[#allocation2 + $0x3d0] sm:$0xff]
        %v1323 = vld [vmem:[#allocation2 + $0x3d8] sm:$0xff]
        %v1324 = vld [vmem:[#allocation2 + $0x3e0] sm:$0xff]
        %v1325 = vld [vmem:[#allocation2 + $0x3e8] sm:$0xff]
        %v1326 = vld [vmem:[#allocation2 + $0x3f0] sm:$0xff]
        %v1327 = vld [vmem:[#allocation2 + $0x3f8] sm:$0xff]
        %v1328 = vld [vmem:[%s6] sm:$0xff]
        %v1330 = vlaneseq
        %v1331 = vshrl.u32 %v1330, 7
        %v1332 = vsub.s32 0, %v1331
        %v1333 = vrot.slane %v1328, %v1332
        %v1334 = vlaneseq
        %v1335 = vshrl.u32 %v1334, 7
        %v1336 = vsub.s32 1, %v1335
        %v1337 = vrot.slane %v1328, %v1336
        %v1338 = vlaneseq
        %v1339 = vshrl.u32 %v1338, 7
        %v1340 = vsub.s32 2, %v1339
        %v1341 = vrot.slane %v1328, %v1340
        %v1342 = vlaneseq
        %v1343 = vshrl.u32 %v1342, 7
        %v1344 = vsub.s32 3, %v1343
        %v1345 = vrot.slane %v1328, %v1344
        %v1346 = vlaneseq
        %v1347 = vshrl.u32 %v1346, 7
        %v1348 = vsub.s32 4, %v1347
        %v1349 = vrot.slane %v1328, %v1348
        %v1350 = vlaneseq
        %v1351 = vshrl.u32 %v1350, 7
        %v1352 = vsub.s32 5, %v1351
        %v1353 = vrot.slane %v1328, %v1352
        %v1354 = vlaneseq
        %v1355 = vshrl.u32 %v1354, 7
        %v1356 = vsub.s32 6, %v1355
        %v1357 = vrot.slane %v1328, %v1356
        %v1358 = vlaneseq
        %v1359 = vshrl.u32 %v1358, 7
        %v1360 = vsub.s32 7, %v1359
        %v1361 = vrot.slane %v1328, %v1360
        %v1498 = vunpack.c.l.b16 %v1200
        %v1499 = vunpack.c.h.b16 %v1200
        %v1500 = vunpack.c.l.b16 %v1201
        %v1501 = vunpack.c.h.b16 %v1201
        %v1502 = vunpack.c.l.b16 %v1202
        %v1503 = vunpack.c.h.b16 %v1202
        %v1504 = vunpack.c.l.b16 %v1203
        %v1505 = vunpack.c.h.b16 %v1203
        %v1506 = vunpack.c.l.b16 %v1204
        %v1507 = vunpack.c.h.b16 %v1204
        %v1508 = vunpack.c.l.b16 %v1205
        %v1509 = vunpack.c.h.b16 %v1205
        %v1510 = vunpack.c.l.b16 %v1206
        %v1511 = vunpack.c.h.b16 %v1206
        %v1512 = vunpack.c.l.b16 %v1207
        %v1513 = vunpack.c.h.b16 %v1207
        %v1514 = vunpack.c.l.b16 %v1208
        %v1515 = vunpack.c.h.b16 %v1208
        %v1516 = vunpack.c.l.b16 %v1209
        %v1517 = vunpack.c.h.b16 %v1209
        %v1518 = vunpack.c.l.b16 %v1210
        %v1519 = vunpack.c.h.b16 %v1210
        %v1520 = vunpack.c.l.b16 %v1211
        %v1521 = vunpack.c.h.b16 %v1211
        %v1522 = vunpack.c.l.b16 %v1212
        %v1523 = vunpack.c.h.b16 %v1212
        %v1524 = vunpack.c.l.b16 %v1213
        %v1525 = vunpack.c.h.b16 %v1213
        %v1526 = vunpack.c.l.b16 %v1214
        %v1527 = vunpack.c.h.b16 %v1214
        %v1528 = vunpack.c.l.b16 %v1215
        %v1529 = vunpack.c.h.b16 %v1215
        %v1530 = vunpack.c.l.b16 %v1216
        %v1531 = vunpack.c.h.b16 %v1216
        %v1532 = vunpack.c.l.b16 %v1217
        %v1533 = vunpack.c.h.b16 %v1217
        %v1534 = vunpack.c.l.b16 %v1218
        %v1535 = vunpack.c.h.b16 %v1218
        %v1536 = vunpack.c.l.b16 %v1219
        %v1537 = vunpack.c.h.b16 %v1219
        %v1538 = vunpack.c.l.b16 %v1220
        %v1539 = vunpack.c.h.b16 %v1220
        %v1540 = vunpack.c.l.b16 %v1221
        %v1541 = vunpack.c.h.b16 %v1221
        %v1542 = vunpack.c.l.b16 %v1222
        %v1543 = vunpack.c.h.b16 %v1222
        %v1544 = vunpack.c.l.b16 %v1223
        %v1545 = vunpack.c.h.b16 %v1223
        %v1546 = vunpack.c.l.b16 %v1224
        %v1547 = vunpack.c.h.b16 %v1224
        %v1548 = vunpack.c.l.b16 %v1225
        %v1549 = vunpack.c.h.b16 %v1225
        %v1550 = vunpack.c.l.b16 %v1226
        %v1551 = vunpack.c.h.b16 %v1226
        %v1552 = vunpack.c.l.b16 %v1227
        %v1553 = vunpack.c.h.b16 %v1227
        %v1554 = vunpack.c.l.b16 %v1228
        %v1555 = vunpack.c.h.b16 %v1228
        %v1556 = vunpack.c.l.b16 %v1229
        %v1557 = vunpack.c.h.b16 %v1229
        %v1558 = vunpack.c.l.b16 %v1230
        %v1559 = vunpack.c.h.b16 %v1230
        %v1560 = vunpack.c.l.b16 %v1231
        %v1561 = vunpack.c.h.b16 %v1231
        %v1562 = vunpack.c.l.b16 %v1232
        %v1563 = vunpack.c.h.b16 %v1232
        %v1564 = vunpack.c.l.b16 %v1233
        %v1565 = vunpack.c.h.b16 %v1233
        %v1566 = vunpack.c.l.b16 %v1234
        %v1567 = vunpack.c.h.b16 %v1234
        %v1568 = vunpack.c.l.b16 %v1235
        %v1569 = vunpack.c.h.b16 %v1235
        %v1570 = vunpack.c.l.b16 %v1236
        %v1571 = vunpack.c.h.b16 %v1236
        %v1572 = vunpack.c.l.b16 %v1237
        %v1573 = vunpack.c.h.b16 %v1237
        %v1574 = vunpack.c.l.b16 %v1238
        %v1575 = vunpack.c.h.b16 %v1238
        %v1576 = vunpack.c.l.b16 %v1239
        %v1577 = vunpack.c.h.b16 %v1239
        %v1578 = vunpack.c.l.b16 %v1240
        %v1579 = vunpack.c.h.b16 %v1240
        %v1580 = vunpack.c.l.b16 %v1241
        %v1581 = vunpack.c.h.b16 %v1241
        %v1582 = vunpack.c.l.b16 %v1242
        %v1583 = vunpack.c.h.b16 %v1242
        %v1584 = vunpack.c.l.b16 %v1243
        %v1585 = vunpack.c.h.b16 %v1243
        %v1586 = vunpack.c.l.b16 %v1244
        %v1587 = vunpack.c.h.b16 %v1244
        %v1588 = vunpack.c.l.b16 %v1245
        %v1589 = vunpack.c.h.b16 %v1245
        %v1590 = vunpack.c.l.b16 %v1246
        %v1591 = vunpack.c.h.b16 %v1246
        %v1592 = vunpack.c.l.b16 %v1247
        %v1593 = vunpack.c.h.b16 %v1247
        %v1594 = vunpack.c.l.b16 %v1248
        %v1595 = vunpack.c.h.b16 %v1248
        %v1596 = vunpack.c.l.b16 %v1249
        %v1597 = vunpack.c.h.b16 %v1249
        %v1598 = vunpack.c.l.b16 %v1250
        %v1599 = vunpack.c.h.b16 %v1250
        %v1600 = vunpack.c.l.b16 %v1251
        %v1601 = vunpack.c.h.b16 %v1251
        %v1602 = vunpack.c.l.b16 %v1252
        %v1603 = vunpack.c.h.b16 %v1252
        %v1604 = vunpack.c.l.b16 %v1253
        %v1605 = vunpack.c.h.b16 %v1253
        %v1606 = vunpack.c.l.b16 %v1254
        %v1607 = vunpack.c.h.b16 %v1254
        %v1608 = vunpack.c.l.b16 %v1255
        %v1609 = vunpack.c.h.b16 %v1255
        %v1610 = vunpack.c.l.b16 %v1256
        %v1611 = vunpack.c.h.b16 %v1256
        %v1612 = vunpack.c.l.b16 %v1257
        %v1613 = vunpack.c.h.b16 %v1257
        %v1614 = vunpack.c.l.b16 %v1258
        %v1615 = vunpack.c.h.b16 %v1258
        %v1616 = vunpack.c.l.b16 %v1259
        %v1617 = vunpack.c.h.b16 %v1259
        %v1618 = vunpack.c.l.b16 %v1260
        %v1619 = vunpack.c.h.b16 %v1260
        %v1620 = vunpack.c.l.b16 %v1261
        %v1621 = vunpack.c.h.b16 %v1261
        %v1622 = vunpack.c.l.b16 %v1262
        %v1623 = vunpack.c.h.b16 %v1262
        %v1624 = vunpack.c.l.b16 %v1263
        %v1625 = vunpack.c.h.b16 %v1263
        %v1626 = vunpack.c.l.b16 %v1264
        %v1627 = vunpack.c.h.b16 %v1264
        %v1628 = vunpack.c.l.b16 %v1265
        %v1629 = vunpack.c.h.b16 %v1265
        %v1630 = vunpack.c.l.b16 %v1266
        %v1631 = vunpack.c.h.b16 %v1266
        %v1632 = vunpack.c.l.b16 %v1267
        %v1633 = vunpack.c.h.b16 %v1267
        %v1634 = vunpack.c.l.b16 %v1268
        %v1635 = vunpack.c.h.b16 %v1268
        %v1636 = vunpack.c.l.b16 %v1269
        %v1637 = vunpack.c.h.b16 %v1269
        %v1638 = vunpack.c.l.b16 %v1270
        %v1639 = vunpack.c.h.b16 %v1270
        %v1640 = vunpack.c.l.b16 %v1271
        %v1641 = vunpack.c.h.b16 %v1271
        %v1642 = vunpack.c.l.b16 %v1272
        %v1643 = vunpack.c.h.b16 %v1272
        %v1644 = vunpack.c.l.b16 %v1273
        %v1645 = vunpack.c.h.b16 %v1273
        %v1646 = vunpack.c.l.b16 %v1274
        %v1647 = vunpack.c.h.b16 %v1274
        %v1648 = vunpack.c.l.b16 %v1275
        %v1649 = vunpack.c.h.b16 %v1275
        %v1650 = vunpack.c.l.b16 %v1276
        %v1651 = vunpack.c.h.b16 %v1276
        %v1652 = vunpack.c.l.b16 %v1277
        %v1653 = vunpack.c.h.b16 %v1277
        %v1654 = vunpack.c.l.b16 %v1278
        %v1655 = vunpack.c.h.b16 %v1278
        %v1656 = vunpack.c.l.b16 %v1279
        %v1657 = vunpack.c.h.b16 %v1279
        %v1658 = vunpack.c.l.b16 %v1280
        %v1659 = vunpack.c.h.b16 %v1280
        %v1660 = vunpack.c.l.b16 %v1281
        %v1661 = vunpack.c.h.b16 %v1281
        %v1662 = vunpack.c.l.b16 %v1282
        %v1663 = vunpack.c.h.b16 %v1282
        %v1664 = vunpack.c.l.b16 %v1283
        %v1665 = vunpack.c.h.b16 %v1283
        %v1666 = vunpack.c.l.b16 %v1284
        %v1667 = vunpack.c.h.b16 %v1284
        %v1668 = vunpack.c.l.b16 %v1285
        %v1669 = vunpack.c.h.b16 %v1285
        %v1670 = vunpack.c.l.b16 %v1286
        %v1671 = vunpack.c.h.b16 %v1286
        %v1672 = vunpack.c.l.b16 %v1287
        %v1673 = vunpack.c.h.b16 %v1287
        %v1674 = vunpack.c.l.b16 %v1288
        %v1675 = vunpack.c.h.b16 %v1288
        %v1676 = vunpack.c.l.b16 %v1289
        %v1677 = vunpack.c.h.b16 %v1289
        %v1678 = vunpack.c.l.b16 %v1290
        %v1679 = vunpack.c.h.b16 %v1290
        %v1680 = vunpack.c.l.b16 %v1291
        %v1681 = vunpack.c.h.b16 %v1291
        %v1682 = vunpack.c.l.b16 %v1292
        %v1683 = vunpack.c.h.b16 %v1292
        %v1684 = vunpack.c.l.b16 %v1293
        %v1685 = vunpack.c.h.b16 %v1293
        %v1686 = vunpack.c.l.b16 %v1294
        %v1687 = vunpack.c.h.b16 %v1294
        %v1688 = vunpack.c.l.b16 %v1295
        %v1689 = vunpack.c.h.b16 %v1295
        %v1690 = vunpack.c.l.b16 %v1296
        %v1691 = vunpack.c.h.b16 %v1296
        %v1692 = vunpack.c.l.b16 %v1297
        %v1693 = vunpack.c.h.b16 %v1297
        %v1694 = vunpack.c.l.b16 %v1298
        %v1695 = vunpack.c.h.b16 %v1298
        %v1696 = vunpack.c.l.b16 %v1299
        %v1697 = vunpack.c.h.b16 %v1299
        %v1698 = vunpack.c.l.b16 %v1300
        %v1699 = vunpack.c.h.b16 %v1300
        %v1700 = vunpack.c.l.b16 %v1301
        %v1701 = vunpack.c.h.b16 %v1301
        %v1702 = vunpack.c.l.b16 %v1302
        %v1703 = vunpack.c.h.b16 %v1302
        %v1704 = vunpack.c.l.b16 %v1303
        %v1705 = vunpack.c.h.b16 %v1303
        %v1706 = vunpack.c.l.b16 %v1304
        %v1707 = vunpack.c.h.b16 %v1304
        %v1708 = vunpack.c.l.b16 %v1305
        %v1709 = vunpack.c.h.b16 %v1305
        %v1710 = vunpack.c.l.b16 %v1306
        %v1711 = vunpack.c.h.b16 %v1306
        %v1712 = vunpack.c.l.b16 %v1307
        %v1713 = vunpack.c.h.b16 %v1307
        %v1714 = vunpack.c.l.b16 %v1308
        %v1715 = vunpack.c.h.b16 %v1308
        %v1716 = vunpack.c.l.b16 %v1309
        %v1717 = vunpack.c.h.b16 %v1309
        %v1718 = vunpack.c.l.b16 %v1310
        %v1719 = vunpack.c.h.b16 %v1310
        %v1720 = vunpack.c.l.b16 %v1311
        %v1721 = vunpack.c.h.b16 %v1311
        %v1722 = vunpack.c.l.b16 %v1312
        %v1723 = vunpack.c.h.b16 %v1312
        %v1724 = vunpack.c.l.b16 %v1313
        %v1725 = vunpack.c.h.b16 %v1313
        %v1726 = vunpack.c.l.b16 %v1314
        %v1727 = vunpack.c.h.b16 %v1314
        %v1728 = vunpack.c.l.b16 %v1315
        %v1729 = vunpack.c.h.b16 %v1315
        %v1730 = vunpack.c.l.b16 %v1316
        %v1731 = vunpack.c.h.b16 %v1316
        %v1732 = vunpack.c.l.b16 %v1317
        %v1733 = vunpack.c.h.b16 %v1317
        %v1734 = vunpack.c.l.b16 %v1318
        %v1735 = vunpack.c.h.b16 %v1318
        %v1736 = vunpack.c.l.b16 %v1319
        %v1737 = vunpack.c.h.b16 %v1319
        %v1738 = vunpack.c.l.b16 %v1320
        %v1739 = vunpack.c.h.b16 %v1320
        %v1740 = vunpack.c.l.b16 %v1321
        %v1741 = vunpack.c.h.b16 %v1321
        %v1742 = vunpack.c.l.b16 %v1322
        %v1743 = vunpack.c.h.b16 %v1322
        %v1744 = vunpack.c.l.b16 %v1323
        %v1745 = vunpack.c.h.b16 %v1323
        %v1746 = vunpack.c.l.b16 %v1324
        %v1747 = vunpack.c.h.b16 %v1324
        %v1748 = vunpack.c.l.b16 %v1325
        %v1749 = vunpack.c.h.b16 %v1325
        %v1750 = vunpack.c.l.b16 %v1326
        %v1751 = vunpack.c.h.b16 %v1326
        %v1752 = vunpack.c.l.b16 %v1327
        %v1753 = vunpack.c.h.b16 %v1327
        %v1754 = vpack.c.b16 %v1506, %v1498
        %v1755 = vpack.c.b16 %v1507, %v1499
        %v1756 = vpack.c.b16 %v1508, %v1500
        %v1757 = vpack.c.b16 %v1509, %v1501
        %v1758 = vpack.c.b16 %v1510, %v1502
        %v1759 = vpack.c.b16 %v1511, %v1503
        %v1760 = vpack.c.b16 %v1512, %v1504
        %v1761 = vpack.c.b16 %v1513, %v1505
        %v1762 = vpack.c.b16 %v1522, %v1514
        %v1763 = vpack.c.b16 %v1523, %v1515
        %v1764 = vpack.c.b16 %v1524, %v1516
        %v1765 = vpack.c.b16 %v1525, %v1517
        %v1766 = vpack.c.b16 %v1526, %v1518
        %v1767 = vpack.c.b16 %v1527, %v1519
        %v1768 = vpack.c.b16 %v1528, %v1520
        %v1769 = vpack.c.b16 %v1529, %v1521
        %v1770 = vpack.c.b16 %v1538, %v1530
        %v1771 = vpack.c.b16 %v1539, %v1531
        %v1772 = vpack.c.b16 %v1540, %v1532
        %v1773 = vpack.c.b16 %v1541, %v1533
        %v1774 = vpack.c.b16 %v1542, %v1534
        %v1775 = vpack.c.b16 %v1543, %v1535
        %v1776 = vpack.c.b16 %v1544, %v1536
        %v1777 = vpack.c.b16 %v1545, %v1537
        %v1778 = vpack.c.b16 %v1554, %v1546
        %v1779 = vpack.c.b16 %v1555, %v1547
        %v1780 = vpack.c.b16 %v1556, %v1548
        %v1781 = vpack.c.b16 %v1557, %v1549
        %v1782 = vpack.c.b16 %v1558, %v1550
        %v1783 = vpack.c.b16 %v1559, %v1551
        %v1784 = vpack.c.b16 %v1560, %v1552
        %v1785 = vpack.c.b16 %v1561, %v1553
        %v1786 = vpack.c.b16 %v1570, %v1562
        %v1787 = vpack.c.b16 %v1571, %v1563
        %v1788 = vpack.c.b16 %v1572, %v1564
        %v1789 = vpack.c.b16 %v1573, %v1565
        %v1790 = vpack.c.b16 %v1574, %v1566
        %v1791 = vpack.c.b16 %v1575, %v1567
        %v1792 = vpack.c.b16 %v1576, %v1568
        %v1793 = vpack.c.b16 %v1577, %v1569
        %v1794 = vpack.c.b16 %v1586, %v1578
        %v1795 = vpack.c.b16 %v1587, %v1579
        %v1796 = vpack.c.b16 %v1588, %v1580
        %v1797 = vpack.c.b16 %v1589, %v1581
        %v1798 = vpack.c.b16 %v1590, %v1582
        %v1799 = vpack.c.b16 %v1591, %v1583
        %v1800 = vpack.c.b16 %v1592, %v1584
        %v1801 = vpack.c.b16 %v1593, %v1585
        %v1802 = vpack.c.b16 %v1602, %v1594
        %v1803 = vpack.c.b16 %v1603, %v1595
        %v1804 = vpack.c.b16 %v1604, %v1596
        %v1805 = vpack.c.b16 %v1605, %v1597
        %v1806 = vpack.c.b16 %v1606, %v1598
        %v1807 = vpack.c.b16 %v1607, %v1599
        %v1808 = vpack.c.b16 %v1608, %v1600
        %v1809 = vpack.c.b16 %v1609, %v1601
        %v1810 = vpack.c.b16 %v1618, %v1610
        %v1811 = vpack.c.b16 %v1619, %v1611
        %v1812 = vpack.c.b16 %v1620, %v1612
        %v1813 = vpack.c.b16 %v1621, %v1613
        %v1814 = vpack.c.b16 %v1622, %v1614
        %v1815 = vpack.c.b16 %v1623, %v1615
        %v1816 = vpack.c.b16 %v1624, %v1616
        %v1817 = vpack.c.b16 %v1625, %v1617
        %v1818 = vpack.c.b16 %v1634, %v1626
        %v1819 = vpack.c.b16 %v1635, %v1627
        %v1820 = vpack.c.b16 %v1636, %v1628
        %v1821 = vpack.c.b16 %v1637, %v1629
        %v1822 = vpack.c.b16 %v1638, %v1630
        %v1823 = vpack.c.b16 %v1639, %v1631
        %v1824 = vpack.c.b16 %v1640, %v1632
        %v1825 = vpack.c.b16 %v1641, %v1633
        %v1826 = vpack.c.b16 %v1650, %v1642
        %v1827 = vpack.c.b16 %v1651, %v1643
        %v1828 = vpack.c.b16 %v1652, %v1644
        %v1829 = vpack.c.b16 %v1653, %v1645
        %v1830 = vpack.c.b16 %v1654, %v1646
        %v1831 = vpack.c.b16 %v1655, %v1647
        %v1832 = vpack.c.b16 %v1656, %v1648
        %v1833 = vpack.c.b16 %v1657, %v1649
        %v1834 = vpack.c.b16 %v1666, %v1658
        %v1835 = vpack.c.b16 %v1667, %v1659
        %v1836 = vpack.c.b16 %v1668, %v1660
        %v1837 = vpack.c.b16 %v1669, %v1661
        %v1838 = vpack.c.b16 %v1670, %v1662
        %v1839 = vpack.c.b16 %v1671, %v1663
        %v1840 = vpack.c.b16 %v1672, %v1664
        %v1841 = vpack.c.b16 %v1673, %v1665
        %v1842 = vpack.c.b16 %v1682, %v1674
        %v1843 = vpack.c.b16 %v1683, %v1675
        %v1844 = vpack.c.b16 %v1684, %v1676
        %v1845 = vpack.c.b16 %v1685, %v1677
        %v1846 = vpack.c.b16 %v1686, %v1678
        %v1847 = vpack.c.b16 %v1687, %v1679
        %v1848 = vpack.c.b16 %v1688, %v1680
        %v1849 = vpack.c.b16 %v1689, %v1681
        %v1850 = vpack.c.b16 %v1698, %v1690
        %v1851 = vpack.c.b16 %v1699, %v1691
        %v1852 = vpack.c.b16 %v1700, %v1692
        %v1853 = vpack.c.b16 %v1701, %v1693
        %v1854 = vpack.c.b16 %v1702, %v1694
        %v1855 = vpack.c.b16 %v1703, %v1695
        %v1856 = vpack.c.b16 %v1704, %v1696
        %v1857 = vpack.c.b16 %v1705, %v1697
        %v1858 = vpack.c.b16 %v1714, %v1706
        %v1859 = vpack.c.b16 %v1715, %v1707
        %v1860 = vpack.c.b16 %v1716, %v1708
        %v1861 = vpack.c.b16 %v1717, %v1709
        %v1862 = vpack.c.b16 %v1718, %v1710
        %v1863 = vpack.c.b16 %v1719, %v1711
        %v1864 = vpack.c.b16 %v1720, %v1712
        %v1865 = vpack.c.b16 %v1721, %v1713
        %v1866 = vpack.c.b16 %v1730, %v1722
        %v1867 = vpack.c.b16 %v1731, %v1723
        %v1868 = vpack.c.b16 %v1732, %v1724
        %v1869 = vpack.c.b16 %v1733, %v1725
        %v1870 = vpack.c.b16 %v1734, %v1726
        %v1871 = vpack.c.b16 %v1735, %v1727
        %v1872 = vpack.c.b16 %v1736, %v1728
        %v1873 = vpack.c.b16 %v1737, %v1729
        %v1874 = vpack.c.b16 %v1746, %v1738
        %v1875 = vpack.c.b16 %v1747, %v1739
        %v1876 = vpack.c.b16 %v1748, %v1740
        %v1877 = vpack.c.b16 %v1749, %v1741
        %v1878 = vpack.c.b16 %v1750, %v1742
        %v1879 = vpack.c.b16 %v1751, %v1743
        %v1880 = vpack.c.b16 %v1752, %v1744
        %v1881 = vpack.c.b16 %v1753, %v1745
        %2010 = vmatprep.subr.bf16.mxu0 %v1811
        %2011 = vmatpush1.bf16.msra.mxu0 %v1810
        %2012 = vmatprep.subr.bf16.mxu0 %v1803
        %2013 = vmatpush1.bf16.msra.mxu0 %v1802
        %2014 = vmatprep.subr.bf16.mxu0 %v1795
        %2015 = vmatpush1.bf16.msra.mxu0 %v1794
        %2016 = vmatprep.subr.bf16.mxu0 %v1787
        %2017 = vmatpush1.bf16.msra.mxu0 %v1786
        %2018 = vmatprep.subr.bf16.mxu0 %v1779
        %2019 = vmatpush1.bf16.msra.mxu0 %v1778
        %2020 = vmatprep.subr.bf16.mxu0 %v1771
        %2021 = vmatpush1.bf16.msra.mxu0 %v1770
        %2022 = vmatprep.subr.bf16.mxu0 %v1763
        %2023 = vmatpush1.bf16.msra.mxu0 %v1762
        %2024 = vmatprep.subr.bf16.mxu0 %v1755
        %2025 = vmatpush1.bf16.msra.mxu0 %v1754
        %2026 = vmatprep.subr.bf16.mxu0 %v1875
        %2027 = vmatpush2.bf16.msra.mxu0 %v1874
        %2028 = vmatprep.subr.bf16.mxu0 %v1867
        %2029 = vmatpush2.bf16.msra.mxu0 %v1866
        %2030 = vmatprep.subr.bf16.mxu0 %v1859
        %2031 = vmatpush2.bf16.msra.mxu0 %v1858
        %2032 = vmatprep.subr.bf16.mxu0 %v1851
        %2033 = vmatpush2.bf16.msra.mxu0 %v1850
        %2034 = vmatprep.subr.bf16.mxu0 %v1843
        %2035 = vmatpush2.bf16.msra.mxu0 %v1842
        %2036 = vmatprep.subr.bf16.mxu0 %v1835
        %2037 = vmatpush2.bf16.msra.mxu0 %v1834
        %2038 = vmatprep.subr.bf16.mxu0 %v1827
        %2039 = vmatpush2.bf16.msra.mxu0 %v1826
        %2040 = vmatprep.subr.bf16.mxu0 %v1819
        %2041 = vmatpush2.bf16.msra.mxu0 %v1818
        %2042 = vmatprep.mubr.bf16.mxu0 %v1169
        %2043 = vmatmul.mubr.bf16.gmra.mxu0 %v1168
        %v2044 = vpop.f32.mrf.mxu0
        %v2045 = vadd.f32 %v1333, %v2044
        %v2046 = vpop.f32.mrf.mxu0
        %v2047 = vadd.f32 %v1337, %v2046
        %v2048 = vpop.f32.mrf.mxu0
        %v2049 = vadd.f32 %v1333, %v2048
        %v2050 = vpop.f32.mrf.mxu0
        %v2051 = vadd.f32 %v1337, %v2050
        %2052 = vmatprep.mubr.bf16.mxu0 %v1171
        %2053 = vmatmul.mubr.bf16.gmra.mxu0 %v1170
        %v2054 = vpop.f32.mrf.mxu0
        %v2055 = vadd.f32 %v1333, %v2054
        %v2056 = vpop.f32.mrf.mxu0
        %v2057 = vadd.f32 %v1337, %v2056
        %v2058 = vpop.f32.mrf.mxu0
        %v2059 = vadd.f32 %v1333, %v2058
        %v2060 = vpop.f32.mrf.mxu0
        %v2061 = vadd.f32 %v1337, %v2060
        %2062 = vmatprep.mubr.bf16.mxu0 %v1173
        %2063 = vmatmul.mubr.bf16.gmra.mxu0 %v1172
        %v2064 = vpop.f32.mrf.mxu0
        %v2065 = vadd.f32 %v1333, %v2064
        %v2066 = vpop.f32.mrf.mxu0
        %v2067 = vadd.f32 %v1337, %v2066
        %v2068 = vpop.f32.mrf.mxu0
        %v2069 = vadd.f32 %v1333, %v2068
        %v2070 = vpop.f32.mrf.mxu0
        %v2071 = vadd.f32 %v1337, %v2070
        %2072 = vmatprep.mubr.bf16.mxu0 %v1175
        %2073 = vmatmul.mubr.bf16.gmra.mxu0 %v1174
        %v2074 = vpop.f32.mrf.mxu0
        %v2075 = vadd.f32 %v1333, %v2074
        %v2076 = vpop.f32.mrf.mxu0
        %v2077 = vadd.f32 %v1337, %v2076
        %v2078 = vpop.f32.mrf.mxu0
        %v2079 = vadd.f32 %v1333, %v2078
        %v2080 = vpop.f32.mrf.mxu0
        %v2081 = vadd.f32 %v1337, %v2080
        %2082 = vmatprep.mubr.bf16.mxu0 %v1177
        %2083 = vmatmul.mubr.bf16.gmra.mxu0 %v1176
        %v2084 = vpop.f32.mrf.mxu0
        %v2085 = vadd.f32 %v1333, %v2084
        %v2086 = vpop.f32.mrf.mxu0
        %v2087 = vadd.f32 %v1337, %v2086
        %v2088 = vpop.f32.mrf.mxu0
        %v2089 = vadd.f32 %v1333, %v2088
        %v2090 = vpop.f32.mrf.mxu0
        %v2091 = vadd.f32 %v1337, %v2090
        %2092 = vmatprep.mubr.bf16.mxu0 %v1179
        %2093 = vmatmul.mubr.bf16.gmra.mxu0 %v1178
        %v2094 = vpop.f32.mrf.mxu0
        %v2095 = vadd.f32 %v1333, %v2094
        %v2096 = vpop.f32.mrf.mxu0
        %v2097 = vadd.f32 %v1337, %v2096
        %v2098 = vpop.f32.mrf.mxu0
        %v2099 = vadd.f32 %v1333, %v2098
        %v2100 = vpop.f32.mrf.mxu0
        %v2101 = vadd.f32 %v1337, %v2100
        %2102 = vmatprep.mubr.bf16.mxu0 %v1181
        %2103 = vmatmul.mubr.bf16.gmra.mxu0 %v1180
        %v2104 = vpop.f32.mrf.mxu0
        %v2105 = vadd.f32 %v1333, %v2104
        %v2106 = vpop.f32.mrf.mxu0
        %v2107 = vadd.f32 %v1337, %v2106
        %v2108 = vpop.f32.mrf.mxu0
        %v2109 = vadd.f32 %v1333, %v2108
        %v2110 = vpop.f32.mrf.mxu0
        %v2111 = vadd.f32 %v1337, %v2110
        %2112 = vmatprep.mubr.bf16.mxu0 %v1183
        %2113 = vmatmul.mubr.bf16.gmra.mxu0 %v1182
        %v2114 = vpop.f32.mrf.mxu0
        %v2115 = vadd.f32 %v1333, %v2114
        %v2116 = vpop.f32.mrf.mxu0
        %v2117 = vadd.f32 %v1337, %v2116
        %v2118 = vpop.f32.mrf.mxu0
        %v2119 = vadd.f32 %v1333, %v2118
        %v2120 = vpop.f32.mrf.mxu0
        %v2121 = vadd.f32 %v1337, %v2120
        %2122 = vmatprep.mubr.bf16.mxu0 %v1185
        %2123 = vmatmul.mubr.bf16.gmra.mxu0 %v1184
        %v2124 = vpop.f32.mrf.mxu0
        %v2125 = vadd.f32 %v1333, %v2124
        %v2126 = vpop.f32.mrf.mxu0
        %v2127 = vadd.f32 %v1337, %v2126
        %v2128 = vpop.f32.mrf.mxu0
        %v2129 = vadd.f32 %v1333, %v2128
        %v2130 = vpop.f32.mrf.mxu0
        %v2131 = vadd.f32 %v1337, %v2130
        %2132 = vmatprep.mubr.bf16.mxu0 %v1187
        %2133 = vmatmul.mubr.bf16.gmra.mxu0 %v1186
        %v2134 = vpop.f32.mrf.mxu0
        %v2135 = vadd.f32 %v1333, %v2134
        %v2136 = vpop.f32.mrf.mxu0
        %v2137 = vadd.f32 %v1337, %v2136
        %v2138 = vpop.f32.mrf.mxu0
        %v2139 = vadd.f32 %v1333, %v2138
        %v2140 = vpop.f32.mrf.mxu0
        %v2141 = vadd.f32 %v1337, %v2140
        %2142 = vmatprep.mubr.bf16.mxu0 %v1189
        %2143 = vmatmul.mubr.bf16.gmra.mxu0 %v1188
        %v2144 = vpop.f32.mrf.mxu0
        %v2145 = vadd.f32 %v1333, %v2144
        %v2146 = vpop.f32.mrf.mxu0
        %v2147 = vadd.f32 %v1337, %v2146
        %v2148 = vpop.f32.mrf.mxu0
        %v2149 = vadd.f32 %v1333, %v2148
        %v2150 = vpop.f32.mrf.mxu0
        %v2151 = vadd.f32 %v1337, %v2150
        %2152 = vmatprep.mubr.bf16.mxu0 %v1191
        %2153 = vmatmul.mubr.bf16.gmra.mxu0 %v1190
        %v2154 = vpop.f32.mrf.mxu0
        %v2155 = vadd.f32 %v1333, %v2154
        %v2156 = vpop.f32.mrf.mxu0
        %v2157 = vadd.f32 %v1337, %v2156
        %v2158 = vpop.f32.mrf.mxu0
        %v2159 = vadd.f32 %v1333, %v2158
        %v2160 = vpop.f32.mrf.mxu0
        %v2161 = vadd.f32 %v1337, %v2160
        %2162 = vmatprep.mubr.bf16.mxu0 %v1193
        %2163 = vmatmul.mubr.bf16.gmra.mxu0 %v1192
        %v2164 = vpop.f32.mrf.mxu0
        %v2165 = vadd.f32 %v1333, %v2164
        %v2166 = vpop.f32.mrf.mxu0
        %v2167 = vadd.f32 %v1337, %v2166
        %v2168 = vpop.f32.mrf.mxu0
        %v2169 = vadd.f32 %v1333, %v2168
        %v2170 = vpop.f32.mrf.mxu0
        %v2171 = vadd.f32 %v1337, %v2170
        %2172 = vmatprep.mubr.bf16.mxu0 %v1195
        %2173 = vmatmul.mubr.bf16.gmra.mxu0 %v1194
        %v2174 = vpop.f32.mrf.mxu0
        %v2175 = vadd.f32 %v1333, %v2174
        %v2176 = vpop.f32.mrf.mxu0
        %v2177 = vadd.f32 %v1337, %v2176
        %v2178 = vpop.f32.mrf.mxu0
        %v2179 = vadd.f32 %v1333, %v2178
        %v2180 = vpop.f32.mrf.mxu0
        %v2181 = vadd.f32 %v1337, %v2180
        %2182 = vmatprep.mubr.bf16.mxu0 %v1197
        %2183 = vmatmul.mubr.bf16.gmra.mxu0 %v1196
        %v2184 = vpop.f32.mrf.mxu0
        %v2185 = vadd.f32 %v1333, %v2184
        %v2186 = vpop.f32.mrf.mxu0
        %v2187 = vadd.f32 %v1337, %v2186
        %v2188 = vpop.f32.mrf.mxu0
        %v2189 = vadd.f32 %v1333, %v2188
        %v2190 = vpop.f32.mrf.mxu0
        %v2191 = vadd.f32 %v1337, %v2190
        %2192 = vmatprep.mubr.bf16.mxu0 %v1199
        %2193 = vmatmul.mubr.bf16.gmra.mxu0 %v1198
        %v2194 = vpop.f32.mrf.mxu0
        %v2195 = vadd.f32 %v1333, %v2194
        %v2196 = vpop.f32.mrf.mxu0
        %v2197 = vadd.f32 %v1337, %v2196
        %v2198 = vpop.f32.mrf.mxu0
        %v2199 = vadd.f32 %v1333, %v2198
        %v2200 = vpop.f32.mrf.mxu0
        %v2201 = vadd.f32 %v1337, %v2200
        %2202 = vdwg.mxu0
        %2203 = vmatprep.subr.bf16.mxu0 %v1813
        %2204 = vmatpush1.bf16.msra.mxu0 %v1812
        %2205 = vmatprep.subr.bf16.mxu0 %v1805
        %2206 = vmatpush1.bf16.msra.mxu0 %v1804
        %2207 = vmatprep.subr.bf16.mxu0 %v1797
        %2208 = vmatpush1.bf16.msra.mxu0 %v1796
        %2209 = vmatprep.subr.bf16.mxu0 %v1789
        %2210 = vmatpush1.bf16.msra.mxu0 %v1788
        %2211 = vmatprep.subr.bf16.mxu0 %v1781
        %2212 = vmatpush1.bf16.msra.mxu0 %v1780
        %2213 = vmatprep.subr.bf16.mxu0 %v1773
        %2214 = vmatpush1.bf16.msra.mxu0 %v1772
        %2215 = vmatprep.subr.bf16.mxu0 %v1765
        %2216 = vmatpush1.bf16.msra.mxu0 %v1764
        %2217 = vmatprep.subr.bf16.mxu0 %v1757
        %2218 = vmatpush1.bf16.msra.mxu0 %v1756
        %2219 = vmatprep.subr.bf16.mxu0 %v1877
        %2220 = vmatpush2.bf16.msra.mxu0 %v1876
        %2221 = vmatprep.subr.bf16.mxu0 %v1869
        %2222 = vmatpush2.bf16.msra.mxu0 %v1868
        %2223 = vmatprep.subr.bf16.mxu0 %v1861
        %2224 = vmatpush2.bf16.msra.mxu0 %v1860
        %2225 = vmatprep.subr.bf16.mxu0 %v1853
        %2226 = vmatpush2.bf16.msra.mxu0 %v1852
        %2227 = vmatprep.subr.bf16.mxu0 %v1845
        %2228 = vmatpush2.bf16.msra.mxu0 %v1844
        %2229 = vmatprep.subr.bf16.mxu0 %v1837
        %2230 = vmatpush2.bf16.msra.mxu0 %v1836
        %2231 = vmatprep.subr.bf16.mxu0 %v1829
        %2232 = vmatpush2.bf16.msra.mxu0 %v1828
        %2233 = vmatprep.subr.bf16.mxu0 %v1821
        %2234 = vmatpush2.bf16.msra.mxu0 %v1820
        %2235 = vmatprep.mubr.bf16.mxu0 %v1169
        %2236 = vmatmul.mubr.bf16.gmra.mxu0 %v1168
        %v2237 = vpop.f32.mrf.mxu0
        %v2238 = vadd.f32 %v1341, %v2237
        %v2239 = vpop.f32.mrf.mxu0
        %v2240 = vadd.f32 %v1345, %v2239
        %v2241 = vpop.f32.mrf.mxu0
        %v2242 = vadd.f32 %v1341, %v2241
        %v2243 = vpop.f32.mrf.mxu0
        %v2244 = vadd.f32 %v1345, %v2243
        %2245 = vmatprep.mubr.bf16.mxu0 %v1171
        %2246 = vmatmul.mubr.bf16.gmra.mxu0 %v1170
        %v2247 = vpop.f32.mrf.mxu0
        %v2248 = vadd.f32 %v1341, %v2247
        %v2249 = vpop.f32.mrf.mxu0
        %v2250 = vadd.f32 %v1345, %v2249
        %v2251 = vpop.f32.mrf.mxu0
        %v2252 = vadd.f32 %v1341, %v2251
        %v2253 = vpop.f32.mrf.mxu0
        %v2254 = vadd.f32 %v1345, %v2253
        %2255 = vmatprep.mubr.bf16.mxu0 %v1173
        %2256 = vmatmul.mubr.bf16.gmra.mxu0 %v1172
        %v2257 = vpop.f32.mrf.mxu0
        %v2258 = vadd.f32 %v1341, %v2257
        %v2259 = vpop.f32.mrf.mxu0
        %v2260 = vadd.f32 %v1345, %v2259
        %v2261 = vpop.f32.mrf.mxu0
        %v2262 = vadd.f32 %v1341, %v2261
        %v2263 = vpop.f32.mrf.mxu0
        %v2264 = vadd.f32 %v1345, %v2263
        %2265 = vmatprep.mubr.bf16.mxu0 %v1175
        %2266 = vmatmul.mubr.bf16.gmra.mxu0 %v1174
        %v2267 = vpop.f32.mrf.mxu0
        %v2268 = vadd.f32 %v1341, %v2267
        %v2269 = vpop.f32.mrf.mxu0
        %v2270 = vadd.f32 %v1345, %v2269
        %v2271 = vpop.f32.mrf.mxu0
        %v2272 = vadd.f32 %v1341, %v2271
        %v2273 = vpop.f32.mrf.mxu0
        %v2274 = vadd.f32 %v1345, %v2273
        %2275 = vmatprep.mubr.bf16.mxu0 %v1177
        %2276 = vmatmul.mubr.bf16.gmra.mxu0 %v1176
        %v2277 = vpop.f32.mrf.mxu0
        %v2278 = vadd.f32 %v1341, %v2277
        %v2279 = vpop.f32.mrf.mxu0
        %v2280 = vadd.f32 %v1345, %v2279
        %v2281 = vpop.f32.mrf.mxu0
        %v2282 = vadd.f32 %v1341, %v2281
        %v2283 = vpop.f32.mrf.mxu0
        %v2284 = vadd.f32 %v1345, %v2283
        %2285 = vmatprep.mubr.bf16.mxu0 %v1179
        %2286 = vmatmul.mubr.bf16.gmra.mxu0 %v1178
        %v2287 = vpop.f32.mrf.mxu0
        %v2288 = vadd.f32 %v1341, %v2287
        %v2289 = vpop.f32.mrf.mxu0
        %v2290 = vadd.f32 %v1345, %v2289
        %v2291 = vpop.f32.mrf.mxu0
        %v2292 = vadd.f32 %v1341, %v2291
        %v2293 = vpop.f32.mrf.mxu0
        %v2294 = vadd.f32 %v1345, %v2293
        %2295 = vmatprep.mubr.bf16.mxu0 %v1181
        %2296 = vmatmul.mubr.bf16.gmra.mxu0 %v1180
        %v2297 = vpop.f32.mrf.mxu0
        %v2298 = vadd.f32 %v1341, %v2297
        %v2299 = vpop.f32.mrf.mxu0
        %v2300 = vadd.f32 %v1345, %v2299
        %v2301 = vpop.f32.mrf.mxu0
        %v2302 = vadd.f32 %v1341, %v2301
        %v2303 = vpop.f32.mrf.mxu0
        %v2304 = vadd.f32 %v1345, %v2303
        %2305 = vmatprep.mubr.bf16.mxu0 %v1183
        %2306 = vmatmul.mubr.bf16.gmra.mxu0 %v1182
        %v2307 = vpop.f32.mrf.mxu0
        %v2308 = vadd.f32 %v1341, %v2307
        %v2309 = vpop.f32.mrf.mxu0
        %v2310 = vadd.f32 %v1345, %v2309
        %v2311 = vpop.f32.mrf.mxu0
        %v2312 = vadd.f32 %v1341, %v2311
        %v2313 = vpop.f32.mrf.mxu0
        %v2314 = vadd.f32 %v1345, %v2313
        %2315 = vmatprep.mubr.bf16.mxu0 %v1185
        %2316 = vmatmul.mubr.bf16.gmra.mxu0 %v1184
        %v2317 = vpop.f32.mrf.mxu0
        %v2318 = vadd.f32 %v1341, %v2317
        %v2319 = vpop.f32.mrf.mxu0
        %v2320 = vadd.f32 %v1345, %v2319
        %v2321 = vpop.f32.mrf.mxu0
        %v2322 = vadd.f32 %v1341, %v2321
        %v2323 = vpop.f32.mrf.mxu0
        %v2324 = vadd.f32 %v1345, %v2323
        %2325 = vmatprep.mubr.bf16.mxu0 %v1187
        %2326 = vmatmul.mubr.bf16.gmra.mxu0 %v1186
        %v2327 = vpop.f32.mrf.mxu0
        %v2328 = vadd.f32 %v1341, %v2327
        %v2329 = vpop.f32.mrf.mxu0
        %v2330 = vadd.f32 %v1345, %v2329
        %v2331 = vpop.f32.mrf.mxu0
        %v2332 = vadd.f32 %v1341, %v2331
        %v2333 = vpop.f32.mrf.mxu0
        %v2334 = vadd.f32 %v1345, %v2333
        %2335 = vmatprep.mubr.bf16.mxu0 %v1189
        %2336 = vmatmul.mubr.bf16.gmra.mxu0 %v1188
        %v2337 = vpop.f32.mrf.mxu0
        %v2338 = vadd.f32 %v1341, %v2337
        %v2339 = vpop.f32.mrf.mxu0
        %v2340 = vadd.f32 %v1345, %v2339
        %v2341 = vpop.f32.mrf.mxu0
        %v2342 = vadd.f32 %v1341, %v2341
        %v2343 = vpop.f32.mrf.mxu0
        %v2344 = vadd.f32 %v1345, %v2343
        %2345 = vmatprep.mubr.bf16.mxu0 %v1191
        %2346 = vmatmul.mubr.bf16.gmra.mxu0 %v1190
        %v2347 = vpop.f32.mrf.mxu0
        %v2348 = vadd.f32 %v1341, %v2347
        %v2349 = vpop.f32.mrf.mxu0
        %v2350 = vadd.f32 %v1345, %v2349
        %v2351 = vpop.f32.mrf.mxu0
        %v2352 = vadd.f32 %v1341, %v2351
        %v2353 = vpop.f32.mrf.mxu0
        %v2354 = vadd.f32 %v1345, %v2353
        %2355 = vmatprep.mubr.bf16.mxu0 %v1193
        %2356 = vmatmul.mubr.bf16.gmra.mxu0 %v1192
        %v2357 = vpop.f32.mrf.mxu0
        %v2358 = vadd.f32 %v1341, %v2357
        %v2359 = vpop.f32.mrf.mxu0
        %v2360 = vadd.f32 %v1345, %v2359
        %v2361 = vpop.f32.mrf.mxu0
        %v2362 = vadd.f32 %v1341, %v2361
        %v2363 = vpop.f32.mrf.mxu0
        %v2364 = vadd.f32 %v1345, %v2363
        %2365 = vmatprep.mubr.bf16.mxu0 %v1195
        %2366 = vmatmul.mubr.bf16.gmra.mxu0 %v1194
        %v2367 = vpop.f32.mrf.mxu0
        %v2368 = vadd.f32 %v1341, %v2367
        %v2369 = vpop.f32.mrf.mxu0
        %v2370 = vadd.f32 %v1345, %v2369
        %v2371 = vpop.f32.mrf.mxu0
        %v2372 = vadd.f32 %v1341, %v2371
        %v2373 = vpop.f32.mrf.mxu0
        %v2374 = vadd.f32 %v1345, %v2373
        %2375 = vmatprep.mubr.bf16.mxu0 %v1197
        %2376 = vmatmul.mubr.bf16.gmra.mxu0 %v1196
        %v2377 = vpop.f32.mrf.mxu0
        %v2378 = vadd.f32 %v1341, %v2377
        %v2379 = vpop.f32.mrf.mxu0
        %v2380 = vadd.f32 %v1345, %v2379
        %v2381 = vpop.f32.mrf.mxu0
        %v2382 = vadd.f32 %v1341, %v2381
        %v2383 = vpop.f32.mrf.mxu0
        %v2384 = vadd.f32 %v1345, %v2383
        %2385 = vmatprep.mubr.bf16.mxu0 %v1199
        %2386 = vmatmul.mubr.bf16.gmra.mxu0 %v1198
        %v2387 = vpop.f32.mrf.mxu0
        %v2388 = vadd.f32 %v1341, %v2387
        %v2389 = vpop.f32.mrf.mxu0
        %v2390 = vadd.f32 %v1345, %v2389
        %v2391 = vpop.f32.mrf.mxu0
        %v2392 = vadd.f32 %v1341, %v2391
        %v2393 = vpop.f32.mrf.mxu0
        %v2394 = vadd.f32 %v1345, %v2393
        %2395 = vdwg.mxu0
        %2396 = vmatprep.subr.bf16.mxu0 %v1815
        %2397 = vmatpush1.bf16.msra.mxu0 %v1814
        %2398 = vmatprep.subr.bf16.mxu0 %v1807
        %2399 = vmatpush1.bf16.msra.mxu0 %v1806
        %2400 = vmatprep.subr.bf16.mxu0 %v1799
        %2401 = vmatpush1.bf16.msra.mxu0 %v1798
        %2402 = vmatprep.subr.bf16.mxu0 %v1791
        %2403 = vmatpush1.bf16.msra.mxu0 %v1790
        %2404 = vmatprep.subr.bf16.mxu0 %v1783
        %2405 = vmatpush1.bf16.msra.mxu0 %v1782
        %2406 = vmatprep.subr.bf16.mxu0 %v1775
        %2407 = vmatpush1.bf16.msra.mxu0 %v1774
        %2408 = vmatprep.subr.bf16.mxu0 %v1767
        %2409 = vmatpush1.bf16.msra.mxu0 %v1766
        %2410 = vmatprep.subr.bf16.mxu0 %v1759
        %2411 = vmatpush1.bf16.msra.mxu0 %v1758
        %2412 = vmatprep.subr.bf16.mxu0 %v1879
        %2413 = vmatpush2.bf16.msra.mxu0 %v1878
        %2414 = vmatprep.subr.bf16.mxu0 %v1871
        %2415 = vmatpush2.bf16.msra.mxu0 %v1870
        %2416 = vmatprep.subr.bf16.mxu0 %v1863
        %2417 = vmatpush2.bf16.msra.mxu0 %v1862
        %2418 = vmatprep.subr.bf16.mxu0 %v1855
        %2419 = vmatpush2.bf16.msra.mxu0 %v1854
        %2420 = vmatprep.subr.bf16.mxu0 %v1847
        %2421 = vmatpush2.bf16.msra.mxu0 %v1846
        %2422 = vmatprep.subr.bf16.mxu0 %v1839
        %2423 = vmatpush2.bf16.msra.mxu0 %v1838
        %2424 = vmatprep.subr.bf16.mxu0 %v1831
        %2425 = vmatpush2.bf16.msra.mxu0 %v1830
        %2426 = vmatprep.subr.bf16.mxu0 %v1823
        %2427 = vmatpush2.bf16.msra.mxu0 %v1822
        %2428 = vmatprep.mubr.bf16.mxu0 %v1169
        %2429 = vmatmul.mubr.bf16.gmra.mxu0 %v1168
        %v2430 = vpop.f32.mrf.mxu0
        %v2431 = vadd.f32 %v1349, %v2430
        %v2432 = vpop.f32.mrf.mxu0
        %v2433 = vadd.f32 %v1353, %v2432
        %v2434 = vpop.f32.mrf.mxu0
        %v2435 = vadd.f32 %v1349, %v2434
        %v2436 = vpop.f32.mrf.mxu0
        %v2437 = vadd.f32 %v1353, %v2436
        %2438 = vmatprep.mubr.bf16.mxu0 %v1171
        %2439 = vmatmul.mubr.bf16.gmra.mxu0 %v1170
        %v2440 = vpop.f32.mrf.mxu0
        %v2441 = vadd.f32 %v1349, %v2440
        %v2442 = vpop.f32.mrf.mxu0
        %v2443 = vadd.f32 %v1353, %v2442
        %v2444 = vpop.f32.mrf.mxu0
        %v2445 = vadd.f32 %v1349, %v2444
        %v2446 = vpop.f32.mrf.mxu0
        %v2447 = vadd.f32 %v1353, %v2446
        %2448 = vmatprep.mubr.bf16.mxu0 %v1173
        %2449 = vmatmul.mubr.bf16.gmra.mxu0 %v1172
        %v2450 = vpop.f32.mrf.mxu0
        %v2451 = vadd.f32 %v1349, %v2450
        %v2452 = vpop.f32.mrf.mxu0
        %v2453 = vadd.f32 %v1353, %v2452
        %v2454 = vpop.f32.mrf.mxu0
        %v2455 = vadd.f32 %v1349, %v2454
        %v2456 = vpop.f32.mrf.mxu0
        %v2457 = vadd.f32 %v1353, %v2456
        %2458 = vmatprep.mubr.bf16.mxu0 %v1175
        %2459 = vmatmul.mubr.bf16.gmra.mxu0 %v1174
        %v2460 = vpop.f32.mrf.mxu0
        %v2461 = vadd.f32 %v1349, %v2460
        %v2462 = vpop.f32.mrf.mxu0
        %v2463 = vadd.f32 %v1353, %v2462
        %v2464 = vpop.f32.mrf.mxu0
        %v2465 = vadd.f32 %v1349, %v2464
        %v2466 = vpop.f32.mrf.mxu0
        %v2467 = vadd.f32 %v1353, %v2466
        %2468 = vmatprep.mubr.bf16.mxu0 %v1177
        %2469 = vmatmul.mubr.bf16.gmra.mxu0 %v1176
        %v2470 = vpop.f32.mrf.mxu0
        %v2471 = vadd.f32 %v1349, %v2470
        %v2472 = vpop.f32.mrf.mxu0
        %v2473 = vadd.f32 %v1353, %v2472
        %v2474 = vpop.f32.mrf.mxu0
        %v2475 = vadd.f32 %v1349, %v2474
        %v2476 = vpop.f32.mrf.mxu0
        %v2477 = vadd.f32 %v1353, %v2476
        %2478 = vmatprep.mubr.bf16.mxu0 %v1179
        %2479 = vmatmul.mubr.bf16.gmra.mxu0 %v1178
        %v2480 = vpop.f32.mrf.mxu0
        %v2481 = vadd.f32 %v1349, %v2480
        %v2482 = vpop.f32.mrf.mxu0
        %v2483 = vadd.f32 %v1353, %v2482
        %v2484 = vpop.f32.mrf.mxu0
        %v2485 = vadd.f32 %v1349, %v2484
        %v2486 = vpop.f32.mrf.mxu0
        %v2487 = vadd.f32 %v1353, %v2486
        %2488 = vmatprep.mubr.bf16.mxu0 %v1181
        %2489 = vmatmul.mubr.bf16.gmra.mxu0 %v1180
        %v2490 = vpop.f32.mrf.mxu0
        %v2491 = vadd.f32 %v1349, %v2490
        %v2492 = vpop.f32.mrf.mxu0
        %v2493 = vadd.f32 %v1353, %v2492
        %v2494 = vpop.f32.mrf.mxu0
        %v2495 = vadd.f32 %v1349, %v2494
        %v2496 = vpop.f32.mrf.mxu0
        %v2497 = vadd.f32 %v1353, %v2496
        %2498 = vmatprep.mubr.bf16.mxu0 %v1183
        %2499 = vmatmul.mubr.bf16.gmra.mxu0 %v1182
        %v2500 = vpop.f32.mrf.mxu0
        %v2501 = vadd.f32 %v1349, %v2500
        %v2502 = vpop.f32.mrf.mxu0
        %v2503 = vadd.f32 %v1353, %v2502
        %v2504 = vpop.f32.mrf.mxu0
        %v2505 = vadd.f32 %v1349, %v2504
        %v2506 = vpop.f32.mrf.mxu0
        %v2507 = vadd.f32 %v1353, %v2506
        %2508 = vmatprep.mubr.bf16.mxu0 %v1185
        %2509 = vmatmul.mubr.bf16.gmra.mxu0 %v1184
        %v2510 = vpop.f32.mrf.mxu0
        %v2511 = vadd.f32 %v1349, %v2510
        %v2512 = vpop.f32.mrf.mxu0
        %v2513 = vadd.f32 %v1353, %v2512
        %v2514 = vpop.f32.mrf.mxu0
        %v2515 = vadd.f32 %v1349, %v2514
        %v2516 = vpop.f32.mrf.mxu0
        %v2517 = vadd.f32 %v1353, %v2516
        %2518 = vmatprep.mubr.bf16.mxu0 %v1187
        %2519 = vmatmul.mubr.bf16.gmra.mxu0 %v1186
        %v2520 = vpop.f32.mrf.mxu0
        %v2521 = vadd.f32 %v1349, %v2520
        %v2522 = vpop.f32.mrf.mxu0
        %v2523 = vadd.f32 %v1353, %v2522
        %v2524 = vpop.f32.mrf.mxu0
        %v2525 = vadd.f32 %v1349, %v2524
        %v2526 = vpop.f32.mrf.mxu0
        %v2527 = vadd.f32 %v1353, %v2526
        %2528 = vmatprep.mubr.bf16.mxu0 %v1189
        %2529 = vmatmul.mubr.bf16.gmra.mxu0 %v1188
        %v2530 = vpop.f32.mrf.mxu0
        %v2531 = vadd.f32 %v1349, %v2530
        %v2532 = vpop.f32.mrf.mxu0
        %v2533 = vadd.f32 %v1353, %v2532
        %v2534 = vpop.f32.mrf.mxu0
        %v2535 = vadd.f32 %v1349, %v2534
        %v2536 = vpop.f32.mrf.mxu0
        %v2537 = vadd.f32 %v1353, %v2536
        %2538 = vmatprep.mubr.bf16.mxu0 %v1191
        %2539 = vmatmul.mubr.bf16.gmra.mxu0 %v1190
        %v2540 = vpop.f32.mrf.mxu0
        %v2541 = vadd.f32 %v1349, %v2540
        %v2542 = vpop.f32.mrf.mxu0
        %v2543 = vadd.f32 %v1353, %v2542
        %v2544 = vpop.f32.mrf.mxu0
        %v2545 = vadd.f32 %v1349, %v2544
        %v2546 = vpop.f32.mrf.mxu0
        %v2547 = vadd.f32 %v1353, %v2546
        %2548 = vmatprep.mubr.bf16.mxu0 %v1193
        %2549 = vmatmul.mubr.bf16.gmra.mxu0 %v1192
        %v2550 = vpop.f32.mrf.mxu0
        %v2551 = vadd.f32 %v1349, %v2550
        %v2552 = vpop.f32.mrf.mxu0
        %v2553 = vadd.f32 %v1353, %v2552
        %v2554 = vpop.f32.mrf.mxu0
        %v2555 = vadd.f32 %v1349, %v2554
        %v2556 = vpop.f32.mrf.mxu0
        %v2557 = vadd.f32 %v1353, %v2556
        %2558 = vmatprep.mubr.bf16.mxu0 %v1195
        %2559 = vmatmul.mubr.bf16.gmra.mxu0 %v1194
        %v2560 = vpop.f32.mrf.mxu0
        %v2561 = vadd.f32 %v1349, %v2560
        %v2562 = vpop.f32.mrf.mxu0
        %v2563 = vadd.f32 %v1353, %v2562
        %v2564 = vpop.f32.mrf.mxu0
        %v2565 = vadd.f32 %v1349, %v2564
        %v2566 = vpop.f32.mrf.mxu0
        %v2567 = vadd.f32 %v1353, %v2566
        %2568 = vmatprep.mubr.bf16.mxu0 %v1197
        %2569 = vmatmul.mubr.bf16.gmra.mxu0 %v1196
        %v2570 = vpop.f32.mrf.mxu0
        %v2571 = vadd.f32 %v1349, %v2570
        %v2572 = vpop.f32.mrf.mxu0
        %v2573 = vadd.f32 %v1353, %v2572
        %v2574 = vpop.f32.mrf.mxu0
        %v2575 = vadd.f32 %v1349, %v2574
        %v2576 = vpop.f32.mrf.mxu0
        %v2577 = vadd.f32 %v1353, %v2576
        %2578 = vmatprep.mubr.bf16.mxu0 %v1199
        %2579 = vmatmul.mubr.bf16.gmra.mxu0 %v1198
        %v2580 = vpop.f32.mrf.mxu0
        %v2581 = vadd.f32 %v1349, %v2580
        %v2582 = vpop.f32.mrf.mxu0
        %v2583 = vadd.f32 %v1353, %v2582
        %v2584 = vpop.f32.mrf.mxu0
        %v2585 = vadd.f32 %v1349, %v2584
        %v2586 = vpop.f32.mrf.mxu0
        %v2587 = vadd.f32 %v1353, %v2586
        %2588 = vdwg.mxu0
        %2589 = vmatprep.subr.bf16.mxu0 %v1817
        %2590 = vmatpush1.bf16.msra.mxu0 %v1816
        %2591 = vmatprep.subr.bf16.mxu0 %v1809
        %2592 = vmatpush1.bf16.msra.mxu0 %v1808
        %2593 = vmatprep.subr.bf16.mxu0 %v1801
        %2594 = vmatpush1.bf16.msra.mxu0 %v1800
        %2595 = vmatprep.subr.bf16.mxu0 %v1793
        %2596 = vmatpush1.bf16.msra.mxu0 %v1792
        %2597 = vmatprep.subr.bf16.mxu0 %v1785
        %2598 = vmatpush1.bf16.msra.mxu0 %v1784
        %2599 = vmatprep.subr.bf16.mxu0 %v1777
        %2600 = vmatpush1.bf16.msra.mxu0 %v1776
        %2601 = vmatprep.subr.bf16.mxu0 %v1769
        %2602 = vmatpush1.bf16.msra.mxu0 %v1768
        %2603 = vmatprep.subr.bf16.mxu0 %v1761
        %2604 = vmatpush1.bf16.msra.mxu0 %v1760
        %2605 = vmatprep.subr.bf16.mxu0 %v1881
        %2606 = vmatpush2.bf16.msra.mxu0 %v1880
        %2607 = vmatprep.subr.bf16.mxu0 %v1873
        %2608 = vmatpush2.bf16.msra.mxu0 %v1872
        %2609 = vmatprep.subr.bf16.mxu0 %v1865
        %2610 = vmatpush2.bf16.msra.mxu0 %v1864
        %2611 = vmatprep.subr.bf16.mxu0 %v1857
        %2612 = vmatpush2.bf16.msra.mxu0 %v1856
        %2613 = vmatprep.subr.bf16.mxu0 %v1849
        %2614 = vmatpush2.bf16.msra.mxu0 %v1848
        %2615 = vmatprep.subr.bf16.mxu0 %v1841
        %2616 = vmatpush2.bf16.msra.mxu0 %v1840
        %2617 = vmatprep.subr.bf16.mxu0 %v1833
        %2618 = vmatpush2.bf16.msra.mxu0 %v1832
        %2619 = vmatprep.subr.bf16.mxu0 %v1825
        %2620 = vmatpush2.bf16.msra.mxu0 %v1824
        %2621 = vmatprep.mubr.bf16.mxu0 %v1169
        %2622 = vmatmul.mubr.bf16.gmra.mxu0 %v1168
        %v2623 = vpop.f32.mrf.mxu0
        %v2624 = vadd.f32 %v1357, %v2623
        %v2625 = vpop.f32.mrf.mxu0
        %v2626 = vadd.f32 %v1361, %v2625
        %v2627 = vpop.f32.mrf.mxu0
        %v2628 = vadd.f32 %v1357, %v2627
        %v2629 = vpop.f32.mrf.mxu0
        %v2630 = vadd.f32 %v1361, %v2629
        %2631 = vmatprep.mubr.bf16.mxu0 %v1171
        %2632 = vmatmul.mubr.bf16.gmra.mxu0 %v1170
        %v2633 = vpop.f32.mrf.mxu0
        %v2634 = vadd.f32 %v1357, %v2633
        %v2635 = vpop.f32.mrf.mxu0
        %v2636 = vadd.f32 %v1361, %v2635
        %v2637 = vpop.f32.mrf.mxu0
        %v2638 = vadd.f32 %v1357, %v2637
        %v2639 = vpop.f32.mrf.mxu0
        %v2640 = vadd.f32 %v1361, %v2639
        %2641 = vmatprep.mubr.bf16.mxu0 %v1173
        %2642 = vmatmul.mubr.bf16.gmra.mxu0 %v1172
        %v2643 = vpop.f32.mrf.mxu0
        %v2644 = vadd.f32 %v1357, %v2643
        %v2645 = vpop.f32.mrf.mxu0
        %v2646 = vadd.f32 %v1361, %v2645
        %v2647 = vpop.f32.mrf.mxu0
        %v2648 = vadd.f32 %v1357, %v2647
        %v2649 = vpop.f32.mrf.mxu0
        %v2650 = vadd.f32 %v1361, %v2649
        %2651 = vmatprep.mubr.bf16.mxu0 %v1175
        %2652 = vmatmul.mubr.bf16.gmra.mxu0 %v1174
        %v2653 = vpop.f32.mrf.mxu0
        %v2654 = vadd.f32 %v1357, %v2653
        %v2655 = vpop.f32.mrf.mxu0
        %v2656 = vadd.f32 %v1361, %v2655
        %v2657 = vpop.f32.mrf.mxu0
        %v2658 = vadd.f32 %v1357, %v2657
        %v2659 = vpop.f32.mrf.mxu0
        %v2660 = vadd.f32 %v1361, %v2659
        %2661 = vmatprep.mubr.bf16.mxu0 %v1177
        %2662 = vmatmul.mubr.bf16.gmra.mxu0 %v1176
        %v2663 = vpop.f32.mrf.mxu0
        %v2664 = vadd.f32 %v1357, %v2663
        %v2665 = vpop.f32.mrf.mxu0
        %v2666 = vadd.f32 %v1361, %v2665
        %v2667 = vpop.f32.mrf.mxu0
        %v2668 = vadd.f32 %v1357, %v2667
        %v2669 = vpop.f32.mrf.mxu0
        %v2670 = vadd.f32 %v1361, %v2669
        %2671 = vmatprep.mubr.bf16.mxu0 %v1179
        %2672 = vmatmul.mubr.bf16.gmra.mxu0 %v1178
        %v2673 = vpop.f32.mrf.mxu0
        %v2674 = vadd.f32 %v1357, %v2673
        %v2675 = vpop.f32.mrf.mxu0
        %v2676 = vadd.f32 %v1361, %v2675
        %v2677 = vpop.f32.mrf.mxu0
        %v2678 = vadd.f32 %v1357, %v2677
        %v2679 = vpop.f32.mrf.mxu0
        %v2680 = vadd.f32 %v1361, %v2679
        %2681 = vmatprep.mubr.bf16.mxu0 %v1181
        %2682 = vmatmul.mubr.bf16.gmra.mxu0 %v1180
        %v2683 = vpop.f32.mrf.mxu0
        %v2684 = vadd.f32 %v1357, %v2683
        %v2685 = vpop.f32.mrf.mxu0
        %v2686 = vadd.f32 %v1361, %v2685
        %v2687 = vpop.f32.mrf.mxu0
        %v2688 = vadd.f32 %v1357, %v2687
        %v2689 = vpop.f32.mrf.mxu0
        %v2690 = vadd.f32 %v1361, %v2689
        %2691 = vmatprep.mubr.bf16.mxu0 %v1183
        %2692 = vmatmul.mubr.bf16.gmra.mxu0 %v1182
        %v2693 = vpop.f32.mrf.mxu0
        %v2694 = vadd.f32 %v1357, %v2693
        %v2695 = vpop.f32.mrf.mxu0
        %v2696 = vadd.f32 %v1361, %v2695
        %v2697 = vpop.f32.mrf.mxu0
        %v2698 = vadd.f32 %v1357, %v2697
        %v2699 = vpop.f32.mrf.mxu0
        %v2700 = vadd.f32 %v1361, %v2699
        %2701 = vmatprep.mubr.bf16.mxu0 %v1185
        %2702 = vmatmul.mubr.bf16.gmra.mxu0 %v1184
        %v2703 = vpop.f32.mrf.mxu0
        %v2704 = vadd.f32 %v1357, %v2703
        %v2705 = vpop.f32.mrf.mxu0
        %v2706 = vadd.f32 %v1361, %v2705
        %v2707 = vpop.f32.mrf.mxu0
        %v2708 = vadd.f32 %v1357, %v2707
        %v2709 = vpop.f32.mrf.mxu0
        %v2710 = vadd.f32 %v1361, %v2709
        %2711 = vmatprep.mubr.bf16.mxu0 %v1187
        %2712 = vmatmul.mubr.bf16.gmra.mxu0 %v1186
        %v2713 = vpop.f32.mrf.mxu0
        %v2714 = vadd.f32 %v1357, %v2713
        %v2715 = vpop.f32.mrf.mxu0
        %v2716 = vadd.f32 %v1361, %v2715
        %v2717 = vpop.f32.mrf.mxu0
        %v2718 = vadd.f32 %v1357, %v2717
        %v2719 = vpop.f32.mrf.mxu0
        %v2720 = vadd.f32 %v1361, %v2719
        %2721 = vmatprep.mubr.bf16.mxu0 %v1189
        %2722 = vmatmul.mubr.bf16.gmra.mxu0 %v1188
        %v2723 = vpop.f32.mrf.mxu0
        %v2724 = vadd.f32 %v1357, %v2723
        %v2725 = vpop.f32.mrf.mxu0
        %v2726 = vadd.f32 %v1361, %v2725
        %v2727 = vpop.f32.mrf.mxu0
        %v2728 = vadd.f32 %v1357, %v2727
        %v2729 = vpop.f32.mrf.mxu0
        %v2730 = vadd.f32 %v1361, %v2729
        %2731 = vmatprep.mubr.bf16.mxu0 %v1191
        %2732 = vmatmul.mubr.bf16.gmra.mxu0 %v1190
        %v2733 = vpop.f32.mrf.mxu0
        %v2734 = vadd.f32 %v1357, %v2733
        %v2735 = vpop.f32.mrf.mxu0
        %v2736 = vadd.f32 %v1361, %v2735
        %v2737 = vpop.f32.mrf.mxu0
        %v2738 = vadd.f32 %v1357, %v2737
        %v2739 = vpop.f32.mrf.mxu0
        %v2740 = vadd.f32 %v1361, %v2739
        %2741 = vmatprep.mubr.bf16.mxu0 %v1193
        %2742 = vmatmul.mubr.bf16.gmra.mxu0 %v1192
        %v2743 = vpop.f32.mrf.mxu0
        %v2744 = vadd.f32 %v1357, %v2743
        %v2745 = vpop.f32.mrf.mxu0
        %v2746 = vadd.f32 %v1361, %v2745
        %v2747 = vpop.f32.mrf.mxu0
        %v2748 = vadd.f32 %v1357, %v2747
        %v2749 = vpop.f32.mrf.mxu0
        %v2750 = vadd.f32 %v1361, %v2749
        %2751 = vmatprep.mubr.bf16.mxu0 %v1195
        %2752 = vmatmul.mubr.bf16.gmra.mxu0 %v1194
        %v2753 = vpop.f32.mrf.mxu0
        %v2754 = vadd.f32 %v1357, %v2753
        %v2755 = vpop.f32.mrf.mxu0
        %v2756 = vadd.f32 %v1361, %v2755
        %v2757 = vpop.f32.mrf.mxu0
        %v2758 = vadd.f32 %v1357, %v2757
        %v2759 = vpop.f32.mrf.mxu0
        %v2760 = vadd.f32 %v1361, %v2759
        %2761 = vmatprep.mubr.bf16.mxu0 %v1197
        %2762 = vmatmul.mubr.bf16.gmra.mxu0 %v1196
        %v2763 = vpop.f32.mrf.mxu0
        %v2764 = vadd.f32 %v1357, %v2763
        %v2765 = vpop.f32.mrf.mxu0
        %v2766 = vadd.f32 %v1361, %v2765
        %v2767 = vpop.f32.mrf.mxu0
        %v2768 = vadd.f32 %v1357, %v2767
        %v2769 = vpop.f32.mrf.mxu0
        %v2770 = vadd.f32 %v1361, %v2769
        %2771 = vmatprep.mubr.bf16.mxu0 %v1199
        %2772 = vmatmul.mubr.bf16.gmra.mxu0 %v1198
        %v2773 = vpop.f32.mrf.mxu0
        %v2774 = vadd.f32 %v1357, %v2773
        %v2775 = vpop.f32.mrf.mxu0
        %v2776 = vadd.f32 %v1361, %v2775
        %v2777 = vpop.f32.mrf.mxu0
        %v2778 = vadd.f32 %v1357, %v2777
        %v2779 = vpop.f32.mrf.mxu0
        %v2780 = vadd.f32 %v1361, %v2779
        %2781 = vdwg.mxu0
        %v2782 = vmax.f32 %v2045, 0.0
        %v2783 = vmax.f32 %v2047, 0.0
        %v2784 = vmax.f32 %v2238, 0.0
        %v2785 = vmax.f32 %v2240, 0.0
        %v2786 = vmax.f32 %v2431, 0.0
        %v2787 = vmax.f32 %v2433, 0.0
        %v2788 = vmax.f32 %v2624, 0.0
        %v2789 = vmax.f32 %v2626, 0.0
        %v2790 = vmax.f32 %v2049, 0.0
        %v2791 = vmax.f32 %v2051, 0.0
        %v2792 = vmax.f32 %v2242, 0.0
        %v2793 = vmax.f32 %v2244, 0.0
        %v2794 = vmax.f32 %v2435, 0.0
        %v2795 = vmax.f32 %v2437, 0.0
        %v2796 = vmax.f32 %v2628, 0.0
        %v2797 = vmax.f32 %v2630, 0.0
        %v2798 = vmax.f32 %v2055, 0.0
        %v2799 = vmax.f32 %v2057, 0.0
        %v2800 = vmax.f32 %v2248, 0.0
        %v2801 = vmax.f32 %v2250, 0.0
        %v2802 = vmax.f32 %v2441, 0.0
        %v2803 = vmax.f32 %v2443, 0.0
        %v2804 = vmax.f32 %v2634, 0.0
        %v2805 = vmax.f32 %v2636, 0.0
        %v2806 = vmax.f32 %v2059, 0.0
        %v2807 = vmax.f32 %v2061, 0.0
        %v2808 = vmax.f32 %v2252, 0.0
        %v2809 = vmax.f32 %v2254, 0.0
        %v2810 = vmax.f32 %v2445, 0.0
        %v2811 = vmax.f32 %v2447, 0.0
        %v2812 = vmax.f32 %v2638, 0.0
        %v2813 = vmax.f32 %v2640, 0.0
        %v2814 = vmax.f32 %v2065, 0.0
        %v2815 = vmax.f32 %v2067, 0.0
        %v2816 = vmax.f32 %v2258, 0.0
        %v2817 = vmax.f32 %v2260, 0.0
        %v2818 = vmax.f32 %v2451, 0.0
        %v2819 = vmax.f32 %v2453, 0.0
        %v2820 = vmax.f32 %v2644, 0.0
        %v2821 = vmax.f32 %v2646, 0.0
        %v2822 = vmax.f32 %v2069, 0.0
        %v2823 = vmax.f32 %v2071, 0.0
        %v2824 = vmax.f32 %v2262, 0.0
        %v2825 = vmax.f32 %v2264, 0.0
        %v2826 = vmax.f32 %v2455, 0.0
        %v2827 = vmax.f32 %v2457, 0.0
        %v2828 = vmax.f32 %v2648, 0.0
        %v2829 = vmax.f32 %v2650, 0.0
        %v2830 = vmax.f32 %v2075, 0.0
        %v2831 = vmax.f32 %v2077, 0.0
        %v2832 = vmax.f32 %v2268, 0.0
        %v2833 = vmax.f32 %v2270, 0.0
        %v2834 = vmax.f32 %v2461, 0.0
        %v2835 = vmax.f32 %v2463, 0.0
        %v2836 = vmax.f32 %v2654, 0.0
        %v2837 = vmax.f32 %v2656, 0.0
        %v2838 = vmax.f32 %v2079, 0.0
        %v2839 = vmax.f32 %v2081, 0.0
        %v2840 = vmax.f32 %v2272, 0.0
        %v2841 = vmax.f32 %v2274, 0.0
        %v2842 = vmax.f32 %v2465, 0.0
        %v2843 = vmax.f32 %v2467, 0.0
        %v2844 = vmax.f32 %v2658, 0.0
        %v2845 = vmax.f32 %v2660, 0.0
        %v2846 = vmax.f32 %v2085, 0.0
        %v2847 = vmax.f32 %v2087, 0.0
        %v2848 = vmax.f32 %v2278, 0.0
        %v2849 = vmax.f32 %v2280, 0.0
        %v2850 = vmax.f32 %v2471, 0.0
        %v2851 = vmax.f32 %v2473, 0.0
        %v2852 = vmax.f32 %v2664, 0.0
        %v2853 = vmax.f32 %v2666, 0.0
        %v2854 = vmax.f32 %v2089, 0.0
        %v2855 = vmax.f32 %v2091, 0.0
        %v2856 = vmax.f32 %v2282, 0.0
        %v2857 = vmax.f32 %v2284, 0.0
        %v2858 = vmax.f32 %v2475, 0.0
        %v2859 = vmax.f32 %v2477, 0.0
        %v2860 = vmax.f32 %v2668, 0.0
        %v2861 = vmax.f32 %v2670, 0.0
        %v2862 = vmax.f32 %v2095, 0.0
        %v2863 = vmax.f32 %v2097, 0.0
        %v2864 = vmax.f32 %v2288, 0.0
        %v2865 = vmax.f32 %v2290, 0.0
        %v2866 = vmax.f32 %v2481, 0.0
        %v2867 = vmax.f32 %v2483, 0.0
        %v2868 = vmax.f32 %v2674, 0.0
        %v2869 = vmax.f32 %v2676, 0.0
        %v2870 = vmax.f32 %v2099, 0.0
        %v2871 = vmax.f32 %v2101, 0.0
        %v2872 = vmax.f32 %v2292, 0.0
        %v2873 = vmax.f32 %v2294, 0.0
        %v2874 = vmax.f32 %v2485, 0.0
        %v2875 = vmax.f32 %v2487, 0.0
        %v2876 = vmax.f32 %v2678, 0.0
        %v2877 = vmax.f32 %v2680, 0.0
        %v2878 = vmax.f32 %v2105, 0.0
        %v2879 = vmax.f32 %v2107, 0.0
        %v2880 = vmax.f32 %v2298, 0.0
        %v2881 = vmax.f32 %v2300, 0.0
        %v2882 = vmax.f32 %v2491, 0.0
        %v2883 = vmax.f32 %v2493, 0.0
        %v2884 = vmax.f32 %v2684, 0.0
        %v2885 = vmax.f32 %v2686, 0.0
        %v2886 = vmax.f32 %v2109, 0.0
        %v2887 = vmax.f32 %v2111, 0.0
        %v2888 = vmax.f32 %v2302, 0.0
        %v2889 = vmax.f32 %v2304, 0.0
        %v2890 = vmax.f32 %v2495, 0.0
        %v2891 = vmax.f32 %v2497, 0.0
        %v2892 = vmax.f32 %v2688, 0.0
        %v2893 = vmax.f32 %v2690, 0.0
        %v2894 = vmax.f32 %v2115, 0.0
        %v2895 = vmax.f32 %v2117, 0.0
        %v2896 = vmax.f32 %v2308, 0.0
        %v2897 = vmax.f32 %v2310, 0.0
        %v2898 = vmax.f32 %v2501, 0.0
        %v2899 = vmax.f32 %v2503, 0.0
        %v2900 = vmax.f32 %v2694, 0.0
        %v2901 = vmax.f32 %v2696, 0.0
        %v2902 = vmax.f32 %v2119, 0.0
        %v2903 = vmax.f32 %v2121, 0.0
        %v2904 = vmax.f32 %v2312, 0.0
        %v2905 = vmax.f32 %v2314, 0.0
        %v2906 = vmax.f32 %v2505, 0.0
        %v2907 = vmax.f32 %v2507, 0.0
        %v2908 = vmax.f32 %v2698, 0.0
        %v2909 = vmax.f32 %v2700, 0.0
        %v2910 = vmax.f32 %v2125, 0.0
        %v2911 = vmax.f32 %v2127, 0.0
        %v2912 = vmax.f32 %v2318, 0.0
        %v2913 = vmax.f32 %v2320, 0.0
        %v2914 = vmax.f32 %v2511, 0.0
        %v2915 = vmax.f32 %v2513, 0.0
        %v2916 = vmax.f32 %v2704, 0.0
        %v2917 = vmax.f32 %v2706, 0.0
        %v2918 = vmax.f32 %v2129, 0.0
        %v2919 = vmax.f32 %v2131, 0.0
        %v2920 = vmax.f32 %v2322, 0.0
        %v2921 = vmax.f32 %v2324, 0.0
        %v2922 = vmax.f32 %v2515, 0.0
        %v2923 = vmax.f32 %v2517, 0.0
        %v2924 = vmax.f32 %v2708, 0.0
        %v2925 = vmax.f32 %v2710, 0.0
        %v2926 = vmax.f32 %v2135, 0.0
        %v2927 = vmax.f32 %v2137, 0.0
        %v2928 = vmax.f32 %v2328, 0.0
        %v2929 = vmax.f32 %v2330, 0.0
        %v2930 = vmax.f32 %v2521, 0.0
        %v2931 = vmax.f32 %v2523, 0.0
        %v2932 = vmax.f32 %v2714, 0.0
        %v2933 = vmax.f32 %v2716, 0.0
        %v2934 = vmax.f32 %v2139, 0.0
        %v2935 = vmax.f32 %v2141, 0.0
        %v2936 = vmax.f32 %v2332, 0.0
        %v2937 = vmax.f32 %v2334, 0.0
        %v2938 = vmax.f32 %v2525, 0.0
        %v2939 = vmax.f32 %v2527, 0.0
        %v2940 = vmax.f32 %v2718, 0.0
        %v2941 = vmax.f32 %v2720, 0.0
        %v2942 = vmax.f32 %v2145, 0.0
        %v2943 = vmax.f32 %v2147, 0.0
        %v2944 = vmax.f32 %v2338, 0.0
        %v2945 = vmax.f32 %v2340, 0.0
        %v2946 = vmax.f32 %v2531, 0.0
        %v2947 = vmax.f32 %v2533, 0.0
        %v2948 = vmax.f32 %v2724, 0.0
        %v2949 = vmax.f32 %v2726, 0.0
        %v2950 = vmax.f32 %v2149, 0.0
        %v2951 = vmax.f32 %v2151, 0.0
        %v2952 = vmax.f32 %v2342, 0.0
        %v2953 = vmax.f32 %v2344, 0.0
        %v2954 = vmax.f32 %v2535, 0.0
        %v2955 = vmax.f32 %v2537, 0.0
        %v2956 = vmax.f32 %v2728, 0.0
        %v2957 = vmax.f32 %v2730, 0.0
        %v2958 = vmax.f32 %v2155, 0.0
        %v2959 = vmax.f32 %v2157, 0.0
        %v2960 = vmax.f32 %v2348, 0.0
        %v2961 = vmax.f32 %v2350, 0.0
        %v2962 = vmax.f32 %v2541, 0.0
        %v2963 = vmax.f32 %v2543, 0.0
        %v2964 = vmax.f32 %v2734, 0.0
        %v2965 = vmax.f32 %v2736, 0.0
        %v2966 = vmax.f32 %v2159, 0.0
        %v2967 = vmax.f32 %v2161, 0.0
        %v2968 = vmax.f32 %v2352, 0.0
        %v2969 = vmax.f32 %v2354, 0.0
        %v2970 = vmax.f32 %v2545, 0.0
        %v2971 = vmax.f32 %v2547, 0.0
        %v2972 = vmax.f32 %v2738, 0.0
        %v2973 = vmax.f32 %v2740, 0.0
        %v2974 = vmax.f32 %v2165, 0.0
        %v2975 = vmax.f32 %v2167, 0.0
        %v2976 = vmax.f32 %v2358, 0.0
        %v2977 = vmax.f32 %v2360, 0.0
        %v2978 = vmax.f32 %v2551, 0.0
        %v2979 = vmax.f32 %v2553, 0.0
        %v2980 = vmax.f32 %v2744, 0.0
        %v2981 = vmax.f32 %v2746, 0.0
        %v2982 = vmax.f32 %v2169, 0.0
        %v2983 = vmax.f32 %v2171, 0.0
        %v2984 = vmax.f32 %v2362, 0.0
        %v2985 = vmax.f32 %v2364, 0.0
        %v2986 = vmax.f32 %v2555, 0.0
        %v2987 = vmax.f32 %v2557, 0.0
        %v2988 = vmax.f32 %v2748, 0.0
        %v2989 = vmax.f32 %v2750, 0.0
        %v2990 = vmax.f32 %v2175, 0.0
        %v2991 = vmax.f32 %v2177, 0.0
        %v2992 = vmax.f32 %v2368, 0.0
        %v2993 = vmax.f32 %v2370, 0.0
        %v2994 = vmax.f32 %v2561, 0.0
        %v2995 = vmax.f32 %v2563, 0.0
        %v2996 = vmax.f32 %v2754, 0.0
        %v2997 = vmax.f32 %v2756, 0.0
        %v2998 = vmax.f32 %v2179, 0.0
        %v2999 = vmax.f32 %v2181, 0.0
        %v3000 = vmax.f32 %v2372, 0.0
        %v3001 = vmax.f32 %v2374, 0.0
        %v3002 = vmax.f32 %v2565, 0.0
        %v3003 = vmax.f32 %v2567, 0.0
        %v3004 = vmax.f32 %v2758, 0.0
        %v3005 = vmax.f32 %v2760, 0.0
        %v3006 = vmax.f32 %v2185, 0.0
        %v3007 = vmax.f32 %v2187, 0.0
        %v3008 = vmax.f32 %v2378, 0.0
        %v3009 = vmax.f32 %v2380, 0.0
        %v3010 = vmax.f32 %v2571, 0.0
        %v3011 = vmax.f32 %v2573, 0.0
        %v3012 = vmax.f32 %v2764, 0.0
        %v3013 = vmax.f32 %v2766, 0.0
        %v3014 = vmax.f32 %v2189, 0.0
        %v3015 = vmax.f32 %v2191, 0.0
        %v3016 = vmax.f32 %v2382, 0.0
        %v3017 = vmax.f32 %v2384, 0.0
        %v3018 = vmax.f32 %v2575, 0.0
        %v3019 = vmax.f32 %v2577, 0.0
        %v3020 = vmax.f32 %v2768, 0.0
        %v3021 = vmax.f32 %v2770, 0.0
        %v3022 = vmax.f32 %v2195, 0.0
        %v3023 = vmax.f32 %v2197, 0.0
        %v3024 = vmax.f32 %v2388, 0.0
        %v3025 = vmax.f32 %v2390, 0.0
        %v3026 = vmax.f32 %v2581, 0.0
        %v3027 = vmax.f32 %v2583, 0.0
        %v3028 = vmax.f32 %v2774, 0.0
        %v3029 = vmax.f32 %v2776, 0.0
        %v3030 = vmax.f32 %v2199, 0.0
        %v3031 = vmax.f32 %v2201, 0.0
        %v3032 = vmax.f32 %v2392, 0.0
        %v3033 = vmax.f32 %v2394, 0.0
        %v3034 = vmax.f32 %v2585, 0.0
        %v3035 = vmax.f32 %v2587, 0.0
        %v3036 = vmax.f32 %v2778, 0.0
        %v3037 = vmax.f32 %v2780, 0.0
        %v3038 = vpack.c.bf16 %v2790, %v2782
        %v3039 = vpack.c.bf16 %v2791, %v2783
        %v3040 = vpack.c.bf16 %v2792, %v2784
        %v3041 = vpack.c.bf16 %v2793, %v2785
        %v3042 = vpack.c.bf16 %v2794, %v2786
        %v3043 = vpack.c.bf16 %v2795, %v2787
        %v3044 = vpack.c.bf16 %v2796, %v2788
        %v3045 = vpack.c.bf16 %v2797, %v2789
        %v3046 = vpack.c.bf16 %v2806, %v2798
        %v3047 = vpack.c.bf16 %v2807, %v2799
        %v3048 = vpack.c.bf16 %v2808, %v2800
        %v3049 = vpack.c.bf16 %v2809, %v2801
        %v3050 = vpack.c.bf16 %v2810, %v2802
        %v3051 = vpack.c.bf16 %v2811, %v2803
        %v3052 = vpack.c.bf16 %v2812, %v2804
        %v3053 = vpack.c.bf16 %v2813, %v2805
        %v3054 = vpack.c.bf16 %v2822, %v2814
        %v3055 = vpack.c.bf16 %v2823, %v2815
        %v3056 = vpack.c.bf16 %v2824, %v2816
        %v3057 = vpack.c.bf16 %v2825, %v2817
        %v3058 = vpack.c.bf16 %v2826, %v2818
        %v3059 = vpack.c.bf16 %v2827, %v2819
        %v3060 = vpack.c.bf16 %v2828, %v2820
        %v3061 = vpack.c.bf16 %v2829, %v2821
        %v3062 = vpack.c.bf16 %v2838, %v2830
        %v3063 = vpack.c.bf16 %v2839, %v2831
        %v3064 = vpack.c.bf16 %v2840, %v2832
        %v3065 = vpack.c.bf16 %v2841, %v2833
        %v3066 = vpack.c.bf16 %v2842, %v2834
        %v3067 = vpack.c.bf16 %v2843, %v2835
        %v3068 = vpack.c.bf16 %v2844, %v2836
        %v3069 = vpack.c.bf16 %v2845, %v2837
        %v3070 = vpack.c.bf16 %v2854, %v2846
        %v3071 = vpack.c.bf16 %v2855, %v2847
        %v3072 = vpack.c.bf16 %v2856, %v2848
        %v3073 = vpack.c.bf16 %v2857, %v2849
        %v3074 = vpack.c.bf16 %v2858, %v2850
        %v3075 = vpack.c.bf16 %v2859, %v2851
        %v3076 = vpack.c.bf16 %v2860, %v2852
        %v3077 = vpack.c.bf16 %v2861, %v2853
        %v3078 = vpack.c.bf16 %v2870, %v2862
        %v3079 = vpack.c.bf16 %v2871, %v2863
        %v3080 = vpack.c.bf16 %v2872, %v2864
        %v3081 = vpack.c.bf16 %v2873, %v2865
        %v3082 = vpack.c.bf16 %v2874, %v2866
        %v3083 = vpack.c.bf16 %v2875, %v2867
        %v3084 = vpack.c.bf16 %v2876, %v2868
        %v3085 = vpack.c.bf16 %v2877, %v2869
        %v3086 = vpack.c.bf16 %v2886, %v2878
        %v3087 = vpack.c.bf16 %v2887, %v2879
        %v3088 = vpack.c.bf16 %v2888, %v2880
        %v3089 = vpack.c.bf16 %v2889, %v2881
        %v3090 = vpack.c.bf16 %v2890, %v2882
        %v3091 = vpack.c.bf16 %v2891, %v2883
        %v3092 = vpack.c.bf16 %v2892, %v2884
        %v3093 = vpack.c.bf16 %v2893, %v2885
        %v3094 = vpack.c.bf16 %v2902, %v2894
        %v3095 = vpack.c.bf16 %v2903, %v2895
        %v3096 = vpack.c.bf16 %v2904, %v2896
        %v3097 = vpack.c.bf16 %v2905, %v2897
        %v3098 = vpack.c.bf16 %v2906, %v2898
        %v3099 = vpack.c.bf16 %v2907, %v2899
        %v3100 = vpack.c.bf16 %v2908, %v2900
        %v3101 = vpack.c.bf16 %v2909, %v2901
        %v3102 = vpack.c.bf16 %v2918, %v2910
        %v3103 = vpack.c.bf16 %v2919, %v2911
        %v3104 = vpack.c.bf16 %v2920, %v2912
        %v3105 = vpack.c.bf16 %v2921, %v2913
        %v3106 = vpack.c.bf16 %v2922, %v2914
        %v3107 = vpack.c.bf16 %v2923, %v2915
        %v3108 = vpack.c.bf16 %v2924, %v2916
        %v3109 = vpack.c.bf16 %v2925, %v2917
        %v3110 = vpack.c.bf16 %v2934, %v2926
        %v3111 = vpack.c.bf16 %v2935, %v2927
        %v3112 = vpack.c.bf16 %v2936, %v2928
        %v3113 = vpack.c.bf16 %v2937, %v2929
        %v3114 = vpack.c.bf16 %v2938, %v2930
        %v3115 = vpack.c.bf16 %v2939, %v2931
        %v3116 = vpack.c.bf16 %v2940, %v2932
        %v3117 = vpack.c.bf16 %v2941, %v2933
        %v3118 = vpack.c.bf16 %v2950, %v2942
        %v3119 = vpack.c.bf16 %v2951, %v2943
        %v3120 = vpack.c.bf16 %v2952, %v2944
        %v3121 = vpack.c.bf16 %v2953, %v2945
        %v3122 = vpack.c.bf16 %v2954, %v2946
        %v3123 = vpack.c.bf16 %v2955, %v2947
        %v3124 = vpack.c.bf16 %v2956, %v2948
        %v3125 = vpack.c.bf16 %v2957, %v2949
        %v3126 = vpack.c.bf16 %v2966, %v2958
        %v3127 = vpack.c.bf16 %v2967, %v2959
        %v3128 = vpack.c.bf16 %v2968, %v2960
        %v3129 = vpack.c.bf16 %v2969, %v2961
        %v3130 = vpack.c.bf16 %v2970, %v2962
        %v3131 = vpack.c.bf16 %v2971, %v2963
        %v3132 = vpack.c.bf16 %v2972, %v2964
        %v3133 = vpack.c.bf16 %v2973, %v2965
        %v3134 = vpack.c.bf16 %v2982, %v2974
        %v3135 = vpack.c.bf16 %v2983, %v2975
        %v3136 = vpack.c.bf16 %v2984, %v2976
        %v3137 = vpack.c.bf16 %v2985, %v2977
        %v3138 = vpack.c.bf16 %v2986, %v2978
        %v3139 = vpack.c.bf16 %v2987, %v2979
        %v3140 = vpack.c.bf16 %v2988, %v2980
        %v3141 = vpack.c.bf16 %v2989, %v2981
        %v3142 = vpack.c.bf16 %v2998, %v2990
        %v3143 = vpack.c.bf16 %v2999, %v2991
        %v3144 = vpack.c.bf16 %v3000, %v2992
        %v3145 = vpack.c.bf16 %v3001, %v2993
        %v3146 = vpack.c.bf16 %v3002, %v2994
        %v3147 = vpack.c.bf16 %v3003, %v2995
        %v3148 = vpack.c.bf16 %v3004, %v2996
        %v3149 = vpack.c.bf16 %v3005, %v2997
        %v3150 = vpack.c.bf16 %v3014, %v3006
        %v3151 = vpack.c.bf16 %v3015, %v3007
        %v3152 = vpack.c.bf16 %v3016, %v3008
        %v3153 = vpack.c.bf16 %v3017, %v3009
        %v3154 = vpack.c.bf16 %v3018, %v3010
        %v3155 = vpack.c.bf16 %v3019, %v3011
        %v3156 = vpack.c.bf16 %v3020, %v3012
        %v3157 = vpack.c.bf16 %v3021, %v3013
        %v3158 = vpack.c.bf16 %v3030, %v3022
        %v3159 = vpack.c.bf16 %v3031, %v3023
        %v3160 = vpack.c.bf16 %v3032, %v3024
        %v3161 = vpack.c.bf16 %v3033, %v3025
        %v3162 = vpack.c.bf16 %v3034, %v3026
        %v3163 = vpack.c.bf16 %v3035, %v3027
        %v3164 = vpack.c.bf16 %v3036, %v3028
        %v3165 = vpack.c.bf16 %v3037, %v3029
        %v3166 = vld [vmem:[#allocation5] sm:$0xff]
        %v3167 = vld [vmem:[#allocation5 + $0x8] sm:$0xff]
        %v3168 = vld [vmem:[#allocation5 + $0x10] sm:$0xff]
        %v3169 = vld [vmem:[#allocation5 + $0x18] sm:$0xff]
        %v3170 = vld [vmem:[#allocation5 + $0x20] sm:$0xff]
        %v3171 = vld [vmem:[#allocation5 + $0x28] sm:$0xff]
        %v3172 = vld [vmem:[#allocation5 + $0x30] sm:$0xff]
        %v3173 = vld [vmem:[#allocation5 + $0x38] sm:$0xff]
        %v3174 = vld [vmem:[#allocation5 + $0x40] sm:$0xff]
        %v3175 = vld [vmem:[#allocation5 + $0x48] sm:$0xff]
        %v3176 = vld [vmem:[#allocation5 + $0x50] sm:$0xff]
        %v3177 = vld [vmem:[#allocation5 + $0x58] sm:$0xff]
        %v3178 = vld [vmem:[#allocation5 + $0x60] sm:$0xff]
        %v3179 = vld [vmem:[#allocation5 + $0x68] sm:$0xff]
        %v3180 = vld [vmem:[#allocation5 + $0x70] sm:$0xff]
        %v3181 = vld [vmem:[#allocation5 + $0x78] sm:$0xff]
        %v3182 = vld [vmem:[#allocation5 + $0x80] sm:$0xff]
        %v3183 = vld [vmem:[#allocation5 + $0x88] sm:$0xff]
        %v3184 = vld [vmem:[#allocation5 + $0x90] sm:$0xff]
        %v3185 = vld [vmem:[#allocation5 + $0x98] sm:$0xff]
        %v3186 = vld [vmem:[#allocation5 + $0xa0] sm:$0xff]
        %v3187 = vld [vmem:[#allocation5 + $0xa8] sm:$0xff]
        %v3188 = vld [vmem:[#allocation5 + $0xb0] sm:$0xff]
        %v3189 = vld [vmem:[#allocation5 + $0xb8] sm:$0xff]
        %v3190 = vld [vmem:[#allocation5 + $0xc0] sm:$0xff]
        %v3191 = vld [vmem:[#allocation5 + $0xc8] sm:$0xff]
        %v3192 = vld [vmem:[#allocation5 + $0xd0] sm:$0xff]
        %v3193 = vld [vmem:[#allocation5 + $0xd8] sm:$0xff]
        %v3194 = vld [vmem:[#allocation5 + $0xe0] sm:$0xff]
        %v3195 = vld [vmem:[#allocation5 + $0xe8] sm:$0xff]
        %v3196 = vld [vmem:[#allocation5 + $0xf0] sm:$0xff]
        %v3197 = vld [vmem:[#allocation5 + $0xf8] sm:$0xff]
        %v3198 = vld [vmem:[#allocation5 + $0x100] sm:$0xff]
        %v3199 = vld [vmem:[#allocation5 + $0x108] sm:$0xff]
        %v3200 = vld [vmem:[#allocation5 + $0x110] sm:$0xff]
        %v3201 = vld [vmem:[#allocation5 + $0x118] sm:$0xff]
        %v3202 = vld [vmem:[#allocation5 + $0x120] sm:$0xff]
        %v3203 = vld [vmem:[#allocation5 + $0x128] sm:$0xff]
        %v3204 = vld [vmem:[#allocation5 + $0x130] sm:$0xff]
        %v3205 = vld [vmem:[#allocation5 + $0x138] sm:$0xff]
        %v3206 = vld [vmem:[#allocation5 + $0x140] sm:$0xff]
        %v3207 = vld [vmem:[#allocation5 + $0x148] sm:$0xff]
        %v3208 = vld [vmem:[#allocation5 + $0x150] sm:$0xff]
        %v3209 = vld [vmem:[#allocation5 + $0x158] sm:$0xff]
        %v3210 = vld [vmem:[#allocation5 + $0x160] sm:$0xff]
        %v3211 = vld [vmem:[#allocation5 + $0x168] sm:$0xff]
        %v3212 = vld [vmem:[#allocation5 + $0x170] sm:$0xff]
        %v3213 = vld [vmem:[#allocation5 + $0x178] sm:$0xff]
        %v3214 = vld [vmem:[#allocation5 + $0x180] sm:$0xff]
        %v3215 = vld [vmem:[#allocation5 + $0x188] sm:$0xff]
        %v3216 = vld [vmem:[#allocation5 + $0x190] sm:$0xff]
        %v3217 = vld [vmem:[#allocation5 + $0x198] sm:$0xff]
        %v3218 = vld [vmem:[#allocation5 + $0x1a0] sm:$0xff]
        %v3219 = vld [vmem:[#allocation5 + $0x1a8] sm:$0xff]
        %v3220 = vld [vmem:[#allocation5 + $0x1b0] sm:$0xff]
        %v3221 = vld [vmem:[#allocation5 + $0x1b8] sm:$0xff]
        %v3222 = vld [vmem:[#allocation5 + $0x1c0] sm:$0xff]
        %v3223 = vld [vmem:[#allocation5 + $0x1c8] sm:$0xff]
        %v3224 = vld [vmem:[#allocation5 + $0x1d0] sm:$0xff]
        %v3225 = vld [vmem:[#allocation5 + $0x1d8] sm:$0xff]
        %v3226 = vld [vmem:[#allocation5 + $0x1e0] sm:$0xff]
        %v3227 = vld [vmem:[#allocation5 + $0x1e8] sm:$0xff]
        %v3228 = vld [vmem:[#allocation5 + $0x1f0] sm:$0xff]
        %v3229 = vld [vmem:[#allocation5 + $0x1f8] sm:$0xff]
        %v3230 = vld [vmem:[#allocation5 + $0x200] sm:$0xff]
        %v3231 = vld [vmem:[#allocation5 + $0x208] sm:$0xff]
        %v3232 = vld [vmem:[#allocation5 + $0x210] sm:$0xff]
        %v3233 = vld [vmem:[#allocation5 + $0x218] sm:$0xff]
        %v3234 = vld [vmem:[#allocation5 + $0x220] sm:$0xff]
        %v3235 = vld [vmem:[#allocation5 + $0x228] sm:$0xff]
        %v3236 = vld [vmem:[#allocation5 + $0x230] sm:$0xff]
        %v3237 = vld [vmem:[#allocation5 + $0x238] sm:$0xff]
        %v3238 = vld [vmem:[#allocation5 + $0x240] sm:$0xff]
        %v3239 = vld [vmem:[#allocation5 + $0x248] sm:$0xff]
        %v3240 = vld [vmem:[#allocation5 + $0x250] sm:$0xff]
        %v3241 = vld [vmem:[#allocation5 + $0x258] sm:$0xff]
        %v3242 = vld [vmem:[#allocation5 + $0x260] sm:$0xff]
        %v3243 = vld [vmem:[#allocation5 + $0x268] sm:$0xff]
        %v3244 = vld [vmem:[#allocation5 + $0x270] sm:$0xff]
        %v3245 = vld [vmem:[#allocation5 + $0x278] sm:$0xff]
        %v3246 = vld [vmem:[#allocation5 + $0x280] sm:$0xff]
        %v3247 = vld [vmem:[#allocation5 + $0x288] sm:$0xff]
        %v3248 = vld [vmem:[#allocation5 + $0x290] sm:$0xff]
        %v3249 = vld [vmem:[#allocation5 + $0x298] sm:$0xff]
        %v3250 = vld [vmem:[#allocation5 + $0x2a0] sm:$0xff]
        %v3251 = vld [vmem:[#allocation5 + $0x2a8] sm:$0xff]
        %v3252 = vld [vmem:[#allocation5 + $0x2b0] sm:$0xff]
        %v3253 = vld [vmem:[#allocation5 + $0x2b8] sm:$0xff]
        %v3254 = vld [vmem:[#allocation5 + $0x2c0] sm:$0xff]
        %v3255 = vld [vmem:[#allocation5 + $0x2c8] sm:$0xff]
        %v3256 = vld [vmem:[#allocation5 + $0x2d0] sm:$0xff]
        %v3257 = vld [vmem:[#allocation5 + $0x2d8] sm:$0xff]
        %v3258 = vld [vmem:[#allocation5 + $0x2e0] sm:$0xff]
        %v3259 = vld [vmem:[#allocation5 + $0x2e8] sm:$0xff]
        %v3260 = vld [vmem:[#allocation5 + $0x2f0] sm:$0xff]
        %v3261 = vld [vmem:[#allocation5 + $0x2f8] sm:$0xff]
        %v3262 = vld [vmem:[#allocation5 + $0x300] sm:$0xff]
        %v3263 = vld [vmem:[#allocation5 + $0x308] sm:$0xff]
        %v3264 = vld [vmem:[#allocation5 + $0x310] sm:$0xff]
        %v3265 = vld [vmem:[#allocation5 + $0x318] sm:$0xff]
        %v3266 = vld [vmem:[#allocation5 + $0x320] sm:$0xff]
        %v3267 = vld [vmem:[#allocation5 + $0x328] sm:$0xff]
        %v3268 = vld [vmem:[#allocation5 + $0x330] sm:$0xff]
        %v3269 = vld [vmem:[#allocation5 + $0x338] sm:$0xff]
        %v3270 = vld [vmem:[#allocation5 + $0x340] sm:$0xff]
        %v3271 = vld [vmem:[#allocation5 + $0x348] sm:$0xff]
        %v3272 = vld [vmem:[#allocation5 + $0x350] sm:$0xff]
        %v3273 = vld [vmem:[#allocation5 + $0x358] sm:$0xff]
        %v3274 = vld [vmem:[#allocation5 + $0x360] sm:$0xff]
        %v3275 = vld [vmem:[#allocation5 + $0x368] sm:$0xff]
        %v3276 = vld [vmem:[#allocation5 + $0x370] sm:$0xff]
        %v3277 = vld [vmem:[#allocation5 + $0x378] sm:$0xff]
        %v3278 = vld [vmem:[#allocation5 + $0x380] sm:$0xff]
        %v3279 = vld [vmem:[#allocation5 + $0x388] sm:$0xff]
        %v3280 = vld [vmem:[#allocation5 + $0x390] sm:$0xff]
        %v3281 = vld [vmem:[#allocation5 + $0x398] sm:$0xff]
        %v3282 = vld [vmem:[#allocation5 + $0x3a0] sm:$0xff]
        %v3283 = vld [vmem:[#allocation5 + $0x3a8] sm:$0xff]
        %v3284 = vld [vmem:[#allocation5 + $0x3b0] sm:$0xff]
        %v3285 = vld [vmem:[#allocation5 + $0x3b8] sm:$0xff]
        %v3286 = vld [vmem:[#allocation5 + $0x3c0] sm:$0xff]
        %v3287 = vld [vmem:[#allocation5 + $0x3c8] sm:$0xff]
        %v3288 = vld [vmem:[#allocation5 + $0x3d0] sm:$0xff]
        %v3289 = vld [vmem:[#allocation5 + $0x3d8] sm:$0xff]
        %v3290 = vld [vmem:[#allocation5 + $0x3e0] sm:$0xff]
        %v3291 = vld [vmem:[#allocation5 + $0x3e8] sm:$0xff]
        %v3292 = vld [vmem:[#allocation5 + $0x3f0] sm:$0xff]
        %v3293 = vld [vmem:[#allocation5 + $0x3f8] sm:$0xff]
        %v3294 = vld [vmem:[%s8] sm:$0x3]
        %v3296 = vlaneseq
        %v3297 = vshrl.u32 %v3296, 7
        %v3298 = vsub.s32 0, %v3297
        %v3299 = vrot.slane %v3294, %v3298
        %v3300 = vlaneseq
        %v3301 = vshrl.u32 %v3300, 7
        %v3302 = vsub.s32 1, %v3301
        %v3303 = vrot.slane %v3294, %v3302
        %v3434 = vunpack.c.l.b16 %v3166
        %v3435 = vunpack.c.h.b16 %v3166
        %v3436 = vunpack.c.l.b16 %v3167
        %v3437 = vunpack.c.h.b16 %v3167
        %v3438 = vunpack.c.l.b16 %v3168
        %v3439 = vunpack.c.h.b16 %v3168
        %v3440 = vunpack.c.l.b16 %v3169
        %v3441 = vunpack.c.h.b16 %v3169
        %v3442 = vunpack.c.l.b16 %v3170
        %v3443 = vunpack.c.h.b16 %v3170
        %v3444 = vunpack.c.l.b16 %v3171
        %v3445 = vunpack.c.h.b16 %v3171
        %v3446 = vunpack.c.l.b16 %v3172
        %v3447 = vunpack.c.h.b16 %v3172
        %v3448 = vunpack.c.l.b16 %v3173
        %v3449 = vunpack.c.h.b16 %v3173
        %v3450 = vunpack.c.l.b16 %v3174
        %v3451 = vunpack.c.h.b16 %v3174
        %v3452 = vunpack.c.l.b16 %v3175
        %v3453 = vunpack.c.h.b16 %v3175
        %v3454 = vunpack.c.l.b16 %v3176
        %v3455 = vunpack.c.h.b16 %v3176
        %v3456 = vunpack.c.l.b16 %v3177
        %v3457 = vunpack.c.h.b16 %v3177
        %v3458 = vunpack.c.l.b16 %v3178
        %v3459 = vunpack.c.h.b16 %v3178
        %v3460 = vunpack.c.l.b16 %v3179
        %v3461 = vunpack.c.h.b16 %v3179
        %v3462 = vunpack.c.l.b16 %v3180
        %v3463 = vunpack.c.h.b16 %v3180
        %v3464 = vunpack.c.l.b16 %v3181
        %v3465 = vunpack.c.h.b16 %v3181
        %v3466 = vunpack.c.l.b16 %v3182
        %v3467 = vunpack.c.h.b16 %v3182
        %v3468 = vunpack.c.l.b16 %v3183
        %v3469 = vunpack.c.h.b16 %v3183
        %v3470 = vunpack.c.l.b16 %v3184
        %v3471 = vunpack.c.h.b16 %v3184
        %v3472 = vunpack.c.l.b16 %v3185
        %v3473 = vunpack.c.h.b16 %v3185
        %v3474 = vunpack.c.l.b16 %v3186
        %v3475 = vunpack.c.h.b16 %v3186
        %v3476 = vunpack.c.l.b16 %v3187
        %v3477 = vunpack.c.h.b16 %v3187
        %v3478 = vunpack.c.l.b16 %v3188
        %v3479 = vunpack.c.h.b16 %v3188
        %v3480 = vunpack.c.l.b16 %v3189
        %v3481 = vunpack.c.h.b16 %v3189
        %v3482 = vunpack.c.l.b16 %v3190
        %v3483 = vunpack.c.h.b16 %v3190
        %v3484 = vunpack.c.l.b16 %v3191
        %v3485 = vunpack.c.h.b16 %v3191
        %v3486 = vunpack.c.l.b16 %v3192
        %v3487 = vunpack.c.h.b16 %v3192
        %v3488 = vunpack.c.l.b16 %v3193
        %v3489 = vunpack.c.h.b16 %v3193
        %v3490 = vunpack.c.l.b16 %v3194
        %v3491 = vunpack.c.h.b16 %v3194
        %v3492 = vunpack.c.l.b16 %v3195
        %v3493 = vunpack.c.h.b16 %v3195
        %v3494 = vunpack.c.l.b16 %v3196
        %v3495 = vunpack.c.h.b16 %v3196
        %v3496 = vunpack.c.l.b16 %v3197
        %v3497 = vunpack.c.h.b16 %v3197
        %v3498 = vunpack.c.l.b16 %v3198
        %v3499 = vunpack.c.h.b16 %v3198
        %v3500 = vunpack.c.l.b16 %v3199
        %v3501 = vunpack.c.h.b16 %v3199
        %v3502 = vunpack.c.l.b16 %v3200
        %v3503 = vunpack.c.h.b16 %v3200
        %v3504 = vunpack.c.l.b16 %v3201
        %v3505 = vunpack.c.h.b16 %v3201
        %v3506 = vunpack.c.l.b16 %v3202
        %v3507 = vunpack.c.h.b16 %v3202
        %v3508 = vunpack.c.l.b16 %v3203
        %v3509 = vunpack.c.h.b16 %v3203
        %v3510 = vunpack.c.l.b16 %v3204
        %v3511 = vunpack.c.h.b16 %v3204
        %v3512 = vunpack.c.l.b16 %v3205
        %v3513 = vunpack.c.h.b16 %v3205
        %v3514 = vunpack.c.l.b16 %v3206
        %v3515 = vunpack.c.h.b16 %v3206
        %v3516 = vunpack.c.l.b16 %v3207
        %v3517 = vunpack.c.h.b16 %v3207
        %v3518 = vunpack.c.l.b16 %v3208
        %v3519 = vunpack.c.h.b16 %v3208
        %v3520 = vunpack.c.l.b16 %v3209
        %v3521 = vunpack.c.h.b16 %v3209
        %v3522 = vunpack.c.l.b16 %v3210
        %v3523 = vunpack.c.h.b16 %v3210
        %v3524 = vunpack.c.l.b16 %v3211
        %v3525 = vunpack.c.h.b16 %v3211
        %v3526 = vunpack.c.l.b16 %v3212
        %v3527 = vunpack.c.h.b16 %v3212
        %v3528 = vunpack.c.l.b16 %v3213
        %v3529 = vunpack.c.h.b16 %v3213
        %v3530 = vunpack.c.l.b16 %v3214
        %v3531 = vunpack.c.h.b16 %v3214
        %v3532 = vunpack.c.l.b16 %v3215
        %v3533 = vunpack.c.h.b16 %v3215
        %v3534 = vunpack.c.l.b16 %v3216
        %v3535 = vunpack.c.h.b16 %v3216
        %v3536 = vunpack.c.l.b16 %v3217
        %v3537 = vunpack.c.h.b16 %v3217
        %v3538 = vunpack.c.l.b16 %v3218
        %v3539 = vunpack.c.h.b16 %v3218
        %v3540 = vunpack.c.l.b16 %v3219
        %v3541 = vunpack.c.h.b16 %v3219
        %v3542 = vunpack.c.l.b16 %v3220
        %v3543 = vunpack.c.h.b16 %v3220
        %v3544 = vunpack.c.l.b16 %v3221
        %v3545 = vunpack.c.h.b16 %v3221
        %v3546 = vunpack.c.l.b16 %v3222
        %v3547 = vunpack.c.h.b16 %v3222
        %v3548 = vunpack.c.l.b16 %v3223
        %v3549 = vunpack.c.h.b16 %v3223
        %v3550 = vunpack.c.l.b16 %v3224
        %v3551 = vunpack.c.h.b16 %v3224
        %v3552 = vunpack.c.l.b16 %v3225
        %v3553 = vunpack.c.h.b16 %v3225
        %v3554 = vunpack.c.l.b16 %v3226
        %v3555 = vunpack.c.h.b16 %v3226
        %v3556 = vunpack.c.l.b16 %v3227
        %v3557 = vunpack.c.h.b16 %v3227
        %v3558 = vunpack.c.l.b16 %v3228
        %v3559 = vunpack.c.h.b16 %v3228
        %v3560 = vunpack.c.l.b16 %v3229
        %v3561 = vunpack.c.h.b16 %v3229
        %v3562 = vunpack.c.l.b16 %v3230
        %v3563 = vunpack.c.h.b16 %v3230
        %v3564 = vunpack.c.l.b16 %v3231
        %v3565 = vunpack.c.h.b16 %v3231
        %v3566 = vunpack.c.l.b16 %v3232
        %v3567 = vunpack.c.h.b16 %v3232
        %v3568 = vunpack.c.l.b16 %v3233
        %v3569 = vunpack.c.h.b16 %v3233
        %v3570 = vunpack.c.l.b16 %v3234
        %v3571 = vunpack.c.h.b16 %v3234
        %v3572 = vunpack.c.l.b16 %v3235
        %v3573 = vunpack.c.h.b16 %v3235
        %v3574 = vunpack.c.l.b16 %v3236
        %v3575 = vunpack.c.h.b16 %v3236
        %v3576 = vunpack.c.l.b16 %v3237
        %v3577 = vunpack.c.h.b16 %v3237
        %v3578 = vunpack.c.l.b16 %v3238
        %v3579 = vunpack.c.h.b16 %v3238
        %v3580 = vunpack.c.l.b16 %v3239
        %v3581 = vunpack.c.h.b16 %v3239
        %v3582 = vunpack.c.l.b16 %v3240
        %v3583 = vunpack.c.h.b16 %v3240
        %v3584 = vunpack.c.l.b16 %v3241
        %v3585 = vunpack.c.h.b16 %v3241
        %v3586 = vunpack.c.l.b16 %v3242
        %v3587 = vunpack.c.h.b16 %v3242
        %v3588 = vunpack.c.l.b16 %v3243
        %v3589 = vunpack.c.h.b16 %v3243
        %v3590 = vunpack.c.l.b16 %v3244
        %v3591 = vunpack.c.h.b16 %v3244
        %v3592 = vunpack.c.l.b16 %v3245
        %v3593 = vunpack.c.h.b16 %v3245
        %v3594 = vunpack.c.l.b16 %v3246
        %v3595 = vunpack.c.h.b16 %v3246
        %v3596 = vunpack.c.l.b16 %v3247
        %v3597 = vunpack.c.h.b16 %v3247
        %v3598 = vunpack.c.l.b16 %v3248
        %v3599 = vunpack.c.h.b16 %v3248
        %v3600 = vunpack.c.l.b16 %v3249
        %v3601 = vunpack.c.h.b16 %v3249
        %v3602 = vunpack.c.l.b16 %v3250
        %v3603 = vunpack.c.h.b16 %v3250
        %v3604 = vunpack.c.l.b16 %v3251
        %v3605 = vunpack.c.h.b16 %v3251
        %v3606 = vunpack.c.l.b16 %v3252
        %v3607 = vunpack.c.h.b16 %v3252
        %v3608 = vunpack.c.l.b16 %v3253
        %v3609 = vunpack.c.h.b16 %v3253
        %v3610 = vunpack.c.l.b16 %v3254
        %v3611 = vunpack.c.h.b16 %v3254
        %v3612 = vunpack.c.l.b16 %v3255
        %v3613 = vunpack.c.h.b16 %v3255
        %v3614 = vunpack.c.l.b16 %v3256
        %v3615 = vunpack.c.h.b16 %v3256
        %v3616 = vunpack.c.l.b16 %v3257
        %v3617 = vunpack.c.h.b16 %v3257
        %v3618 = vunpack.c.l.b16 %v3258
        %v3619 = vunpack.c.h.b16 %v3258
        %v3620 = vunpack.c.l.b16 %v3259
        %v3621 = vunpack.c.h.b16 %v3259
        %v3622 = vunpack.c.l.b16 %v3260
        %v3623 = vunpack.c.h.b16 %v3260
        %v3624 = vunpack.c.l.b16 %v3261
        %v3625 = vunpack.c.h.b16 %v3261
        %v3626 = vunpack.c.l.b16 %v3262
        %v3627 = vunpack.c.h.b16 %v3262
        %v3628 = vunpack.c.l.b16 %v3263
        %v3629 = vunpack.c.h.b16 %v3263
        %v3630 = vunpack.c.l.b16 %v3264
        %v3631 = vunpack.c.h.b16 %v3264
        %v3632 = vunpack.c.l.b16 %v3265
        %v3633 = vunpack.c.h.b16 %v3265
        %v3634 = vunpack.c.l.b16 %v3266
        %v3635 = vunpack.c.h.b16 %v3266
        %v3636 = vunpack.c.l.b16 %v3267
        %v3637 = vunpack.c.h.b16 %v3267
        %v3638 = vunpack.c.l.b16 %v3268
        %v3639 = vunpack.c.h.b16 %v3268
        %v3640 = vunpack.c.l.b16 %v3269
        %v3641 = vunpack.c.h.b16 %v3269
        %v3642 = vunpack.c.l.b16 %v3270
        %v3643 = vunpack.c.h.b16 %v3270
        %v3644 = vunpack.c.l.b16 %v3271
        %v3645 = vunpack.c.h.b16 %v3271
        %v3646 = vunpack.c.l.b16 %v3272
        %v3647 = vunpack.c.h.b16 %v3272
        %v3648 = vunpack.c.l.b16 %v3273
        %v3649 = vunpack.c.h.b16 %v3273
        %v3650 = vunpack.c.l.b16 %v3274
        %v3651 = vunpack.c.h.b16 %v3274
        %v3652 = vunpack.c.l.b16 %v3275
        %v3653 = vunpack.c.h.b16 %v3275
        %v3654 = vunpack.c.l.b16 %v3276
        %v3655 = vunpack.c.h.b16 %v3276
        %v3656 = vunpack.c.l.b16 %v3277
        %v3657 = vunpack.c.h.b16 %v3277
        %v3658 = vunpack.c.l.b16 %v3278
        %v3659 = vunpack.c.h.b16 %v3278
        %v3660 = vunpack.c.l.b16 %v3279
        %v3661 = vunpack.c.h.b16 %v3279
        %v3662 = vunpack.c.l.b16 %v3280
        %v3663 = vunpack.c.h.b16 %v3280
        %v3664 = vunpack.c.l.b16 %v3281
        %v3665 = vunpack.c.h.b16 %v3281
        %v3666 = vunpack.c.l.b16 %v3282
        %v3667 = vunpack.c.h.b16 %v3282
        %v3668 = vunpack.c.l.b16 %v3283
        %v3669 = vunpack.c.h.b16 %v3283
        %v3670 = vunpack.c.l.b16 %v3284
        %v3671 = vunpack.c.h.b16 %v3284
        %v3672 = vunpack.c.l.b16 %v3285
        %v3673 = vunpack.c.h.b16 %v3285
        %v3674 = vunpack.c.l.b16 %v3286
        %v3675 = vunpack.c.h.b16 %v3286
        %v3676 = vunpack.c.l.b16 %v3287
        %v3677 = vunpack.c.h.b16 %v3287
        %v3678 = vunpack.c.l.b16 %v3288
        %v3679 = vunpack.c.h.b16 %v3288
        %v3680 = vunpack.c.l.b16 %v3289
        %v3681 = vunpack.c.h.b16 %v3289
        %v3682 = vunpack.c.l.b16 %v3290
        %v3683 = vunpack.c.h.b16 %v3290
        %v3684 = vunpack.c.l.b16 %v3291
        %v3685 = vunpack.c.h.b16 %v3291
        %v3686 = vunpack.c.l.b16 %v3292
        %v3687 = vunpack.c.h.b16 %v3292
        %v3688 = vunpack.c.l.b16 %v3293
        %v3689 = vunpack.c.h.b16 %v3293
        %v3690 = vpack.c.b16 %v3436, %v3434
        %v3691 = vpack.c.b16 %v3437, %v3435
        %v3692 = vpack.c.b16 %v3440, %v3438
        %v3693 = vpack.c.b16 %v3441, %v3439
        %v3694 = vpack.c.b16 %v3444, %v3442
        %v3695 = vpack.c.b16 %v3445, %v3443
        %v3696 = vpack.c.b16 %v3448, %v3446
        %v3697 = vpack.c.b16 %v3449, %v3447
        %v3698 = vpack.c.b16 %v3452, %v3450
        %v3699 = vpack.c.b16 %v3453, %v3451
        %v3700 = vpack.c.b16 %v3456, %v3454
        %v3701 = vpack.c.b16 %v3457, %v3455
        %v3702 = vpack.c.b16 %v3460, %v3458
        %v3703 = vpack.c.b16 %v3461, %v3459
        %v3704 = vpack.c.b16 %v3464, %v3462
        %v3705 = vpack.c.b16 %v3465, %v3463
        %v3706 = vpack.c.b16 %v3468, %v3466
        %v3707 = vpack.c.b16 %v3469, %v3467
        %v3708 = vpack.c.b16 %v3472, %v3470
        %v3709 = vpack.c.b16 %v3473, %v3471
        %v3710 = vpack.c.b16 %v3476, %v3474
        %v3711 = vpack.c.b16 %v3477, %v3475
        %v3712 = vpack.c.b16 %v3480, %v3478
        %v3713 = vpack.c.b16 %v3481, %v3479
        %v3714 = vpack.c.b16 %v3484, %v3482
        %v3715 = vpack.c.b16 %v3485, %v3483
        %v3716 = vpack.c.b16 %v3488, %v3486
        %v3717 = vpack.c.b16 %v3489, %v3487
        %v3718 = vpack.c.b16 %v3492, %v3490
        %v3719 = vpack.c.b16 %v3493, %v3491
        %v3720 = vpack.c.b16 %v3496, %v3494
        %v3721 = vpack.c.b16 %v3497, %v3495
        %v3722 = vpack.c.b16 %v3500, %v3498
        %v3723 = vpack.c.b16 %v3501, %v3499
        %v3724 = vpack.c.b16 %v3504, %v3502
        %v3725 = vpack.c.b16 %v3505, %v3503
        %v3726 = vpack.c.b16 %v3508, %v3506
        %v3727 = vpack.c.b16 %v3509, %v3507
        %v3728 = vpack.c.b16 %v3512, %v3510
        %v3729 = vpack.c.b16 %v3513, %v3511
        %v3730 = vpack.c.b16 %v3516, %v3514
        %v3731 = vpack.c.b16 %v3517, %v3515
        %v3732 = vpack.c.b16 %v3520, %v3518
        %v3733 = vpack.c.b16 %v3521, %v3519
        %v3734 = vpack.c.b16 %v3524, %v3522
        %v3735 = vpack.c.b16 %v3525, %v3523
        %v3736 = vpack.c.b16 %v3528, %v3526
        %v3737 = vpack.c.b16 %v3529, %v3527
        %v3738 = vpack.c.b16 %v3532, %v3530
        %v3739 = vpack.c.b16 %v3533, %v3531
        %v3740 = vpack.c.b16 %v3536, %v3534
        %v3741 = vpack.c.b16 %v3537, %v3535
        %v3742 = vpack.c.b16 %v3540, %v3538
        %v3743 = vpack.c.b16 %v3541, %v3539
        %v3744 = vpack.c.b16 %v3544, %v3542
        %v3745 = vpack.c.b16 %v3545, %v3543
        %v3746 = vpack.c.b16 %v3548, %v3546
        %v3747 = vpack.c.b16 %v3549, %v3547
        %v3748 = vpack.c.b16 %v3552, %v3550
        %v3749 = vpack.c.b16 %v3553, %v3551
        %v3750 = vpack.c.b16 %v3556, %v3554
        %v3751 = vpack.c.b16 %v3557, %v3555
        %v3752 = vpack.c.b16 %v3560, %v3558
        %v3753 = vpack.c.b16 %v3561, %v3559
        %v3754 = vpack.c.b16 %v3564, %v3562
        %v3755 = vpack.c.b16 %v3565, %v3563
        %v3756 = vpack.c.b16 %v3568, %v3566
        %v3757 = vpack.c.b16 %v3569, %v3567
        %v3758 = vpack.c.b16 %v3572, %v3570
        %v3759 = vpack.c.b16 %v3573, %v3571
        %v3760 = vpack.c.b16 %v3576, %v3574
        %v3761 = vpack.c.b16 %v3577, %v3575
        %v3762 = vpack.c.b16 %v3580, %v3578
        %v3763 = vpack.c.b16 %v3581, %v3579
        %v3764 = vpack.c.b16 %v3584, %v3582
        %v3765 = vpack.c.b16 %v3585, %v3583
        %v3766 = vpack.c.b16 %v3588, %v3586
        %v3767 = vpack.c.b16 %v3589, %v3587
        %v3768 = vpack.c.b16 %v3592, %v3590
        %v3769 = vpack.c.b16 %v3593, %v3591
        %v3770 = vpack.c.b16 %v3596, %v3594
        %v3771 = vpack.c.b16 %v3597, %v3595
        %v3772 = vpack.c.b16 %v3600, %v3598
        %v3773 = vpack.c.b16 %v3601, %v3599
        %v3774 = vpack.c.b16 %v3604, %v3602
        %v3775 = vpack.c.b16 %v3605, %v3603
        %v3776 = vpack.c.b16 %v3608, %v3606
        %v3777 = vpack.c.b16 %v3609, %v3607
        %v3778 = vpack.c.b16 %v3612, %v3610
        %v3779 = vpack.c.b16 %v3613, %v3611
        %v3780 = vpack.c.b16 %v3616, %v3614
        %v3781 = vpack.c.b16 %v3617, %v3615
        %v3782 = vpack.c.b16 %v3620, %v3618
        %v3783 = vpack.c.b16 %v3621, %v3619
        %v3784 = vpack.c.b16 %v3624, %v3622
        %v3785 = vpack.c.b16 %v3625, %v3623
        %v3786 = vpack.c.b16 %v3628, %v3626
        %v3787 = vpack.c.b16 %v3629, %v3627
        %v3788 = vpack.c.b16 %v3632, %v3630
        %v3789 = vpack.c.b16 %v3633, %v3631
        %v3790 = vpack.c.b16 %v3636, %v3634
        %v3791 = vpack.c.b16 %v3637, %v3635
        %v3792 = vpack.c.b16 %v3640, %v3638
        %v3793 = vpack.c.b16 %v3641, %v3639
        %v3794 = vpack.c.b16 %v3644, %v3642
        %v3795 = vpack.c.b16 %v3645, %v3643
        %v3796 = vpack.c.b16 %v3648, %v3646
        %v3797 = vpack.c.b16 %v3649, %v3647
        %v3798 = vpack.c.b16 %v3652, %v3650
        %v3799 = vpack.c.b16 %v3653, %v3651
        %v3800 = vpack.c.b16 %v3656, %v3654
        %v3801 = vpack.c.b16 %v3657, %v3655
        %v3802 = vpack.c.b16 %v3660, %v3658
        %v3803 = vpack.c.b16 %v3661, %v3659
        %v3804 = vpack.c.b16 %v3664, %v3662
        %v3805 = vpack.c.b16 %v3665, %v3663
        %v3806 = vpack.c.b16 %v3668, %v3666
        %v3807 = vpack.c.b16 %v3669, %v3667
        %v3808 = vpack.c.b16 %v3672, %v3670
        %v3809 = vpack.c.b16 %v3673, %v3671
        %v3810 = vpack.c.b16 %v3676, %v3674
        %v3811 = vpack.c.b16 %v3677, %v3675
        %v3812 = vpack.c.b16 %v3680, %v3678
        %v3813 = vpack.c.b16 %v3681, %v3679
        %v3814 = vpack.c.b16 %v3684, %v3682
        %v3815 = vpack.c.b16 %v3685, %v3683
        %v3816 = vpack.c.b16 %v3688, %v3686
        %v3817 = vpack.c.b16 %v3689, %v3687
        %3946 = vmatprep.subr.bf16.mxu0 %v3705
        %3947 = vmatpush1.bf16.msra.mxu0 %v3704
        %3948 = vmatprep.subr.bf16.mxu0 %v3703
        %3949 = vmatpush1.bf16.msra.mxu0 %v3702
        %3950 = vmatprep.subr.bf16.mxu0 %v3701
        %3951 = vmatpush1.bf16.msra.mxu0 %v3700
        %3952 = vmatprep.subr.bf16.mxu0 %v3699
        %3953 = vmatpush1.bf16.msra.mxu0 %v3698
        %3954 = vmatprep.subr.bf16.mxu0 %v3697
        %3955 = vmatpush1.bf16.msra.mxu0 %v3696
        %3956 = vmatprep.subr.bf16.mxu0 %v3695
        %3957 = vmatpush1.bf16.msra.mxu0 %v3694
        %3958 = vmatprep.subr.bf16.mxu0 %v3693
        %3959 = vmatpush1.bf16.msra.mxu0 %v3692
        %3960 = vmatprep.subr.bf16.mxu0 %v3691
        %3961 = vmatpush1.bf16.msra.mxu0 %v3690
        %3962 = vmatprep.subr.bf16.mxu0 %v3721
        %3963 = vmatpush2.bf16.msra.mxu0 %v3720
        %3964 = vmatprep.subr.bf16.mxu0 %v3719
        %3965 = vmatpush2.bf16.msra.mxu0 %v3718
        %3966 = vmatprep.subr.bf16.mxu0 %v3717
        %3967 = vmatpush2.bf16.msra.mxu0 %v3716
        %3968 = vmatprep.subr.bf16.mxu0 %v3715
        %3969 = vmatpush2.bf16.msra.mxu0 %v3714
        %3970 = vmatprep.subr.bf16.mxu0 %v3713
        %3971 = vmatpush2.bf16.msra.mxu0 %v3712
        %3972 = vmatprep.subr.bf16.mxu0 %v3711
        %3973 = vmatpush2.bf16.msra.mxu0 %v3710
        %3974 = vmatprep.subr.bf16.mxu0 %v3709
        %3975 = vmatpush2.bf16.msra.mxu0 %v3708
        %3976 = vmatprep.subr.bf16.mxu0 %v3707
        %3977 = vmatpush2.bf16.msra.mxu0 %v3706
        %3978 = vmatprep.mubr.bf16.mxu0 %v3039
        %3979 = vmatmul.mubr.bf16.gmra.mxu0 %v3038
        %v3980 = vpop.f32.mrf.mxu0
        %v3981 = vadd.f32 %v3299, %v3980
        %v3982 = vpop.f32.mrf.mxu0
        %v3983 = vadd.f32 %v3303, %v3982
        %v3984 = vpop.f32.mrf.mxu0
        %v3985 = vadd.f32 %v3299, %v3984
        %v3986 = vpop.f32.mrf.mxu0
        %v3987 = vadd.f32 %v3303, %v3986
        %3988 = vmatprep.mubr.bf16.mxu0 %v3047
        %3989 = vmatmul.mubr.bf16.gmra.mxu0 %v3046
        %v3990 = vpop.f32.mrf.mxu0
        %v3991 = vadd.f32 %v3299, %v3990
        %v3992 = vpop.f32.mrf.mxu0
        %v3993 = vadd.f32 %v3303, %v3992
        %v3994 = vpop.f32.mrf.mxu0
        %v3995 = vadd.f32 %v3299, %v3994
        %v3996 = vpop.f32.mrf.mxu0
        %v3997 = vadd.f32 %v3303, %v3996
        %3998 = vmatprep.mubr.bf16.mxu0 %v3055
        %3999 = vmatmul.mubr.bf16.gmra.mxu0 %v3054
        %v4000 = vpop.f32.mrf.mxu0
        %v4001 = vadd.f32 %v3299, %v4000
        %v4002 = vpop.f32.mrf.mxu0
        %v4003 = vadd.f32 %v3303, %v4002
        %v4004 = vpop.f32.mrf.mxu0
        %v4005 = vadd.f32 %v3299, %v4004
        %v4006 = vpop.f32.mrf.mxu0
        %v4007 = vadd.f32 %v3303, %v4006
        %4008 = vmatprep.mubr.bf16.mxu0 %v3063
        %4009 = vmatmul.mubr.bf16.gmra.mxu0 %v3062
        %v4010 = vpop.f32.mrf.mxu0
        %v4011 = vadd.f32 %v3299, %v4010
        %v4012 = vpop.f32.mrf.mxu0
        %v4013 = vadd.f32 %v3303, %v4012
        %v4014 = vpop.f32.mrf.mxu0
        %v4015 = vadd.f32 %v3299, %v4014
        %v4016 = vpop.f32.mrf.mxu0
        %v4017 = vadd.f32 %v3303, %v4016
        %4018 = vmatprep.mubr.bf16.mxu0 %v3071
        %4019 = vmatmul.mubr.bf16.gmra.mxu0 %v3070
        %v4020 = vpop.f32.mrf.mxu0
        %v4021 = vadd.f32 %v3299, %v4020
        %v4022 = vpop.f32.mrf.mxu0
        %v4023 = vadd.f32 %v3303, %v4022
        %v4024 = vpop.f32.mrf.mxu0
        %v4025 = vadd.f32 %v3299, %v4024
        %v4026 = vpop.f32.mrf.mxu0
        %v4027 = vadd.f32 %v3303, %v4026
        %4028 = vmatprep.mubr.bf16.mxu0 %v3079
        %4029 = vmatmul.mubr.bf16.gmra.mxu0 %v3078
        %v4030 = vpop.f32.mrf.mxu0
        %v4031 = vadd.f32 %v3299, %v4030
        %v4032 = vpop.f32.mrf.mxu0
        %v4033 = vadd.f32 %v3303, %v4032
        %v4034 = vpop.f32.mrf.mxu0
        %v4035 = vadd.f32 %v3299, %v4034
        %v4036 = vpop.f32.mrf.mxu0
        %v4037 = vadd.f32 %v3303, %v4036
        %4038 = vmatprep.mubr.bf16.mxu0 %v3087
        %4039 = vmatmul.mubr.bf16.gmra.mxu0 %v3086
        %v4040 = vpop.f32.mrf.mxu0
        %v4041 = vadd.f32 %v3299, %v4040
        %v4042 = vpop.f32.mrf.mxu0
        %v4043 = vadd.f32 %v3303, %v4042
        %v4044 = vpop.f32.mrf.mxu0
        %v4045 = vadd.f32 %v3299, %v4044
        %v4046 = vpop.f32.mrf.mxu0
        %v4047 = vadd.f32 %v3303, %v4046
        %4048 = vmatprep.mubr.bf16.mxu0 %v3095
        %4049 = vmatmul.mubr.bf16.gmra.mxu0 %v3094
        %v4050 = vpop.f32.mrf.mxu0
        %v4051 = vadd.f32 %v3299, %v4050
        %v4052 = vpop.f32.mrf.mxu0
        %v4053 = vadd.f32 %v3303, %v4052
        %v4054 = vpop.f32.mrf.mxu0
        %v4055 = vadd.f32 %v3299, %v4054
        %v4056 = vpop.f32.mrf.mxu0
        %v4057 = vadd.f32 %v3303, %v4056
        %4058 = vmatprep.mubr.bf16.mxu0 %v3103
        %4059 = vmatmul.mubr.bf16.gmra.mxu0 %v3102
        %v4060 = vpop.f32.mrf.mxu0
        %v4061 = vadd.f32 %v3299, %v4060
        %v4062 = vpop.f32.mrf.mxu0
        %v4063 = vadd.f32 %v3303, %v4062
        %v4064 = vpop.f32.mrf.mxu0
        %v4065 = vadd.f32 %v3299, %v4064
        %v4066 = vpop.f32.mrf.mxu0
        %v4067 = vadd.f32 %v3303, %v4066
        %4068 = vmatprep.mubr.bf16.mxu0 %v3111
        %4069 = vmatmul.mubr.bf16.gmra.mxu0 %v3110
        %v4070 = vpop.f32.mrf.mxu0
        %v4071 = vadd.f32 %v3299, %v4070
        %v4072 = vpop.f32.mrf.mxu0
        %v4073 = vadd.f32 %v3303, %v4072
        %v4074 = vpop.f32.mrf.mxu0
        %v4075 = vadd.f32 %v3299, %v4074
        %v4076 = vpop.f32.mrf.mxu0
        %v4077 = vadd.f32 %v3303, %v4076
        %4078 = vmatprep.mubr.bf16.mxu0 %v3119
        %4079 = vmatmul.mubr.bf16.gmra.mxu0 %v3118
        %v4080 = vpop.f32.mrf.mxu0
        %v4081 = vadd.f32 %v3299, %v4080
        %v4082 = vpop.f32.mrf.mxu0
        %v4083 = vadd.f32 %v3303, %v4082
        %v4084 = vpop.f32.mrf.mxu0
        %v4085 = vadd.f32 %v3299, %v4084
        %v4086 = vpop.f32.mrf.mxu0
        %v4087 = vadd.f32 %v3303, %v4086
        %4088 = vmatprep.mubr.bf16.mxu0 %v3127
        %4089 = vmatmul.mubr.bf16.gmra.mxu0 %v3126
        %v4090 = vpop.f32.mrf.mxu0
        %v4091 = vadd.f32 %v3299, %v4090
        %v4092 = vpop.f32.mrf.mxu0
        %v4093 = vadd.f32 %v3303, %v4092
        %v4094 = vpop.f32.mrf.mxu0
        %v4095 = vadd.f32 %v3299, %v4094
        %v4096 = vpop.f32.mrf.mxu0
        %v4097 = vadd.f32 %v3303, %v4096
        %4098 = vmatprep.mubr.bf16.mxu0 %v3135
        %4099 = vmatmul.mubr.bf16.gmra.mxu0 %v3134
        %v4100 = vpop.f32.mrf.mxu0
        %v4101 = vadd.f32 %v3299, %v4100
        %v4102 = vpop.f32.mrf.mxu0
        %v4103 = vadd.f32 %v3303, %v4102
        %v4104 = vpop.f32.mrf.mxu0
        %v4105 = vadd.f32 %v3299, %v4104
        %v4106 = vpop.f32.mrf.mxu0
        %v4107 = vadd.f32 %v3303, %v4106
        %4108 = vmatprep.mubr.bf16.mxu0 %v3143
        %4109 = vmatmul.mubr.bf16.gmra.mxu0 %v3142
        %v4110 = vpop.f32.mrf.mxu0
        %v4111 = vadd.f32 %v3299, %v4110
        %v4112 = vpop.f32.mrf.mxu0
        %v4113 = vadd.f32 %v3303, %v4112
        %v4114 = vpop.f32.mrf.mxu0
        %v4115 = vadd.f32 %v3299, %v4114
        %v4116 = vpop.f32.mrf.mxu0
        %v4117 = vadd.f32 %v3303, %v4116
        %4118 = vmatprep.mubr.bf16.mxu0 %v3151
        %4119 = vmatmul.mubr.bf16.gmra.mxu0 %v3150
        %v4120 = vpop.f32.mrf.mxu0
        %v4121 = vadd.f32 %v3299, %v4120
        %v4122 = vpop.f32.mrf.mxu0
        %v4123 = vadd.f32 %v3303, %v4122
        %v4124 = vpop.f32.mrf.mxu0
        %v4125 = vadd.f32 %v3299, %v4124
        %v4126 = vpop.f32.mrf.mxu0
        %v4127 = vadd.f32 %v3303, %v4126
        %4128 = vmatprep.mubr.bf16.mxu0 %v3159
        %4129 = vmatmul.mubr.bf16.gmra.mxu0 %v3158
        %v4130 = vpop.f32.mrf.mxu0
        %v4131 = vadd.f32 %v3299, %v4130
        %v4132 = vpop.f32.mrf.mxu0
        %v4133 = vadd.f32 %v3303, %v4132
        %v4134 = vpop.f32.mrf.mxu0
        %v4135 = vadd.f32 %v3299, %v4134
        %v4136 = vpop.f32.mrf.mxu0
        %v4137 = vadd.f32 %v3303, %v4136
        %4138 = vdwg.mxu0
        %4139 = vmatprep.subr.bf16.mxu0 %v3737
        %4140 = vmatpush1.bf16.msra.mxu0 %v3736
        %4141 = vmatprep.subr.bf16.mxu0 %v3735
        %4142 = vmatpush1.bf16.msra.mxu0 %v3734
        %4143 = vmatprep.subr.bf16.mxu0 %v3733
        %4144 = vmatpush1.bf16.msra.mxu0 %v3732
        %4145 = vmatprep.subr.bf16.mxu0 %v3731
        %4146 = vmatpush1.bf16.msra.mxu0 %v3730
        %4147 = vmatprep.subr.bf16.mxu0 %v3729
        %4148 = vmatpush1.bf16.msra.mxu0 %v3728
        %4149 = vmatprep.subr.bf16.mxu0 %v3727
        %4150 = vmatpush1.bf16.msra.mxu0 %v3726
        %4151 = vmatprep.subr.bf16.mxu0 %v3725
        %4152 = vmatpush1.bf16.msra.mxu0 %v3724
        %4153 = vmatprep.subr.bf16.mxu0 %v3723
        %4154 = vmatpush1.bf16.msra.mxu0 %v3722
        %4155 = vmatprep.subr.bf16.mxu0 %v3753
        %4156 = vmatpush2.bf16.msra.mxu0 %v3752
        %4157 = vmatprep.subr.bf16.mxu0 %v3751
        %4158 = vmatpush2.bf16.msra.mxu0 %v3750
        %4159 = vmatprep.subr.bf16.mxu0 %v3749
        %4160 = vmatpush2.bf16.msra.mxu0 %v3748
        %4161 = vmatprep.subr.bf16.mxu0 %v3747
        %4162 = vmatpush2.bf16.msra.mxu0 %v3746
        %4163 = vmatprep.subr.bf16.mxu0 %v3745
        %4164 = vmatpush2.bf16.msra.mxu0 %v3744
        %4165 = vmatprep.subr.bf16.mxu0 %v3743
        %4166 = vmatpush2.bf16.msra.mxu0 %v3742
        %4167 = vmatprep.subr.bf16.mxu0 %v3741
        %4168 = vmatpush2.bf16.msra.mxu0 %v3740
        %4169 = vmatprep.subr.bf16.mxu0 %v3739
        %4170 = vmatpush2.bf16.msra.mxu0 %v3738
        %4171 = vmatprep.mubr.bf16.mxu0 %v3041
        %4172 = vmatmul.mubr.bf16.gmra.mxu0 %v3040
        %v4173 = vpop.f32.mrf.mxu0
        %v4174 = vadd.f32 %v3981, %v4173
        %v4175 = vpop.f32.mrf.mxu0
        %v4176 = vadd.f32 %v3983, %v4175
        %v4177 = vpop.f32.mrf.mxu0
        %v4178 = vadd.f32 %v3985, %v4177
        %v4179 = vpop.f32.mrf.mxu0
        %v4180 = vadd.f32 %v3987, %v4179
        %4181 = vmatprep.mubr.bf16.mxu0 %v3049
        %4182 = vmatmul.mubr.bf16.gmra.mxu0 %v3048
        %v4183 = vpop.f32.mrf.mxu0
        %v4184 = vadd.f32 %v3991, %v4183
        %v4185 = vpop.f32.mrf.mxu0
        %v4186 = vadd.f32 %v3993, %v4185
        %v4187 = vpop.f32.mrf.mxu0
        %v4188 = vadd.f32 %v3995, %v4187
        %v4189 = vpop.f32.mrf.mxu0
        %v4190 = vadd.f32 %v3997, %v4189
        %4191 = vmatprep.mubr.bf16.mxu0 %v3057
        %4192 = vmatmul.mubr.bf16.gmra.mxu0 %v3056
        %v4193 = vpop.f32.mrf.mxu0
        %v4194 = vadd.f32 %v4001, %v4193
        %v4195 = vpop.f32.mrf.mxu0
        %v4196 = vadd.f32 %v4003, %v4195
        %v4197 = vpop.f32.mrf.mxu0
        %v4198 = vadd.f32 %v4005, %v4197
        %v4199 = vpop.f32.mrf.mxu0
        %v4200 = vadd.f32 %v4007, %v4199
        %4201 = vmatprep.mubr.bf16.mxu0 %v3065
        %4202 = vmatmul.mubr.bf16.gmra.mxu0 %v3064
        %v4203 = vpop.f32.mrf.mxu0
        %v4204 = vadd.f32 %v4011, %v4203
        %v4205 = vpop.f32.mrf.mxu0
        %v4206 = vadd.f32 %v4013, %v4205
        %v4207 = vpop.f32.mrf.mxu0
        %v4208 = vadd.f32 %v4015, %v4207
        %v4209 = vpop.f32.mrf.mxu0
        %v4210 = vadd.f32 %v4017, %v4209
        %4211 = vmatprep.mubr.bf16.mxu0 %v3073
        %4212 = vmatmul.mubr.bf16.gmra.mxu0 %v3072
        %v4213 = vpop.f32.mrf.mxu0
        %v4214 = vadd.f32 %v4021, %v4213
        %v4215 = vpop.f32.mrf.mxu0
        %v4216 = vadd.f32 %v4023, %v4215
        %v4217 = vpop.f32.mrf.mxu0
        %v4218 = vadd.f32 %v4025, %v4217
        %v4219 = vpop.f32.mrf.mxu0
        %v4220 = vadd.f32 %v4027, %v4219
        %4221 = vmatprep.mubr.bf16.mxu0 %v3081
        %4222 = vmatmul.mubr.bf16.gmra.mxu0 %v3080
        %v4223 = vpop.f32.mrf.mxu0
        %v4224 = vadd.f32 %v4031, %v4223
        %v4225 = vpop.f32.mrf.mxu0
        %v4226 = vadd.f32 %v4033, %v4225
        %v4227 = vpop.f32.mrf.mxu0
        %v4228 = vadd.f32 %v4035, %v4227
        %v4229 = vpop.f32.mrf.mxu0
        %v4230 = vadd.f32 %v4037, %v4229
        %4231 = vmatprep.mubr.bf16.mxu0 %v3089
        %4232 = vmatmul.mubr.bf16.gmra.mxu0 %v3088
        %v4233 = vpop.f32.mrf.mxu0
        %v4234 = vadd.f32 %v4041, %v4233
        %v4235 = vpop.f32.mrf.mxu0
        %v4236 = vadd.f32 %v4043, %v4235
        %v4237 = vpop.f32.mrf.mxu0
        %v4238 = vadd.f32 %v4045, %v4237
        %v4239 = vpop.f32.mrf.mxu0
        %v4240 = vadd.f32 %v4047, %v4239
        %4241 = vmatprep.mubr.bf16.mxu0 %v3097
        %4242 = vmatmul.mubr.bf16.gmra.mxu0 %v3096
        %v4243 = vpop.f32.mrf.mxu0
        %v4244 = vadd.f32 %v4051, %v4243
        %v4245 = vpop.f32.mrf.mxu0
        %v4246 = vadd.f32 %v4053, %v4245
        %v4247 = vpop.f32.mrf.mxu0
        %v4248 = vadd.f32 %v4055, %v4247
        %v4249 = vpop.f32.mrf.mxu0
        %v4250 = vadd.f32 %v4057, %v4249
        %4251 = vmatprep.mubr.bf16.mxu0 %v3105
        %4252 = vmatmul.mubr.bf16.gmra.mxu0 %v3104
        %v4253 = vpop.f32.mrf.mxu0
        %v4254 = vadd.f32 %v4061, %v4253
        %v4255 = vpop.f32.mrf.mxu0
        %v4256 = vadd.f32 %v4063, %v4255
        %v4257 = vpop.f32.mrf.mxu0
        %v4258 = vadd.f32 %v4065, %v4257
        %v4259 = vpop.f32.mrf.mxu0
        %v4260 = vadd.f32 %v4067, %v4259
        %4261 = vmatprep.mubr.bf16.mxu0 %v3113
        %4262 = vmatmul.mubr.bf16.gmra.mxu0 %v3112
        %v4263 = vpop.f32.mrf.mxu0
        %v4264 = vadd.f32 %v4071, %v4263
        %v4265 = vpop.f32.mrf.mxu0
        %v4266 = vadd.f32 %v4073, %v4265
        %v4267 = vpop.f32.mrf.mxu0
        %v4268 = vadd.f32 %v4075, %v4267
        %v4269 = vpop.f32.mrf.mxu0
        %v4270 = vadd.f32 %v4077, %v4269
        %4271 = vmatprep.mubr.bf16.mxu0 %v3121
        %4272 = vmatmul.mubr.bf16.gmra.mxu0 %v3120
        %v4273 = vpop.f32.mrf.mxu0
        %v4274 = vadd.f32 %v4081, %v4273
        %v4275 = vpop.f32.mrf.mxu0
        %v4276 = vadd.f32 %v4083, %v4275
        %v4277 = vpop.f32.mrf.mxu0
        %v4278 = vadd.f32 %v4085, %v4277
        %v4279 = vpop.f32.mrf.mxu0
        %v4280 = vadd.f32 %v4087, %v4279
        %4281 = vmatprep.mubr.bf16.mxu0 %v3129
        %4282 = vmatmul.mubr.bf16.gmra.mxu0 %v3128
        %v4283 = vpop.f32.mrf.mxu0
        %v4284 = vadd.f32 %v4091, %v4283
        %v4285 = vpop.f32.mrf.mxu0
        %v4286 = vadd.f32 %v4093, %v4285
        %v4287 = vpop.f32.mrf.mxu0
        %v4288 = vadd.f32 %v4095, %v4287
        %v4289 = vpop.f32.mrf.mxu0
        %v4290 = vadd.f32 %v4097, %v4289
        %4291 = vmatprep.mubr.bf16.mxu0 %v3137
        %4292 = vmatmul.mubr.bf16.gmra.mxu0 %v3136
        %v4293 = vpop.f32.mrf.mxu0
        %v4294 = vadd.f32 %v4101, %v4293
        %v4295 = vpop.f32.mrf.mxu0
        %v4296 = vadd.f32 %v4103, %v4295
        %v4297 = vpop.f32.mrf.mxu0
        %v4298 = vadd.f32 %v4105, %v4297
        %v4299 = vpop.f32.mrf.mxu0
        %v4300 = vadd.f32 %v4107, %v4299
        %4301 = vmatprep.mubr.bf16.mxu0 %v3145
        %4302 = vmatmul.mubr.bf16.gmra.mxu0 %v3144
        %v4303 = vpop.f32.mrf.mxu0
        %v4304 = vadd.f32 %v4111, %v4303
        %v4305 = vpop.f32.mrf.mxu0
        %v4306 = vadd.f32 %v4113, %v4305
        %v4307 = vpop.f32.mrf.mxu0
        %v4308 = vadd.f32 %v4115, %v4307
        %v4309 = vpop.f32.mrf.mxu0
        %v4310 = vadd.f32 %v4117, %v4309
        %4311 = vmatprep.mubr.bf16.mxu0 %v3153
        %4312 = vmatmul.mubr.bf16.gmra.mxu0 %v3152
        %v4313 = vpop.f32.mrf.mxu0
        %v4314 = vadd.f32 %v4121, %v4313
        %v4315 = vpop.f32.mrf.mxu0
        %v4316 = vadd.f32 %v4123, %v4315
        %v4317 = vpop.f32.mrf.mxu0
        %v4318 = vadd.f32 %v4125, %v4317
        %v4319 = vpop.f32.mrf.mxu0
        %v4320 = vadd.f32 %v4127, %v4319
        %4321 = vmatprep.mubr.bf16.mxu0 %v3161
        %4322 = vmatmul.mubr.bf16.gmra.mxu0 %v3160
        %v4323 = vpop.f32.mrf.mxu0
        %v4324 = vadd.f32 %v4131, %v4323
        %v4325 = vpop.f32.mrf.mxu0
        %v4326 = vadd.f32 %v4133, %v4325
        %v4327 = vpop.f32.mrf.mxu0
        %v4328 = vadd.f32 %v4135, %v4327
        %v4329 = vpop.f32.mrf.mxu0
        %v4330 = vadd.f32 %v4137, %v4329
        %4331 = vdwg.mxu0
        %4332 = vmatprep.subr.bf16.mxu0 %v3769
        %4333 = vmatpush1.bf16.msra.mxu0 %v3768
        %4334 = vmatprep.subr.bf16.mxu0 %v3767
        %4335 = vmatpush1.bf16.msra.mxu0 %v3766
        %4336 = vmatprep.subr.bf16.mxu0 %v3765
        %4337 = vmatpush1.bf16.msra.mxu0 %v3764
        %4338 = vmatprep.subr.bf16.mxu0 %v3763
        %4339 = vmatpush1.bf16.msra.mxu0 %v3762
        %4340 = vmatprep.subr.bf16.mxu0 %v3761
        %4341 = vmatpush1.bf16.msra.mxu0 %v3760
        %4342 = vmatprep.subr.bf16.mxu0 %v3759
        %4343 = vmatpush1.bf16.msra.mxu0 %v3758
        %4344 = vmatprep.subr.bf16.mxu0 %v3757
        %4345 = vmatpush1.bf16.msra.mxu0 %v3756
        %4346 = vmatprep.subr.bf16.mxu0 %v3755
        %4347 = vmatpush1.bf16.msra.mxu0 %v3754
        %4348 = vmatprep.subr.bf16.mxu0 %v3785
        %4349 = vmatpush2.bf16.msra.mxu0 %v3784
        %4350 = vmatprep.subr.bf16.mxu0 %v3783
        %4351 = vmatpush2.bf16.msra.mxu0 %v3782
        %4352 = vmatprep.subr.bf16.mxu0 %v3781
        %4353 = vmatpush2.bf16.msra.mxu0 %v3780
        %4354 = vmatprep.subr.bf16.mxu0 %v3779
        %4355 = vmatpush2.bf16.msra.mxu0 %v3778
        %4356 = vmatprep.subr.bf16.mxu0 %v3777
        %4357 = vmatpush2.bf16.msra.mxu0 %v3776
        %4358 = vmatprep.subr.bf16.mxu0 %v3775
        %4359 = vmatpush2.bf16.msra.mxu0 %v3774
        %4360 = vmatprep.subr.bf16.mxu0 %v3773
        %4361 = vmatpush2.bf16.msra.mxu0 %v3772
        %4362 = vmatprep.subr.bf16.mxu0 %v3771
        %4363 = vmatpush2.bf16.msra.mxu0 %v3770
        %4364 = vmatprep.mubr.bf16.mxu0 %v3043
        %4365 = vmatmul.mubr.bf16.gmra.mxu0 %v3042
        %v4366 = vpop.f32.mrf.mxu0
        %v4367 = vadd.f32 %v4174, %v4366
        %v4368 = vpop.f32.mrf.mxu0
        %v4369 = vadd.f32 %v4176, %v4368
        %v4370 = vpop.f32.mrf.mxu0
        %v4371 = vadd.f32 %v4178, %v4370
        %v4372 = vpop.f32.mrf.mxu0
        %v4373 = vadd.f32 %v4180, %v4372
        %4374 = vmatprep.mubr.bf16.mxu0 %v3051
        %4375 = vmatmul.mubr.bf16.gmra.mxu0 %v3050
        %v4376 = vpop.f32.mrf.mxu0
        %v4377 = vadd.f32 %v4184, %v4376
        %v4378 = vpop.f32.mrf.mxu0
        %v4379 = vadd.f32 %v4186, %v4378
        %v4380 = vpop.f32.mrf.mxu0
        %v4381 = vadd.f32 %v4188, %v4380
        %v4382 = vpop.f32.mrf.mxu0
        %v4383 = vadd.f32 %v4190, %v4382
        %4384 = vmatprep.mubr.bf16.mxu0 %v3059
        %4385 = vmatmul.mubr.bf16.gmra.mxu0 %v3058
        %v4386 = vpop.f32.mrf.mxu0
        %v4387 = vadd.f32 %v4194, %v4386
        %v4388 = vpop.f32.mrf.mxu0
        %v4389 = vadd.f32 %v4196, %v4388
        %v4390 = vpop.f32.mrf.mxu0
        %v4391 = vadd.f32 %v4198, %v4390
        %v4392 = vpop.f32.mrf.mxu0
        %v4393 = vadd.f32 %v4200, %v4392
        %4394 = vmatprep.mubr.bf16.mxu0 %v3067
        %4395 = vmatmul.mubr.bf16.gmra.mxu0 %v3066
        %v4396 = vpop.f32.mrf.mxu0
        %v4397 = vadd.f32 %v4204, %v4396
        %v4398 = vpop.f32.mrf.mxu0
        %v4399 = vadd.f32 %v4206, %v4398
        %v4400 = vpop.f32.mrf.mxu0
        %v4401 = vadd.f32 %v4208, %v4400
        %v4402 = vpop.f32.mrf.mxu0
        %v4403 = vadd.f32 %v4210, %v4402
        %4404 = vmatprep.mubr.bf16.mxu0 %v3075
        %4405 = vmatmul.mubr.bf16.gmra.mxu0 %v3074
        %v4406 = vpop.f32.mrf.mxu0
        %v4407 = vadd.f32 %v4214, %v4406
        %v4408 = vpop.f32.mrf.mxu0
        %v4409 = vadd.f32 %v4216, %v4408
        %v4410 = vpop.f32.mrf.mxu0
        %v4411 = vadd.f32 %v4218, %v4410
        %v4412 = vpop.f32.mrf.mxu0
        %v4413 = vadd.f32 %v4220, %v4412
        %4414 = vmatprep.mubr.bf16.mxu0 %v3083
        %4415 = vmatmul.mubr.bf16.gmra.mxu0 %v3082
        %v4416 = vpop.f32.mrf.mxu0
        %v4417 = vadd.f32 %v4224, %v4416
        %v4418 = vpop.f32.mrf.mxu0
        %v4419 = vadd.f32 %v4226, %v4418
        %v4420 = vpop.f32.mrf.mxu0
        %v4421 = vadd.f32 %v4228, %v4420
        %v4422 = vpop.f32.mrf.mxu0
        %v4423 = vadd.f32 %v4230, %v4422
        %4424 = vmatprep.mubr.bf16.mxu0 %v3091
        %4425 = vmatmul.mubr.bf16.gmra.mxu0 %v3090
        %v4426 = vpop.f32.mrf.mxu0
        %v4427 = vadd.f32 %v4234, %v4426
        %v4428 = vpop.f32.mrf.mxu0
        %v4429 = vadd.f32 %v4236, %v4428
        %v4430 = vpop.f32.mrf.mxu0
        %v4431 = vadd.f32 %v4238, %v4430
        %v4432 = vpop.f32.mrf.mxu0
        %v4433 = vadd.f32 %v4240, %v4432
        %4434 = vmatprep.mubr.bf16.mxu0 %v3099
        %4435 = vmatmul.mubr.bf16.gmra.mxu0 %v3098
        %v4436 = vpop.f32.mrf.mxu0
        %v4437 = vadd.f32 %v4244, %v4436
        %v4438 = vpop.f32.mrf.mxu0
        %v4439 = vadd.f32 %v4246, %v4438
        %v4440 = vpop.f32.mrf.mxu0
        %v4441 = vadd.f32 %v4248, %v4440
        %v4442 = vpop.f32.mrf.mxu0
        %v4443 = vadd.f32 %v4250, %v4442
        %4444 = vmatprep.mubr.bf16.mxu0 %v3107
        %4445 = vmatmul.mubr.bf16.gmra.mxu0 %v3106
        %v4446 = vpop.f32.mrf.mxu0
        %v4447 = vadd.f32 %v4254, %v4446
        %v4448 = vpop.f32.mrf.mxu0
        %v4449 = vadd.f32 %v4256, %v4448
        %v4450 = vpop.f32.mrf.mxu0
        %v4451 = vadd.f32 %v4258, %v4450
        %v4452 = vpop.f32.mrf.mxu0
        %v4453 = vadd.f32 %v4260, %v4452
        %4454 = vmatprep.mubr.bf16.mxu0 %v3115
        %4455 = vmatmul.mubr.bf16.gmra.mxu0 %v3114
        %v4456 = vpop.f32.mrf.mxu0
        %v4457 = vadd.f32 %v4264, %v4456
        %v4458 = vpop.f32.mrf.mxu0
        %v4459 = vadd.f32 %v4266, %v4458
        %v4460 = vpop.f32.mrf.mxu0
        %v4461 = vadd.f32 %v4268, %v4460
        %v4462 = vpop.f32.mrf.mxu0
        %v4463 = vadd.f32 %v4270, %v4462
        %4464 = vmatprep.mubr.bf16.mxu0 %v3123
        %4465 = vmatmul.mubr.bf16.gmra.mxu0 %v3122
        %v4466 = vpop.f32.mrf.mxu0
        %v4467 = vadd.f32 %v4274, %v4466
        %v4468 = vpop.f32.mrf.mxu0
        %v4469 = vadd.f32 %v4276, %v4468
        %v4470 = vpop.f32.mrf.mxu0
        %v4471 = vadd.f32 %v4278, %v4470
        %v4472 = vpop.f32.mrf.mxu0
        %v4473 = vadd.f32 %v4280, %v4472
        %4474 = vmatprep.mubr.bf16.mxu0 %v3131
        %4475 = vmatmul.mubr.bf16.gmra.mxu0 %v3130
        %v4476 = vpop.f32.mrf.mxu0
        %v4477 = vadd.f32 %v4284, %v4476
        %v4478 = vpop.f32.mrf.mxu0
        %v4479 = vadd.f32 %v4286, %v4478
        %v4480 = vpop.f32.mrf.mxu0
        %v4481 = vadd.f32 %v4288, %v4480
        %v4482 = vpop.f32.mrf.mxu0
        %v4483 = vadd.f32 %v4290, %v4482
        %4484 = vmatprep.mubr.bf16.mxu0 %v3139
        %4485 = vmatmul.mubr.bf16.gmra.mxu0 %v3138
        %v4486 = vpop.f32.mrf.mxu0
        %v4487 = vadd.f32 %v4294, %v4486
        %v4488 = vpop.f32.mrf.mxu0
        %v4489 = vadd.f32 %v4296, %v4488
        %v4490 = vpop.f32.mrf.mxu0
        %v4491 = vadd.f32 %v4298, %v4490
        %v4492 = vpop.f32.mrf.mxu0
        %v4493 = vadd.f32 %v4300, %v4492
        %4494 = vmatprep.mubr.bf16.mxu0 %v3147
        %4495 = vmatmul.mubr.bf16.gmra.mxu0 %v3146
        %v4496 = vpop.f32.mrf.mxu0
        %v4497 = vadd.f32 %v4304, %v4496
        %v4498 = vpop.f32.mrf.mxu0
        %v4499 = vadd.f32 %v4306, %v4498
        %v4500 = vpop.f32.mrf.mxu0
        %v4501 = vadd.f32 %v4308, %v4500
        %v4502 = vpop.f32.mrf.mxu0
        %v4503 = vadd.f32 %v4310, %v4502
        %4504 = vmatprep.mubr.bf16.mxu0 %v3155
        %4505 = vmatmul.mubr.bf16.gmra.mxu0 %v3154
        %v4506 = vpop.f32.mrf.mxu0
        %v4507 = vadd.f32 %v4314, %v4506
        %v4508 = vpop.f32.mrf.mxu0
        %v4509 = vadd.f32 %v4316, %v4508
        %v4510 = vpop.f32.mrf.mxu0
        %v4511 = vadd.f32 %v4318, %v4510
        %v4512 = vpop.f32.mrf.mxu0
        %v4513 = vadd.f32 %v4320, %v4512
        %4514 = vmatprep.mubr.bf16.mxu0 %v3163
        %4515 = vmatmul.mubr.bf16.gmra.mxu0 %v3162
        %v4516 = vpop.f32.mrf.mxu0
        %v4517 = vadd.f32 %v4324, %v4516
        %v4518 = vpop.f32.mrf.mxu0
        %v4519 = vadd.f32 %v4326, %v4518
        %v4520 = vpop.f32.mrf.mxu0
        %v4521 = vadd.f32 %v4328, %v4520
        %v4522 = vpop.f32.mrf.mxu0
        %v4523 = vadd.f32 %v4330, %v4522
        %4524 = vdwg.mxu0
        %4525 = vmatprep.subr.bf16.mxu0 %v3801
        %4526 = vmatpush1.bf16.msra.mxu0 %v3800
        %4527 = vmatprep.subr.bf16.mxu0 %v3799
        %4528 = vmatpush1.bf16.msra.mxu0 %v3798
        %4529 = vmatprep.subr.bf16.mxu0 %v3797
        %4530 = vmatpush1.bf16.msra.mxu0 %v3796
        %4531 = vmatprep.subr.bf16.mxu0 %v3795
        %4532 = vmatpush1.bf16.msra.mxu0 %v3794
        %4533 = vmatprep.subr.bf16.mxu0 %v3793
        %4534 = vmatpush1.bf16.msra.mxu0 %v3792
        %4535 = vmatprep.subr.bf16.mxu0 %v3791
        %4536 = vmatpush1.bf16.msra.mxu0 %v3790
        %4537 = vmatprep.subr.bf16.mxu0 %v3789
        %4538 = vmatpush1.bf16.msra.mxu0 %v3788
        %4539 = vmatprep.subr.bf16.mxu0 %v3787
        %4540 = vmatpush1.bf16.msra.mxu0 %v3786
        %4541 = vmatprep.subr.bf16.mxu0 %v3817
        %4542 = vmatpush2.bf16.msra.mxu0 %v3816
        %4543 = vmatprep.subr.bf16.mxu0 %v3815
        %4544 = vmatpush2.bf16.msra.mxu0 %v3814
        %4545 = vmatprep.subr.bf16.mxu0 %v3813
        %4546 = vmatpush2.bf16.msra.mxu0 %v3812
        %4547 = vmatprep.subr.bf16.mxu0 %v3811
        %4548 = vmatpush2.bf16.msra.mxu0 %v3810
        %4549 = vmatprep.subr.bf16.mxu0 %v3809
        %4550 = vmatpush2.bf16.msra.mxu0 %v3808
        %4551 = vmatprep.subr.bf16.mxu0 %v3807
        %4552 = vmatpush2.bf16.msra.mxu0 %v3806
        %4553 = vmatprep.subr.bf16.mxu0 %v3805
        %4554 = vmatpush2.bf16.msra.mxu0 %v3804
        %4555 = vmatprep.subr.bf16.mxu0 %v3803
        %4556 = vmatpush2.bf16.msra.mxu0 %v3802
        %4557 = vmatprep.mubr.bf16.mxu0 %v3045
        %4558 = vmatmul.mubr.bf16.gmra.mxu0 %v3044
        %v4559 = vpop.f32.mrf.mxu0
        %v4560 = vadd.f32 %v4367, %v4559
        %v4561 = vpop.f32.mrf.mxu0
        %v4562 = vadd.f32 %v4369, %v4561
        %v4563 = vpop.f32.mrf.mxu0
        %v4564 = vadd.f32 %v4371, %v4563
        %v4565 = vpop.f32.mrf.mxu0
        %v4566 = vadd.f32 %v4373, %v4565
        %4567 = vmatprep.mubr.bf16.mxu0 %v3053
        %4568 = vmatmul.mubr.bf16.gmra.mxu0 %v3052
        %v4569 = vpop.f32.mrf.mxu0
        %v4570 = vadd.f32 %v4377, %v4569
        %v4571 = vpop.f32.mrf.mxu0
        %v4572 = vadd.f32 %v4379, %v4571
        %v4573 = vpop.f32.mrf.mxu0
        %v4574 = vadd.f32 %v4381, %v4573
        %v4575 = vpop.f32.mrf.mxu0
        %v4576 = vadd.f32 %v4383, %v4575
        %4577 = vmatprep.mubr.bf16.mxu0 %v3061
        %4578 = vmatmul.mubr.bf16.gmra.mxu0 %v3060
        %v4579 = vpop.f32.mrf.mxu0
        %v4580 = vadd.f32 %v4387, %v4579
        %v4581 = vpop.f32.mrf.mxu0
        %v4582 = vadd.f32 %v4389, %v4581
        %v4583 = vpop.f32.mrf.mxu0
        %v4584 = vadd.f32 %v4391, %v4583
        %v4585 = vpop.f32.mrf.mxu0
        %v4586 = vadd.f32 %v4393, %v4585
        %4587 = vmatprep.mubr.bf16.mxu0 %v3069
        %4588 = vmatmul.mubr.bf16.gmra.mxu0 %v3068
        %v4589 = vpop.f32.mrf.mxu0
        %v4590 = vadd.f32 %v4397, %v4589
        %v4591 = vpop.f32.mrf.mxu0
        %v4592 = vadd.f32 %v4399, %v4591
        %v4593 = vpop.f32.mrf.mxu0
        %v4594 = vadd.f32 %v4401, %v4593
        %v4595 = vpop.f32.mrf.mxu0
        %v4596 = vadd.f32 %v4403, %v4595
        %4597 = vmatprep.mubr.bf16.mxu0 %v3077
        %4598 = vmatmul.mubr.bf16.gmra.mxu0 %v3076
        %v4599 = vpop.f32.mrf.mxu0
        %v4600 = vadd.f32 %v4407, %v4599
        %v4601 = vpop.f32.mrf.mxu0
        %v4602 = vadd.f32 %v4409, %v4601
        %v4603 = vpop.f32.mrf.mxu0
        %v4604 = vadd.f32 %v4411, %v4603
        %v4605 = vpop.f32.mrf.mxu0
        %v4606 = vadd.f32 %v4413, %v4605
        %4607 = vmatprep.mubr.bf16.mxu0 %v3085
        %4608 = vmatmul.mubr.bf16.gmra.mxu0 %v3084
        %v4609 = vpop.f32.mrf.mxu0
        %v4610 = vadd.f32 %v4417, %v4609
        %v4611 = vpop.f32.mrf.mxu0
        %v4612 = vadd.f32 %v4419, %v4611
        %v4613 = vpop.f32.mrf.mxu0
        %v4614 = vadd.f32 %v4421, %v4613
        %v4615 = vpop.f32.mrf.mxu0
        %v4616 = vadd.f32 %v4423, %v4615
        %4617 = vmatprep.mubr.bf16.mxu0 %v3093
        %4618 = vmatmul.mubr.bf16.gmra.mxu0 %v3092
        %v4619 = vpop.f32.mrf.mxu0
        %v4620 = vadd.f32 %v4427, %v4619
        %v4621 = vpop.f32.mrf.mxu0
        %v4622 = vadd.f32 %v4429, %v4621
        %v4623 = vpop.f32.mrf.mxu0
        %v4624 = vadd.f32 %v4431, %v4623
        %v4625 = vpop.f32.mrf.mxu0
        %v4626 = vadd.f32 %v4433, %v4625
        %4627 = vmatprep.mubr.bf16.mxu0 %v3101
        %4628 = vmatmul.mubr.bf16.gmra.mxu0 %v3100
        %v4629 = vpop.f32.mrf.mxu0
        %v4630 = vadd.f32 %v4437, %v4629
        %v4631 = vpop.f32.mrf.mxu0
        %v4632 = vadd.f32 %v4439, %v4631
        %v4633 = vpop.f32.mrf.mxu0
        %v4634 = vadd.f32 %v4441, %v4633
        %v4635 = vpop.f32.mrf.mxu0
        %v4636 = vadd.f32 %v4443, %v4635
        %4637 = vmatprep.mubr.bf16.mxu0 %v3109
        %4638 = vmatmul.mubr.bf16.gmra.mxu0 %v3108
        %v4639 = vpop.f32.mrf.mxu0
        %v4640 = vadd.f32 %v4447, %v4639
        %v4641 = vpop.f32.mrf.mxu0
        %v4642 = vadd.f32 %v4449, %v4641
        %v4643 = vpop.f32.mrf.mxu0
        %v4644 = vadd.f32 %v4451, %v4643
        %v4645 = vpop.f32.mrf.mxu0
        %v4646 = vadd.f32 %v4453, %v4645
        %4647 = vmatprep.mubr.bf16.mxu0 %v3117
        %4648 = vmatmul.mubr.bf16.gmra.mxu0 %v3116
        %v4649 = vpop.f32.mrf.mxu0
        %v4650 = vadd.f32 %v4457, %v4649
        %v4651 = vpop.f32.mrf.mxu0
        %v4652 = vadd.f32 %v4459, %v4651
        %v4653 = vpop.f32.mrf.mxu0
        %v4654 = vadd.f32 %v4461, %v4653
        %v4655 = vpop.f32.mrf.mxu0
        %v4656 = vadd.f32 %v4463, %v4655
        %4657 = vmatprep.mubr.bf16.mxu0 %v3125
        %4658 = vmatmul.mubr.bf16.gmra.mxu0 %v3124
        %v4659 = vpop.f32.mrf.mxu0
        %v4660 = vadd.f32 %v4467, %v4659
        %v4661 = vpop.f32.mrf.mxu0
        %v4662 = vadd.f32 %v4469, %v4661
        %v4663 = vpop.f32.mrf.mxu0
        %v4664 = vadd.f32 %v4471, %v4663
        %v4665 = vpop.f32.mrf.mxu0
        %v4666 = vadd.f32 %v4473, %v4665
        %4667 = vmatprep.mubr.bf16.mxu0 %v3133
        %4668 = vmatmul.mubr.bf16.gmra.mxu0 %v3132
        %v4669 = vpop.f32.mrf.mxu0
        %v4670 = vadd.f32 %v4477, %v4669
        %v4671 = vpop.f32.mrf.mxu0
        %v4672 = vadd.f32 %v4479, %v4671
        %v4673 = vpop.f32.mrf.mxu0
        %v4674 = vadd.f32 %v4481, %v4673
        %v4675 = vpop.f32.mrf.mxu0
        %v4676 = vadd.f32 %v4483, %v4675
        %4677 = vmatprep.mubr.bf16.mxu0 %v3141
        %4678 = vmatmul.mubr.bf16.gmra.mxu0 %v3140
        %v4679 = vpop.f32.mrf.mxu0
        %v4680 = vadd.f32 %v4487, %v4679
        %v4681 = vpop.f32.mrf.mxu0
        %v4682 = vadd.f32 %v4489, %v4681
        %v4683 = vpop.f32.mrf.mxu0
        %v4684 = vadd.f32 %v4491, %v4683
        %v4685 = vpop.f32.mrf.mxu0
        %v4686 = vadd.f32 %v4493, %v4685
        %4687 = vmatprep.mubr.bf16.mxu0 %v3149
        %4688 = vmatmul.mubr.bf16.gmra.mxu0 %v3148
        %v4689 = vpop.f32.mrf.mxu0
        %v4690 = vadd.f32 %v4497, %v4689
        %v4691 = vpop.f32.mrf.mxu0
        %v4692 = vadd.f32 %v4499, %v4691
        %v4693 = vpop.f32.mrf.mxu0
        %v4694 = vadd.f32 %v4501, %v4693
        %v4695 = vpop.f32.mrf.mxu0
        %v4696 = vadd.f32 %v4503, %v4695
        %4697 = vmatprep.mubr.bf16.mxu0 %v3157
        %4698 = vmatmul.mubr.bf16.gmra.mxu0 %v3156
        %v4699 = vpop.f32.mrf.mxu0
        %v4700 = vadd.f32 %v4507, %v4699
        %v4701 = vpop.f32.mrf.mxu0
        %v4702 = vadd.f32 %v4509, %v4701
        %v4703 = vpop.f32.mrf.mxu0
        %v4704 = vadd.f32 %v4511, %v4703
        %v4705 = vpop.f32.mrf.mxu0
        %v4706 = vadd.f32 %v4513, %v4705
        %4707 = vmatprep.mubr.bf16.mxu0 %v3165
        %4708 = vmatmul.mubr.bf16.gmra.mxu0 %v3164
        %v4709 = vpop.f32.mrf.mxu0
        %v4710 = vadd.f32 %v4517, %v4709
        %v4711 = vpop.f32.mrf.mxu0
        %v4712 = vadd.f32 %v4519, %v4711
        %v4713 = vpop.f32.mrf.mxu0
        %v4714 = vadd.f32 %v4521, %v4713
        %v4715 = vpop.f32.mrf.mxu0
        %v4716 = vadd.f32 %v4523, %v4715
        %4717 = vdwg.mxu0
        %v4718 = vmax.f32 %v4560, 0.0
        %v4719 = vmax.f32 %v4562, 0.0
        %v4720 = vmax.f32 %v4564, 0.0
        %v4721 = vmax.f32 %v4566, 0.0
        %v4722 = vmax.f32 %v4570, 0.0
        %v4723 = vmax.f32 %v4572, 0.0
        %v4724 = vmax.f32 %v4574, 0.0
        %v4725 = vmax.f32 %v4576, 0.0
        %v4726 = vmax.f32 %v4580, 0.0
        %v4727 = vmax.f32 %v4582, 0.0
        %v4728 = vmax.f32 %v4584, 0.0
        %v4729 = vmax.f32 %v4586, 0.0
        %v4730 = vmax.f32 %v4590, 0.0
        %v4731 = vmax.f32 %v4592, 0.0
        %v4732 = vmax.f32 %v4594, 0.0
        %v4733 = vmax.f32 %v4596, 0.0
        %v4734 = vmax.f32 %v4600, 0.0
        %v4735 = vmax.f32 %v4602, 0.0
        %v4736 = vmax.f32 %v4604, 0.0
        %v4737 = vmax.f32 %v4606, 0.0
        %v4738 = vmax.f32 %v4610, 0.0
        %v4739 = vmax.f32 %v4612, 0.0
        %v4740 = vmax.f32 %v4614, 0.0
        %v4741 = vmax.f32 %v4616, 0.0
        %v4742 = vmax.f32 %v4620, 0.0
        %v4743 = vmax.f32 %v4622, 0.0
        %v4744 = vmax.f32 %v4624, 0.0
        %v4745 = vmax.f32 %v4626, 0.0
        %v4746 = vmax.f32 %v4630, 0.0
        %v4747 = vmax.f32 %v4632, 0.0
        %v4748 = vmax.f32 %v4634, 0.0
        %v4749 = vmax.f32 %v4636, 0.0
        %v4750 = vmax.f32 %v4640, 0.0
        %v4751 = vmax.f32 %v4642, 0.0
        %v4752 = vmax.f32 %v4644, 0.0
        %v4753 = vmax.f32 %v4646, 0.0
        %v4754 = vmax.f32 %v4650, 0.0
        %v4755 = vmax.f32 %v4652, 0.0
        %v4756 = vmax.f32 %v4654, 0.0
        %v4757 = vmax.f32 %v4656, 0.0
        %v4758 = vmax.f32 %v4660, 0.0
        %v4759 = vmax.f32 %v4662, 0.0
        %v4760 = vmax.f32 %v4664, 0.0
        %v4761 = vmax.f32 %v4666, 0.0
        %v4762 = vmax.f32 %v4670, 0.0
        %v4763 = vmax.f32 %v4672, 0.0
        %v4764 = vmax.f32 %v4674, 0.0
        %v4765 = vmax.f32 %v4676, 0.0
        %v4766 = vmax.f32 %v4680, 0.0
        %v4767 = vmax.f32 %v4682, 0.0
        %v4768 = vmax.f32 %v4684, 0.0
        %v4769 = vmax.f32 %v4686, 0.0
        %v4770 = vmax.f32 %v4690, 0.0
        %v4771 = vmax.f32 %v4692, 0.0
        %v4772 = vmax.f32 %v4694, 0.0
        %v4773 = vmax.f32 %v4696, 0.0
        %v4774 = vmax.f32 %v4700, 0.0
        %v4775 = vmax.f32 %v4702, 0.0
        %v4776 = vmax.f32 %v4704, 0.0
        %v4777 = vmax.f32 %v4706, 0.0
        %v4778 = vmax.f32 %v4710, 0.0
        %v4779 = vmax.f32 %v4712, 0.0
        %v4780 = vmax.f32 %v4714, 0.0
        %v4781 = vmax.f32 %v4716, 0.0
        %v4782 = vpack.c.bf16 %v4720, %v4718
        %v4783 = vpack.c.bf16 %v4721, %v4719
        %v4784 = vpack.c.bf16 %v4724, %v4722
        %v4785 = vpack.c.bf16 %v4725, %v4723
        %v4786 = vpack.c.bf16 %v4728, %v4726
        %v4787 = vpack.c.bf16 %v4729, %v4727
        %v4788 = vpack.c.bf16 %v4732, %v4730
        %v4789 = vpack.c.bf16 %v4733, %v4731
        %v4790 = vpack.c.bf16 %v4736, %v4734
        %v4791 = vpack.c.bf16 %v4737, %v4735
        %v4792 = vpack.c.bf16 %v4740, %v4738
        %v4793 = vpack.c.bf16 %v4741, %v4739
        %v4794 = vpack.c.bf16 %v4744, %v4742
        %v4795 = vpack.c.bf16 %v4745, %v4743
        %v4796 = vpack.c.bf16 %v4748, %v4746
        %v4797 = vpack.c.bf16 %v4749, %v4747
        %v4798 = vpack.c.bf16 %v4752, %v4750
        %v4799 = vpack.c.bf16 %v4753, %v4751
        %v4800 = vpack.c.bf16 %v4756, %v4754
        %v4801 = vpack.c.bf16 %v4757, %v4755
        %v4802 = vpack.c.bf16 %v4760, %v4758
        %v4803 = vpack.c.bf16 %v4761, %v4759
        %v4804 = vpack.c.bf16 %v4764, %v4762
        %v4805 = vpack.c.bf16 %v4765, %v4763
        %v4806 = vpack.c.bf16 %v4768, %v4766
        %v4807 = vpack.c.bf16 %v4769, %v4767
        %v4808 = vpack.c.bf16 %v4772, %v4770
        %v4809 = vpack.c.bf16 %v4773, %v4771
        %v4810 = vpack.c.bf16 %v4776, %v4774
        %v4811 = vpack.c.bf16 %v4777, %v4775
        %v4812 = vpack.c.bf16 %v4780, %v4778
        %v4813 = vpack.c.bf16 %v4781, %v4779
        %v4814 = vld [vmem:[%s9] sm:$0xf]
        %v4815 = vld [vmem:[%s9 + $0x4] sm:$0xf]
        %v4816 = vld [vmem:[%s9 + $0x8] sm:$0xf]
        %v4817 = vld [vmem:[%s9 + $0xc] sm:$0xf]
        %v4818 = vld [vmem:[%s9 + $0x10] sm:$0xf]
        %v4819 = vld [vmem:[%s9 + $0x14] sm:$0xf]
        %v4820 = vld [vmem:[%s9 + $0x18] sm:$0xf]
        %v4821 = vld [vmem:[%s9 + $0x1c] sm:$0xf]
        %v4822 = vld [vmem:[%s9 + $0x20] sm:$0xf]
        %v4823 = vld [vmem:[%s9 + $0x24] sm:$0xf]
        %v4824 = vld [vmem:[%s9 + $0x28] sm:$0xf]
        %v4825 = vld [vmem:[%s9 + $0x2c] sm:$0xf]
        %v4826 = vld [vmem:[%s9 + $0x30] sm:$0xf]
        %v4827 = vld [vmem:[%s9 + $0x34] sm:$0xf]
        %v4828 = vld [vmem:[%s9 + $0x38] sm:$0xf]
        %v4829 = vld [vmem:[%s9 + $0x3c] sm:$0xf]
        %v4830 = vld [vmem:[%s9 + $0x40] sm:$0xf]
        %v4831 = vld [vmem:[%s9 + $0x44] sm:$0xf]
        %v4832 = vld [vmem:[%s9 + $0x48] sm:$0xf]
        %v4833 = vld [vmem:[%s9 + $0x4c] sm:$0xf]
        %v4834 = vld [vmem:[%s9 + $0x50] sm:$0xf]
        %v4835 = vld [vmem:[%s9 + $0x54] sm:$0xf]
        %v4836 = vld [vmem:[%s9 + $0x58] sm:$0xf]
        %v4837 = vld [vmem:[%s9 + $0x5c] sm:$0xf]
        %v4838 = vld [vmem:[%s9 + $0x60] sm:$0xf]
        %v4839 = vld [vmem:[%s9 + $0x64] sm:$0xf]
        %v4840 = vld [vmem:[%s9 + $0x68] sm:$0xf]
        %v4841 = vld [vmem:[%s9 + $0x6c] sm:$0xf]
        %v4842 = vld [vmem:[%s9 + $0x70] sm:$0xf]
        %v4843 = vld [vmem:[%s9 + $0x74] sm:$0xf]
        %v4844 = vld [vmem:[%s9 + $0x78] sm:$0xf]
        %v4845 = vld [vmem:[%s9 + $0x7c] sm:$0xf]
        %v4846 = vld [vmem:[%s10] sm:$0x1]
        %v4848 = vlaneseq
        %v4849 = vshrl.u32 %v4848, 7
        %v4850 = vsub.s32 0, %v4849
        %v4851 = vrot.slane %v4846, %v4850
        %v4885 = vunpack.c.l.b16 %v4814
        %v4886 = vunpack.c.l.b16 %v4815
        %v4887 = vunpack.c.l.b16 %v4816
        %v4888 = vunpack.c.l.b16 %v4817
        %v4889 = vunpack.c.l.b16 %v4818
        %v4890 = vunpack.c.l.b16 %v4819
        %v4891 = vunpack.c.l.b16 %v4820
        %v4892 = vunpack.c.l.b16 %v4821
        %v4893 = vunpack.c.l.b16 %v4822
        %v4894 = vunpack.c.l.b16 %v4823
        %v4895 = vunpack.c.l.b16 %v4824
        %v4896 = vunpack.c.l.b16 %v4825
        %v4897 = vunpack.c.l.b16 %v4826
        %v4898 = vunpack.c.l.b16 %v4827
        %v4899 = vunpack.c.l.b16 %v4828
        %v4900 = vunpack.c.l.b16 %v4829
        %v4901 = vunpack.c.l.b16 %v4830
        %v4902 = vunpack.c.l.b16 %v4831
        %v4903 = vunpack.c.l.b16 %v4832
        %v4904 = vunpack.c.l.b16 %v4833
        %v4905 = vunpack.c.l.b16 %v4834
        %v4906 = vunpack.c.l.b16 %v4835
        %v4907 = vunpack.c.l.b16 %v4836
        %v4908 = vunpack.c.l.b16 %v4837
        %v4909 = vunpack.c.l.b16 %v4838
        %v4910 = vunpack.c.l.b16 %v4839
        %v4911 = vunpack.c.l.b16 %v4840
        %v4912 = vunpack.c.l.b16 %v4841
        %v4913 = vunpack.c.l.b16 %v4842
        %v4914 = vunpack.c.l.b16 %v4843
        %v4915 = vunpack.c.l.b16 %v4844
        %v4916 = vunpack.c.l.b16 %v4845
        %v4917 = vpack.c.b16 %v4886, %v4885
        %v4918 = vpack.c.b16 %v4888, %v4887
        %v4919 = vpack.c.b16 %v4890, %v4889
        %v4920 = vpack.c.b16 %v4892, %v4891
        %v4921 = vpack.c.b16 %v4894, %v4893
        %v4922 = vpack.c.b16 %v4896, %v4895
        %v4923 = vpack.c.b16 %v4898, %v4897
        %v4924 = vpack.c.b16 %v4900, %v4899
        %v4925 = vpack.c.b16 %v4902, %v4901
        %v4926 = vpack.c.b16 %v4904, %v4903
        %v4927 = vpack.c.b16 %v4906, %v4905
        %v4928 = vpack.c.b16 %v4908, %v4907
        %v4929 = vpack.c.b16 %v4910, %v4909
        %v4930 = vpack.c.b16 %v4912, %v4911
        %v4931 = vpack.c.b16 %v4914, %v4913
        %v4932 = vpack.c.b16 %v4916, %v4915
        %4949 = vmatprep.subr.bf16.mxu0 0
        %4950 = vmatpush1.bf16.msra.mxu0 %v4924
        %4951 = vmatprep.subr.bf16.mxu0 0
        %4952 = vmatpush1.bf16.msra.mxu0 %v4923
        %4953 = vmatprep.subr.bf16.mxu0 0
        %4954 = vmatpush1.bf16.msra.mxu0 %v4922
        %4955 = vmatprep.subr.bf16.mxu0 0
        %4956 = vmatpush1.bf16.msra.mxu0 %v4921
        %4957 = vmatprep.subr.bf16.mxu0 0
        %4958 = vmatpush1.bf16.msra.mxu0 %v4920
        %4959 = vmatprep.subr.bf16.mxu0 0
        %4960 = vmatpush1.bf16.msra.mxu0 %v4919
        %4961 = vmatprep.subr.bf16.mxu0 0
        %4962 = vmatpush1.bf16.msra.mxu0 %v4918
        %4963 = vmatprep.subr.bf16.mxu0 0
        %4964 = vmatpush1.bf16.msra.mxu0 %v4917
        %4965 = vmatprep.subr.bf16.mxu0 0
        %4966 = vmatpush2.bf16.msra.mxu0 %v4932
        %4967 = vmatprep.subr.bf16.mxu0 0
        %4968 = vmatpush2.bf16.msra.mxu0 %v4931
        %4969 = vmatprep.subr.bf16.mxu0 0
        %4970 = vmatpush2.bf16.msra.mxu0 %v4930
        %4971 = vmatprep.subr.bf16.mxu0 0
        %4972 = vmatpush2.bf16.msra.mxu0 %v4929
        %4973 = vmatprep.subr.bf16.mxu0 0
        %4974 = vmatpush2.bf16.msra.mxu0 %v4928
        %4975 = vmatprep.subr.bf16.mxu0 0
        %4976 = vmatpush2.bf16.msra.mxu0 %v4927
        %4977 = vmatprep.subr.bf16.mxu0 0
        %4978 = vmatpush2.bf16.msra.mxu0 %v4926
        %4979 = vmatprep.subr.bf16.mxu0 0
        %4980 = vmatpush2.bf16.msra.mxu0 %v4925
        %4981 = vmatprep.mubr.bf16.mxu0 %v4783
        %4982 = vmatmul.mubr.bf16.gmra.mxu0 %v4782
        %v4983 = vpop.f32.mrf.mxu0
        %v4984 = vadd.f32 %v4851, %v4983
        %v4985 = vpop.f32.mrf.mxu0
        %v4986 = vpop.f32.mrf.mxu0
        %v4987 = vadd.f32 %v4851, %v4986
        %v4988 = vpop.f32.mrf.mxu0
        %4989 = vmatprep.mubr.bf16.mxu0 %v4785
        %4990 = vmatmul.mubr.bf16.gmra.mxu0 %v4784
        %v4991 = vpop.f32.mrf.mxu0
        %v4992 = vadd.f32 %v4851, %v4991
        %v4993 = vpop.f32.mrf.mxu0
        %v4994 = vpop.f32.mrf.mxu0
        %v4995 = vadd.f32 %v4851, %v4994
        %v4996 = vpop.f32.mrf.mxu0
        %4997 = vmatprep.mubr.bf16.mxu0 %v4787
        %4998 = vmatmul.mubr.bf16.gmra.mxu0 %v4786
        %v4999 = vpop.f32.mrf.mxu0
        %v5000 = vadd.f32 %v4851, %v4999
        %v5001 = vpop.f32.mrf.mxu0
        %v5002 = vpop.f32.mrf.mxu0
        %v5003 = vadd.f32 %v4851, %v5002
        %v5004 = vpop.f32.mrf.mxu0
        %5005 = vmatprep.mubr.bf16.mxu0 %v4789
        %5006 = vmatmul.mubr.bf16.gmra.mxu0 %v4788
        %v5007 = vpop.f32.mrf.mxu0
        %v5008 = vadd.f32 %v4851, %v5007
        %v5009 = vpop.f32.mrf.mxu0
        %v5010 = vpop.f32.mrf.mxu0
        %v5011 = vadd.f32 %v4851, %v5010
        %v5012 = vpop.f32.mrf.mxu0
        %5013 = vmatprep.mubr.bf16.mxu0 %v4791
        %5014 = vmatmul.mubr.bf16.gmra.mxu0 %v4790
        %v5015 = vpop.f32.mrf.mxu0
        %v5016 = vadd.f32 %v4851, %v5015
        %v5017 = vpop.f32.mrf.mxu0
        %v5018 = vpop.f32.mrf.mxu0
        %v5019 = vadd.f32 %v4851, %v5018
        %v5020 = vpop.f32.mrf.mxu0
        %5021 = vmatprep.mubr.bf16.mxu0 %v4793
        %5022 = vmatmul.mubr.bf16.gmra.mxu0 %v4792
        %v5023 = vpop.f32.mrf.mxu0
        %v5024 = vadd.f32 %v4851, %v5023
        %v5025 = vpop.f32.mrf.mxu0
        %v5026 = vpop.f32.mrf.mxu0
        %v5027 = vadd.f32 %v4851, %v5026
        %v5028 = vpop.f32.mrf.mxu0
        %5029 = vmatprep.mubr.bf16.mxu0 %v4795
        %5030 = vmatmul.mubr.bf16.gmra.mxu0 %v4794
        %v5031 = vpop.f32.mrf.mxu0
        %v5032 = vadd.f32 %v4851, %v5031
        %v5033 = vpop.f32.mrf.mxu0
        %v5034 = vpop.f32.mrf.mxu0
        %v5035 = vadd.f32 %v4851, %v5034
        %v5036 = vpop.f32.mrf.mxu0
        %5037 = vmatprep.mubr.bf16.mxu0 %v4797
        %5038 = vmatmul.mubr.bf16.gmra.mxu0 %v4796
        %v5039 = vpop.f32.mrf.mxu0
        %v5040 = vadd.f32 %v4851, %v5039
        %v5041 = vpop.f32.mrf.mxu0
        %v5042 = vpop.f32.mrf.mxu0
        %v5043 = vadd.f32 %v4851, %v5042
        %v5044 = vpop.f32.mrf.mxu0
        %5045 = vmatprep.mubr.bf16.mxu0 %v4799
        %5046 = vmatmul.mubr.bf16.gmra.mxu0 %v4798
        %v5047 = vpop.f32.mrf.mxu0
        %v5048 = vadd.f32 %v4851, %v5047
        %v5049 = vpop.f32.mrf.mxu0
        %v5050 = vpop.f32.mrf.mxu0
        %v5051 = vadd.f32 %v4851, %v5050
        %v5052 = vpop.f32.mrf.mxu0
        %5053 = vmatprep.mubr.bf16.mxu0 %v4801
        %5054 = vmatmul.mubr.bf16.gmra.mxu0 %v4800
        %v5055 = vpop.f32.mrf.mxu0
        %v5056 = vadd.f32 %v4851, %v5055
        %v5057 = vpop.f32.mrf.mxu0
        %v5058 = vpop.f32.mrf.mxu0
        %v5059 = vadd.f32 %v4851, %v5058
        %v5060 = vpop.f32.mrf.mxu0
        %5061 = vmatprep.mubr.bf16.mxu0 %v4803
        %5062 = vmatmul.mubr.bf16.gmra.mxu0 %v4802
        %v5063 = vpop.f32.mrf.mxu0
        %v5064 = vadd.f32 %v4851, %v5063
        %v5065 = vpop.f32.mrf.mxu0
        %v5066 = vpop.f32.mrf.mxu0
        %v5067 = vadd.f32 %v4851, %v5066
        %v5068 = vpop.f32.mrf.mxu0
        %5069 = vmatprep.mubr.bf16.mxu0 %v4805
        %5070 = vmatmul.mubr.bf16.gmra.mxu0 %v4804
        %v5071 = vpop.f32.mrf.mxu0
        %v5072 = vadd.f32 %v4851, %v5071
        %v5073 = vpop.f32.mrf.mxu0
        %v5074 = vpop.f32.mrf.mxu0
        %v5075 = vadd.f32 %v4851, %v5074
        %v5076 = vpop.f32.mrf.mxu0
        %5077 = vmatprep.mubr.bf16.mxu0 %v4807
        %5078 = vmatmul.mubr.bf16.gmra.mxu0 %v4806
        %v5079 = vpop.f32.mrf.mxu0
        %v5080 = vadd.f32 %v4851, %v5079
        %v5081 = vpop.f32.mrf.mxu0
        %v5082 = vpop.f32.mrf.mxu0
        %v5083 = vadd.f32 %v4851, %v5082
        %v5084 = vpop.f32.mrf.mxu0
        %5085 = vmatprep.mubr.bf16.mxu0 %v4809
        %5086 = vmatmul.mubr.bf16.gmra.mxu0 %v4808
        %v5087 = vpop.f32.mrf.mxu0
        %v5088 = vadd.f32 %v4851, %v5087
        %v5089 = vpop.f32.mrf.mxu0
        %v5090 = vpop.f32.mrf.mxu0
        %v5091 = vadd.f32 %v4851, %v5090
        %v5092 = vpop.f32.mrf.mxu0
        %5093 = vmatprep.mubr.bf16.mxu0 %v4811
        %5094 = vmatmul.mubr.bf16.gmra.mxu0 %v4810
        %v5095 = vpop.f32.mrf.mxu0
        %v5096 = vadd.f32 %v4851, %v5095
        %v5097 = vpop.f32.mrf.mxu0
        %v5098 = vpop.f32.mrf.mxu0
        %v5099 = vadd.f32 %v4851, %v5098
        %v5100 = vpop.f32.mrf.mxu0
        %5101 = vmatprep.mubr.bf16.mxu0 %v4813
        %5102 = vmatmul.mubr.bf16.gmra.mxu0 %v4812
        %v5103 = vpop.f32.mrf.mxu0
        %v5104 = vadd.f32 %v4851, %v5103
        %v5105 = vpop.f32.mrf.mxu0
        %v5106 = vpop.f32.mrf.mxu0
        %v5107 = vadd.f32 %v4851, %v5106
        %v5108 = vpop.f32.mrf.mxu0
        %5109 = vdwg.mxu0
        %v5110 = vmax.f32 %v4984, 0.0
        %v5111 = vmax.f32 %v4987, 0.0
        %v5112 = vmax.f32 %v4992, 0.0
        %v5113 = vmax.f32 %v4995, 0.0
        %v5114 = vmax.f32 %v5000, 0.0
        %v5115 = vmax.f32 %v5003, 0.0
        %v5116 = vmax.f32 %v5008, 0.0
        %v5117 = vmax.f32 %v5011, 0.0
        %v5118 = vmax.f32 %v5016, 0.0
        %v5119 = vmax.f32 %v5019, 0.0
        %v5120 = vmax.f32 %v5024, 0.0
        %v5121 = vmax.f32 %v5027, 0.0
        %v5122 = vmax.f32 %v5032, 0.0
        %v5123 = vmax.f32 %v5035, 0.0
        %v5124 = vmax.f32 %v5040, 0.0
        %v5125 = vmax.f32 %v5043, 0.0
        %v5126 = vmax.f32 %v5048, 0.0
        %v5127 = vmax.f32 %v5051, 0.0
        %v5128 = vmax.f32 %v5056, 0.0
        %v5129 = vmax.f32 %v5059, 0.0
        %v5130 = vmax.f32 %v5064, 0.0
        %v5131 = vmax.f32 %v5067, 0.0
        %v5132 = vmax.f32 %v5072, 0.0
        %v5133 = vmax.f32 %v5075, 0.0
        %v5134 = vmax.f32 %v5080, 0.0
        %v5135 = vmax.f32 %v5083, 0.0
        %v5136 = vmax.f32 %v5088, 0.0
        %v5137 = vmax.f32 %v5091, 0.0
        %v5138 = vmax.f32 %v5096, 0.0
        %v5139 = vmax.f32 %v5099, 0.0
        %v5140 = vmax.f32 %v5104, 0.0
        %v5141 = vmax.f32 %v5107, 0.0
        %v5142 = vpack.c.bf16 %v5111, %v5110
        %v5143 = vpack.c.bf16 %v5113, %v5112
        %v5144 = vpack.c.bf16 %v5115, %v5114
        %v5145 = vpack.c.bf16 %v5117, %v5116
        %v5146 = vpack.c.bf16 %v5119, %v5118
        %v5147 = vpack.c.bf16 %v5121, %v5120
        %v5148 = vpack.c.bf16 %v5123, %v5122
        %v5149 = vpack.c.bf16 %v5125, %v5124
        %v5150 = vpack.c.bf16 %v5127, %v5126
        %v5151 = vpack.c.bf16 %v5129, %v5128
        %v5152 = vpack.c.bf16 %v5131, %v5130
        %v5153 = vpack.c.bf16 %v5133, %v5132
        %v5154 = vpack.c.bf16 %v5135, %v5134
        %v5155 = vpack.c.bf16 %v5137, %v5136
        %v5156 = vpack.c.bf16 %v5139, %v5138
        %v5157 = vpack.c.bf16 %v5141, %v5140
        %v5158 = vld [vmem:[%s11] sm:$0xf]
        %v5159 = vld [vmem:[%s11 + $0x4] sm:$0xf]
        %v5160 = vld [vmem:[%s11 + $0x8] sm:$0xf]
        %v5161 = vld [vmem:[%s11 + $0xc] sm:$0xf]
        %v5162 = vld [vmem:[%s11 + $0x10] sm:$0xf]
        %v5163 = vld [vmem:[%s11 + $0x14] sm:$0xf]
        %v5164 = vld [vmem:[%s11 + $0x18] sm:$0xf]
        %v5165 = vld [vmem:[%s11 + $0x1c] sm:$0xf]
        %v5166 = vld [vmem:[%s12] sm:$0x1]
        %v5168 = vlaneseq
        %v5169 = vshrl.u32 %v5168, 7
        %v5170 = vsub.s32 0, %v5169
        %v5171 = vrot.slane %v5166, %v5170
        %v5181 = vunpack.c.l.b16 %v5158
        %v5182 = vunpack.c.l.b16 %v5159
        %v5183 = vunpack.c.l.b16 %v5160
        %v5184 = vunpack.c.l.b16 %v5161
        %v5185 = vunpack.c.l.b16 %v5162
        %v5186 = vunpack.c.l.b16 %v5163
        %v5187 = vunpack.c.l.b16 %v5164
        %v5188 = vunpack.c.l.b16 %v5165
        %v5189 = vpack.c.b16 %v5182, %v5181
        %v5190 = vpack.c.b16 %v5184, %v5183
        %v5191 = vpack.c.b16 %v5186, %v5185
        %v5192 = vpack.c.b16 %v5188, %v5187
        %v5198 = vsel %vm862, %v5142, 0
        %v5201 = vsel %vm862, %v5143, 0
        %v5204 = vsel %vm862, %v5144, 0
        %v5207 = vsel %vm862, %v5145, 0
        %v5210 = vsel %vm862, %v5146, 0
        %v5213 = vsel %vm862, %v5147, 0
        %v5216 = vsel %vm862, %v5148, 0
        %v5219 = vsel %vm862, %v5149, 0
        %v5222 = vsel %vm862, %v5150, 0
        %v5225 = vsel %vm862, %v5151, 0
        %v5228 = vsel %vm862, %v5152, 0
        %v5231 = vsel %vm862, %v5153, 0
        %v5234 = vsel %vm862, %v5154, 0
        %v5237 = vsel %vm862, %v5155, 0
        %v5240 = vsel %vm862, %v5156, 0
        %v5243 = vsel %vm862, %v5157, 0
        %5245 = vmatprep.subr.bf16.mxu0 0
        %5246 = vmatpush1.bf16.msra.mxu0 0
        %5247 = vmatprep.subr.bf16.mxu0 0
        %5248 = vmatpush1.bf16.msra.mxu0 0
        %5249 = vmatprep.subr.bf16.mxu0 0
        %5250 = vmatpush1.bf16.msra.mxu0 0
        %5251 = vmatprep.subr.bf16.mxu0 0
        %5252 = vmatpush1.bf16.msra.mxu0 0
        %5253 = vmatprep.subr.bf16.mxu0 0
        %5254 = vmatpush1.bf16.msra.mxu0 %v5192
        %5255 = vmatprep.subr.bf16.mxu0 0
        %5256 = vmatpush1.bf16.msra.mxu0 %v5191
        %5257 = vmatprep.subr.bf16.mxu0 0
        %5258 = vmatpush1.bf16.msra.mxu0 %v5190
        %5259 = vmatprep.subr.bf16.mxu0 0
        %5260 = vmatpush1.bf16.msra.mxu0 %v5189
        %5261 = vmatprep.subr.bf16.mxu0 0
        %5262 = vmatpush2.bf16.msra.mxu0 0
        %5263 = vmatprep.subr.bf16.mxu0 0
        %5264 = vmatpush2.bf16.msra.mxu0 0
        %5265 = vmatprep.subr.bf16.mxu0 0
        %5266 = vmatpush2.bf16.msra.mxu0 0
        %5267 = vmatprep.subr.bf16.mxu0 0
        %5268 = vmatpush2.bf16.msra.mxu0 0
        %5269 = vmatprep.subr.bf16.mxu0 0
        %5270 = vmatpush2.bf16.msra.mxu0 0
        %5271 = vmatprep.subr.bf16.mxu0 0
        %5272 = vmatpush2.bf16.msra.mxu0 0
        %5273 = vmatprep.subr.bf16.mxu0 0
        %5274 = vmatpush2.bf16.msra.mxu0 0
        %5275 = vmatprep.subr.bf16.mxu0 0
        %5276 = vmatpush2.bf16.msra.mxu0 0
        %5277 = vmatprep.mubr.bf16.mxu0 0
        %5278 = vmatmul.mubr.bf16.gmra.mxu0 %v5198
        %v5279 = vpop.f32.mrf.mxu0
        %v5280 = vadd.f32 %v5171, %v5279
        %v5281 = vpop.f32.mrf.mxu0
        %v5282 = vpop.f32.mrf.mxu0
        %v5283 = vadd.f32 %v5171, %v5282
        %v5284 = vpop.f32.mrf.mxu0
        %5285 = vmatprep.mubr.bf16.mxu0 0
        %5286 = vmatmul.mubr.bf16.gmra.mxu0 %v5201
        %v5287 = vpop.f32.mrf.mxu0
        %v5288 = vadd.f32 %v5171, %v5287
        %v5289 = vpop.f32.mrf.mxu0
        %v5290 = vpop.f32.mrf.mxu0
        %v5291 = vadd.f32 %v5171, %v5290
        %v5292 = vpop.f32.mrf.mxu0
        %5293 = vmatprep.mubr.bf16.mxu0 0
        %5294 = vmatmul.mubr.bf16.gmra.mxu0 %v5204
        %v5295 = vpop.f32.mrf.mxu0
        %v5296 = vadd.f32 %v5171, %v5295
        %v5297 = vpop.f32.mrf.mxu0
        %v5298 = vpop.f32.mrf.mxu0
        %v5299 = vadd.f32 %v5171, %v5298
        %v5300 = vpop.f32.mrf.mxu0
        %5301 = vmatprep.mubr.bf16.mxu0 0
        %5302 = vmatmul.mubr.bf16.gmra.mxu0 %v5207
        %v5303 = vpop.f32.mrf.mxu0
        %v5304 = vadd.f32 %v5171, %v5303
        %v5305 = vpop.f32.mrf.mxu0
        %v5306 = vpop.f32.mrf.mxu0
        %v5307 = vadd.f32 %v5171, %v5306
        %v5308 = vpop.f32.mrf.mxu0
        %5309 = vmatprep.mubr.bf16.mxu0 0
        %5310 = vmatmul.mubr.bf16.gmra.mxu0 %v5210
        %v5311 = vpop.f32.mrf.mxu0
        %v5312 = vadd.f32 %v5171, %v5311
        %v5313 = vpop.f32.mrf.mxu0
        %v5314 = vpop.f32.mrf.mxu0
        %v5315 = vadd.f32 %v5171, %v5314
        %v5316 = vpop.f32.mrf.mxu0
        %5317 = vmatprep.mubr.bf16.mxu0 0
        %5318 = vmatmul.mubr.bf16.gmra.mxu0 %v5213
        %v5319 = vpop.f32.mrf.mxu0
        %v5320 = vadd.f32 %v5171, %v5319
        %v5321 = vpop.f32.mrf.mxu0
        %v5322 = vpop.f32.mrf.mxu0
        %v5323 = vadd.f32 %v5171, %v5322
        %v5324 = vpop.f32.mrf.mxu0
        %5325 = vmatprep.mubr.bf16.mxu0 0
        %5326 = vmatmul.mubr.bf16.gmra.mxu0 %v5216
        %v5327 = vpop.f32.mrf.mxu0
        %v5328 = vadd.f32 %v5171, %v5327
        %v5329 = vpop.f32.mrf.mxu0
        %v5330 = vpop.f32.mrf.mxu0
        %v5331 = vadd.f32 %v5171, %v5330
        %v5332 = vpop.f32.mrf.mxu0
        %5333 = vmatprep.mubr.bf16.mxu0 0
        %5334 = vmatmul.mubr.bf16.gmra.mxu0 %v5219
        %v5335 = vpop.f32.mrf.mxu0
        %v5336 = vadd.f32 %v5171, %v5335
        %v5337 = vpop.f32.mrf.mxu0
        %v5338 = vpop.f32.mrf.mxu0
        %v5339 = vadd.f32 %v5171, %v5338
        %v5340 = vpop.f32.mrf.mxu0
        %5341 = vmatprep.mubr.bf16.mxu0 0
        %5342 = vmatmul.mubr.bf16.gmra.mxu0 %v5222
        %v5343 = vpop.f32.mrf.mxu0
        %v5344 = vadd.f32 %v5171, %v5343
        %v5345 = vpop.f32.mrf.mxu0
        %v5346 = vpop.f32.mrf.mxu0
        %v5347 = vadd.f32 %v5171, %v5346
        %v5348 = vpop.f32.mrf.mxu0
        %5349 = vmatprep.mubr.bf16.mxu0 0
        %5350 = vmatmul.mubr.bf16.gmra.mxu0 %v5225
        %v5351 = vpop.f32.mrf.mxu0
        %v5352 = vadd.f32 %v5171, %v5351
        %v5353 = vpop.f32.mrf.mxu0
        %v5354 = vpop.f32.mrf.mxu0
        %v5355 = vadd.f32 %v5171, %v5354
        %v5356 = vpop.f32.mrf.mxu0
        %5357 = vmatprep.mubr.bf16.mxu0 0
        %5358 = vmatmul.mubr.bf16.gmra.mxu0 %v5228
        %v5359 = vpop.f32.mrf.mxu0
        %v5360 = vadd.f32 %v5171, %v5359
        %v5361 = vpop.f32.mrf.mxu0
        %v5362 = vpop.f32.mrf.mxu0
        %v5363 = vadd.f32 %v5171, %v5362
        %v5364 = vpop.f32.mrf.mxu0
        %5365 = vmatprep.mubr.bf16.mxu0 0
        %5366 = vmatmul.mubr.bf16.gmra.mxu0 %v5231
        %v5367 = vpop.f32.mrf.mxu0
        %v5368 = vadd.f32 %v5171, %v5367
        %v5369 = vpop.f32.mrf.mxu0
        %v5370 = vpop.f32.mrf.mxu0
        %v5371 = vadd.f32 %v5171, %v5370
        %v5372 = vpop.f32.mrf.mxu0
        %5373 = vmatprep.mubr.bf16.mxu0 0
        %5374 = vmatmul.mubr.bf16.gmra.mxu0 %v5234
        %v5375 = vpop.f32.mrf.mxu0
        %v5376 = vadd.f32 %v5171, %v5375
        %v5377 = vpop.f32.mrf.mxu0
        %v5378 = vpop.f32.mrf.mxu0
        %v5379 = vadd.f32 %v5171, %v5378
        %v5380 = vpop.f32.mrf.mxu0
        %5381 = vmatprep.mubr.bf16.mxu0 0
        %5382 = vmatmul.mubr.bf16.gmra.mxu0 %v5237
        %v5383 = vpop.f32.mrf.mxu0
        %v5384 = vadd.f32 %v5171, %v5383
        %v5385 = vpop.f32.mrf.mxu0
        %v5386 = vpop.f32.mrf.mxu0
        %v5387 = vadd.f32 %v5171, %v5386
        %v5388 = vpop.f32.mrf.mxu0
        %5389 = vmatprep.mubr.bf16.mxu0 0
        %5390 = vmatmul.mubr.bf16.gmra.mxu0 %v5240
        %v5391 = vpop.f32.mrf.mxu0
        %v5392 = vadd.f32 %v5171, %v5391
        %v5393 = vpop.f32.mrf.mxu0
        %v5394 = vpop.f32.mrf.mxu0
        %v5395 = vadd.f32 %v5171, %v5394
        %v5396 = vpop.f32.mrf.mxu0
        %5397 = vmatprep.mubr.bf16.mxu0 0
        %5398 = vmatmul.mubr.bf16.gmra.mxu0 %v5243
        %v5399 = vpop.f32.mrf.mxu0
        %v5400 = vadd.f32 %v5171, %v5399
        %v5401 = vpop.f32.mrf.mxu0
        %v5402 = vpop.f32.mrf.mxu0
        %v5403 = vadd.f32 %v5171, %v5402
        %v5404 = vpop.f32.mrf.mxu0
        %5405 = vdwg.mxu0
        %v5406 = vxor.u32 %v5280, 2147483648
        %v5407 = vxor.u32 %v5283, 2147483648
        %v5408 = vxor.u32 %v5288, 2147483648
        %v5409 = vxor.u32 %v5291, 2147483648
        %v5410 = vxor.u32 %v5296, 2147483648
        %v5411 = vxor.u32 %v5299, 2147483648
        %v5412 = vxor.u32 %v5304, 2147483648
        %v5413 = vxor.u32 %v5307, 2147483648
        %v5414 = vxor.u32 %v5312, 2147483648
        %v5415 = vxor.u32 %v5315, 2147483648
        %v5416 = vxor.u32 %v5320, 2147483648
        %v5417 = vxor.u32 %v5323, 2147483648
        %v5418 = vxor.u32 %v5328, 2147483648
        %v5419 = vxor.u32 %v5331, 2147483648
        %v5420 = vxor.u32 %v5336, 2147483648
        %v5421 = vxor.u32 %v5339, 2147483648
        %v5422 = vxor.u32 %v5344, 2147483648
        %v5423 = vxor.u32 %v5347, 2147483648
        %v5424 = vxor.u32 %v5352, 2147483648
        %v5425 = vxor.u32 %v5355, 2147483648
        %v5426 = vxor.u32 %v5360, 2147483648
        %v5427 = vxor.u32 %v5363, 2147483648
        %v5428 = vxor.u32 %v5368, 2147483648
        %v5429 = vxor.u32 %v5371, 2147483648
        %v5430 = vxor.u32 %v5376, 2147483648
        %v5431 = vxor.u32 %v5379, 2147483648
        %v5432 = vxor.u32 %v5384, 2147483648
        %v5433 = vxor.u32 %v5387, 2147483648
        %v5434 = vxor.u32 %v5392, 2147483648
        %v5435 = vxor.u32 %v5395, 2147483648
        %v5436 = vxor.u32 %v5400, 2147483648
        %v5437 = vxor.u32 %v5403, 2147483648
        %v5438 = vmul.f32 %v5406, 1.442695
        %v5439 = vpow.pop %v5438
        %v5440 = vmul.f32 %v5407, 1.442695
        %v5441 = vpow.pop %v5440
        %v5442 = vmul.f32 %v5408, 1.442695
        %v5443 = vpow.pop %v5442
        %v5444 = vmul.f32 %v5409, 1.442695
        %v5445 = vpow.pop %v5444
        %v5446 = vmul.f32 %v5410, 1.442695
        %v5447 = vpow.pop %v5446
        %v5448 = vmul.f32 %v5411, 1.442695
        %v5449 = vpow.pop %v5448
        %v5450 = vmul.f32 %v5412, 1.442695
        %v5451 = vpow.pop %v5450
        %v5452 = vmul.f32 %v5413, 1.442695
        %v5453 = vpow.pop %v5452
        %v5454 = vmul.f32 %v5414, 1.442695
        %v5455 = vpow.pop %v5454
        %v5456 = vmul.f32 %v5415, 1.442695
        %v5457 = vpow.pop %v5456
        %v5458 = vmul.f32 %v5416, 1.442695
        %v5459 = vpow.pop %v5458
        %v5460 = vmul.f32 %v5417, 1.442695
        %v5461 = vpow.pop %v5460
        %v5462 = vmul.f32 %v5418, 1.442695
        %v5463 = vpow.pop %v5462
        %v5464 = vmul.f32 %v5419, 1.442695
        %v5465 = vpow.pop %v5464
        %v5466 = vmul.f32 %v5420, 1.442695
        %v5467 = vpow.pop %v5466
        %v5468 = vmul.f32 %v5421, 1.442695
        %v5469 = vpow.pop %v5468
        %v5470 = vmul.f32 %v5422, 1.442695
        %v5471 = vpow.pop %v5470
        %v5472 = vmul.f32 %v5423, 1.442695
        %v5473 = vpow.pop %v5472
        %v5474 = vmul.f32 %v5424, 1.442695
        %v5475 = vpow.pop %v5474
        %v5476 = vmul.f32 %v5425, 1.442695
        %v5477 = vpow.pop %v5476
        %v5478 = vmul.f32 %v5426, 1.442695
        %v5479 = vpow.pop %v5478
        %v5480 = vmul.f32 %v5427, 1.442695
        %v5481 = vpow.pop %v5480
        %v5482 = vmul.f32 %v5428, 1.442695
        %v5483 = vpow.pop %v5482
        %v5484 = vmul.f32 %v5429, 1.442695
        %v5485 = vpow.pop %v5484
        %v5486 = vmul.f32 %v5430, 1.442695
        %v5487 = vpow.pop %v5486
        %v5488 = vmul.f32 %v5431, 1.442695
        %v5489 = vpow.pop %v5488
        %v5490 = vmul.f32 %v5432, 1.442695
        %v5491 = vpow.pop %v5490
        %v5492 = vmul.f32 %v5433, 1.442695
        %v5493 = vpow.pop %v5492
        %v5494 = vmul.f32 %v5434, 1.442695
        %v5495 = vpow.pop %v5494
        %v5496 = vmul.f32 %v5435, 1.442695
        %v5497 = vpow.pop %v5496
        %v5498 = vmul.f32 %v5436, 1.442695
        %v5499 = vpow.pop %v5498
        %v5500 = vmul.f32 %v5437, 1.442695
        %v5501 = vpow.pop %v5500
        %v5502 = vadd.f32 %v5439, 1.0
        %v5503 = vadd.f32 %v5441, 1.0
        %v5504 = vadd.f32 %v5443, 1.0
        %v5505 = vadd.f32 %v5445, 1.0
        %v5506 = vadd.f32 %v5447, 1.0
        %v5507 = vadd.f32 %v5449, 1.0
        %v5508 = vadd.f32 %v5451, 1.0
        %v5509 = vadd.f32 %v5453, 1.0
        %v5510 = vadd.f32 %v5455, 1.0
        %v5511 = vadd.f32 %v5457, 1.0
        %v5512 = vadd.f32 %v5459, 1.0
        %v5513 = vadd.f32 %v5461, 1.0
        %v5514 = vadd.f32 %v5463, 1.0
        %v5515 = vadd.f32 %v5465, 1.0
        %v5516 = vadd.f32 %v5467, 1.0
        %v5517 = vadd.f32 %v5469, 1.0
        %v5518 = vadd.f32 %v5471, 1.0
        %v5519 = vadd.f32 %v5473, 1.0
        %v5520 = vadd.f32 %v5475, 1.0
        %v5521 = vadd.f32 %v5477, 1.0
        %v5522 = vadd.f32 %v5479, 1.0
        %v5523 = vadd.f32 %v5481, 1.0
        %v5524 = vadd.f32 %v5483, 1.0
        %v5525 = vadd.f32 %v5485, 1.0
        %v5526 = vadd.f32 %v5487, 1.0
        %v5527 = vadd.f32 %v5489, 1.0
        %v5528 = vadd.f32 %v5491, 1.0
        %v5529 = vadd.f32 %v5493, 1.0
        %v5530 = vadd.f32 %v5495, 1.0
        %v5531 = vadd.f32 %v5497, 1.0
        %v5532 = vadd.f32 %v5499, 1.0
        %v5533 = vadd.f32 %v5501, 1.0
        %v5534 = vrcp.pop %v5502
        %v5535 = vmul.f32 1.0, %v5534
        %v5536 = vrcp.pop %v5503
        %v5537 = vmul.f32 1.0, %v5536
        %v5538 = vrcp.pop %v5504
        %v5539 = vmul.f32 1.0, %v5538
        %v5540 = vrcp.pop %v5505
        %v5541 = vmul.f32 1.0, %v5540
        %v5542 = vrcp.pop %v5506
        %v5543 = vmul.f32 1.0, %v5542
        %v5544 = vrcp.pop %v5507
        %v5545 = vmul.f32 1.0, %v5544
        %v5546 = vrcp.pop %v5508
        %v5547 = vmul.f32 1.0, %v5546
        %v5548 = vrcp.pop %v5509
        %v5549 = vmul.f32 1.0, %v5548
        %v5550 = vrcp.pop %v5510
        %v5551 = vmul.f32 1.0, %v5550
        %v5552 = vrcp.pop %v5511
        %v5553 = vmul.f32 1.0, %v5552
        %v5554 = vrcp.pop %v5512
        %v5555 = vmul.f32 1.0, %v5554
        %v5556 = vrcp.pop %v5513
        %v5557 = vmul.f32 1.0, %v5556
        %v5558 = vrcp.pop %v5514
        %v5559 = vmul.f32 1.0, %v5558
        %v5560 = vrcp.pop %v5515
        %v5561 = vmul.f32 1.0, %v5560
        %v5562 = vrcp.pop %v5516
        %v5563 = vmul.f32 1.0, %v5562
        %v5564 = vrcp.pop %v5517
        %v5565 = vmul.f32 1.0, %v5564
        %v5566 = vrcp.pop %v5518
        %v5567 = vmul.f32 1.0, %v5566
        %v5568 = vrcp.pop %v5519
        %v5569 = vmul.f32 1.0, %v5568
        %v5570 = vrcp.pop %v5520
        %v5571 = vmul.f32 1.0, %v5570
        %v5572 = vrcp.pop %v5521
        %v5573 = vmul.f32 1.0, %v5572
        %v5574 = vrcp.pop %v5522
        %v5575 = vmul.f32 1.0, %v5574
        %v5576 = vrcp.pop %v5523
        %v5577 = vmul.f32 1.0, %v5576
        %v5578 = vrcp.pop %v5524
        %v5579 = vmul.f32 1.0, %v5578
        %v5580 = vrcp.pop %v5525
        %v5581 = vmul.f32 1.0, %v5580
        %v5582 = vrcp.pop %v5526
        %v5583 = vmul.f32 1.0, %v5582
        %v5584 = vrcp.pop %v5527
        %v5585 = vmul.f32 1.0, %v5584
        %v5586 = vrcp.pop %v5528
        %v5587 = vmul.f32 1.0, %v5586
        %v5588 = vrcp.pop %v5529
        %v5589 = vmul.f32 1.0, %v5588
        %v5590 = vrcp.pop %v5530
        %v5591 = vmul.f32 1.0, %v5590
        %v5592 = vrcp.pop %v5531
        %v5593 = vmul.f32 1.0, %v5592
        %v5594 = vrcp.pop %v5532
        %v5595 = vmul.f32 1.0, %v5594
        %v5596 = vrcp.pop %v5533
        %v5597 = vmul.f32 1.0, %v5596
        %5598 = vst [vmem:[%s464] sm:$0xff] %v5535
        %5599 = vst [vmem:[%s464 + $0x8] sm:$0xff] %v5537
        %5600 = vst [vmem:[%s464 + $0x10] sm:$0xff] %v5539
        %5601 = vst [vmem:[%s464 + $0x18] sm:$0xff] %v5541
        %5602 = vst [vmem:[%s464 + $0x20] sm:$0xff] %v5543
        %5603 = vst [vmem:[%s464 + $0x28] sm:$0xff] %v5545
        %5604 = vst [vmem:[%s464 + $0x30] sm:$0xff] %v5547
        %5605 = vst [vmem:[%s464 + $0x38] sm:$0xff] %v5549
        %5606 = vst [vmem:[%s464 + $0x40] sm:$0xff] %v5551
        %5607 = vst [vmem:[%s464 + $0x48] sm:$0xff] %v5553
        %5608 = vst [vmem:[%s464 + $0x50] sm:$0xff] %v5555
        %5609 = vst [vmem:[%s464 + $0x58] sm:$0xff] %v5557
        %5610 = vst [vmem:[%s464 + $0x60] sm:$0xff] %v5559
        %5611 = vst [vmem:[%s464 + $0x68] sm:$0xff] %v5561
        %5612 = vst [vmem:[%s464 + $0x70] sm:$0xff] %v5563
        %5613 = vst [vmem:[%s464 + $0x78] sm:$0xff] %v5565
        %5614 = vst [vmem:[%s464 + $0x80] sm:$0xff] %v5567
        %5615 = vst [vmem:[%s464 + $0x88] sm:$0xff] %v5569
        %5616 = vst [vmem:[%s464 + $0x90] sm:$0xff] %v5571
        %5617 = vst [vmem:[%s464 + $0x98] sm:$0xff] %v5573
        %5618 = vst [vmem:[%s464 + $0xa0] sm:$0xff] %v5575
        %5619 = vst [vmem:[%s464 + $0xa8] sm:$0xff] %v5577
        %5620 = vst [vmem:[%s464 + $0xb0] sm:$0xff] %v5579
        %5621 = vst [vmem:[%s464 + $0xb8] sm:$0xff] %v5581
        %5622 = vst [vmem:[%s464 + $0xc0] sm:$0xff] %v5583
        %5623 = vst [vmem:[%s464 + $0xc8] sm:$0xff] %v5585
        %5624 = vst [vmem:[%s464 + $0xd0] sm:$0xff] %v5587
        %5625 = vst [vmem:[%s464 + $0xd8] sm:$0xff] %v5589
        %5626 = vst [vmem:[%s464 + $0xe0] sm:$0xff] %v5591
        %5627 = vst [vmem:[%s464 + $0xe8] sm:$0xff] %v5593
        %5628 = vst [vmem:[%s464 + $0xf0] sm:$0xff] %v5595
        %5629 = vst [vmem:[%s464 + $0xf8] sm:$0xff] %v5597
        %s5630 = sand.u32 %s315, 1
        %s5631 = scalar_lea.sflag [#allocation4], %s5630
        %s5632 = sand.u32 %s315, 1
        %s5633 = smul.addr %s5632, 256
        %s5634 = scalar_lea.vmem [#allocation7], %s5633
        // Predicated region
        $region81: #{tpu_custom_call.1} parent=71 // pred_check
          %p5635 = pneg %p325
        $region82: #{tpu_custom_call.1} parent=71 // pred_check_branch
          %5637 = sbr.rel (%p5635) target = $region84
        $region83: #{tpu_custom_call.1} parent=71 // pred_region
          %s5638 = smul.u32 32, %s29
          %s5640 = ssub.s32 4096, 4096
          %5641 = vsyncadd %s5631, %s5640
          %s5642 = smul.addr %s5638, 128
          %s5643 = scalar_lea.hbm %s13, %s5642
          %s5644 = sshll.u32 %s5634, 4
          %s5645 = int_to_ptr.vmem [resolvable:$true] %s5644
          %5650 = dma.vmem_to_hbm [thread:$0]  %s5645, 4096, %s5643, %s5631, 128, 128, 8
        $region84: #{tpu_custom_call.1} parent=71 // pred_fallthru
          _
      $region72: #{tpu_custom_call.1} parent=5 // pred_fallthru
        _
      %p5651 = scmp.le.s32.totalorder 2, %s24
      // Predicated region
      $region85: #{tpu_custom_call.1} parent=5 // pred_check
        %p5652 = pneg %p5651
      $region86: #{tpu_custom_call.1} parent=5 // pred_check_branch
        %5654 = sbr.rel (%p5652) target = $region88
      $region87: #{tpu_custom_call.1} parent=5 // pred_region
        %s5655 = ssub.s32 %s24, 2
        // Predicated region
        $region89: #{tpu_custom_call.1} parent=87 // pred_check
          %p5656 = pneg %p331
        $region90: #{tpu_custom_call.1} parent=87 // pred_check_branch
          %5658 = sbr.rel (%p5656) target = $region92
        $region91: #{tpu_custom_call.1} parent=87 // pred_region
          %s5659 = sand.u32 %s316, 1
          %s5660 = scalar_lea.sflag [#allocation4], %s5659
          %s5661 = sand.u32 %s316, 1
          %s5662 = smul.addr %s5661, 256
          %s5663 = scalar_lea.vmem [#allocation7], %s5662
          %5664 = dma.done %s5660, 4096
        $region92: #{tpu_custom_call.1} parent=87 // pred_fallthru
          _
      $region88: #{tpu_custom_call.1} parent=5 // pred_fallthru
        _
    $region6: #{tpu_custom_call.1} parent=1 // loop_footer
      %s28 = sadd.s32 1, %s24
    $region7: #{tpu_custom_call.1} parent=1 // loop_footer_branch
      %23 = sbr.rel target = $region3
    $region8: #{tpu_custom_call.1} parent=1 // loop_exit
      _
    %5665 = vsyncpa [#allocation3], 1
    %s5666 = scalar_lea.sflag [#allocation3], 1
    %5667 = vsyncpa %s5666, 1
    %5668 = vsyncpa [#allocation6], 1
    %5669 = vsyncpa [#allocation4], 1
    %s5670 = scalar_lea.sflag [#allocation4], 1
    %5671 = vsyncpa %s5670, 1

</llo_original>
